<compile_context>
chip_gen: v7x
topology: tpu7x:2x2x1
jax: 0.10.0
libtpu: 0.0.40
codegen_flags: <defaults>
</compile_context>

<pallas_src>
import jax
import jax.numpy as jnp
from jax.experimental import pallas as pl
from jax.experimental.pallas import tpu as pltpu

# ---------------- small synthetic config ----------------
HIDDEN = 32
NUM_HEADS = 4
HEAD_DIM = HIDDEN // NUM_HEADS
INTERMEDIATE = 64
NUM_LAYERS = 2
VOCAB = 64
MAX_POS = 32
TYPE_VOCAB = 2
LN_EPS = 1e-5


# ---------------- fused per-sequence encoder kernel ----------------
def _ln(x, g, b):
    mu = jnp.mean(x, axis=-1, keepdims=True)
    var = jnp.mean((x - mu) ** 2, axis=-1, keepdims=True)
    return (x - mu) * jax.lax.rsqrt(var + LN_EPS) * g + b


def _encoder_kernel(nm_ref, tm_ref, am_ref, emb_ref, pos_ref,
                    eg_ref, eb_ref,
                    wqkv_ref, bqkv_ref, wo_ref, bo_ref,
                    l1g_ref, l1b_ref, wi_ref, bi_ref, wf_ref, bf_ref,
                    l2g_ref, l2b_ref,
                    cls_ref):
    nm = nm_ref[0]        # (L, 1)  nodes mask (position == 0)
    tm = tm_ref[0]        # (1, L)  token mask (position >= 2)
    am = am_ref[0]        # (L, L)  attention mask (0/1)
    emb = emb_ref[0]      # (L, H)  word embeddings
    pos = pos_ref[0]      # (L, H)  positional + token-type embeddings
    L = am.shape[0]

    # ---- graph node-to-token averaging, fused with emb add + LN ----
    m = nm * tm * am
    denom = jnp.sum(m, axis=-1, keepdims=True) + 1e-10
    mn = m / denom
    avg = jnp.dot(mn, emb, preferred_element_type=jnp.float32)      # (L, H)
    x = emb * (1.0 - nm) + avg * nm + pos
    x = _ln(x, eg_ref[...], eb_ref[...])

    # additive attention bias, computed once per sequence
    bias = (1.0 - am) * -10000.0                                    # (L, L)

    for l in range(NUM_LAYERS):                                     # unrolled
        # fused QKV projection (Q weights pre-scaled by 1/sqrt(head_dim))
        qkv = (jnp.dot(x, wqkv_ref[l], preferred_element_type=jnp.float32)
               + bqkv_ref[l])                                       # (L, 3H)
        wo = wo_ref[l]                                              # (H, H)

        attn = jnp.zeros((L, HIDDEN), jnp.float32)
        for h in range(NUM_HEADS):                                  # static slices
            q = qkv[:, h * HEAD_DIM:(h + 1) * HEAD_DIM]
            k = qkv[:, HIDDEN + h * HEAD_DIM:HIDDEN + (h + 1) * HEAD_DIM]
            v = qkv[:, 2 * HIDDEN + h * HEAD_DIM:2 * HIDDEN + (h + 1) * HEAD_DIM]
            s = jnp.dot(q, k.T, preferred_element_type=jnp.float32) + bias
            s_max = jnp.max(s, axis=-1, keepdims=True)
            e = jnp.exp(s - s_max)
            p = e * pl.reciprocal(jnp.sum(e, axis=-1, keepdims=True), approx=True)
            ctx = jnp.dot(p, v, preferred_element_type=jnp.float32)  # (L, dh)
            # fold per-head context directly into the output projection
            attn = attn + jnp.dot(ctx, wo[h * HEAD_DIM:(h + 1) * HEAD_DIM, :],
                                  preferred_element_type=jnp.float32)
        attn = attn + bo_ref[l]

        x = _ln(attn + x, l1g_ref[l], l1b_ref[l])

        # TODO(synk): RoBERTa uses exact erf-gelu; tanh approximation used here
        # for guaranteed Mosaic lowering.
        inter = jax.nn.gelu(
            jnp.dot(x, wi_ref[l], preferred_element_type=jnp.float32) + bi_ref[l],
            approximate=True)
        ff = jnp.dot(inter, wf_ref[l], preferred_element_type=jnp.float32) + bf_ref[l]
        x = _ln(ff + x, l2g_ref[l], l2b_ref[l])

    cls_ref[0] = x[0:1, :]                                          # CLS row only


def _rep2(shape):
    return pl.BlockSpec(shape, lambda b: (0, 0))


def _rep3(shape):
    return pl.BlockSpec(shape, lambda b: (0, 0, 0))


def fused_encoder(nodes_mask, token_mask, attn_mask, emb, pos_type, p):
    # nodes_mask/token_mask: (2B, L) bool; attn_mask: (2B, L, L);
    # emb/pos_type: (2B, L, H)  -> CLS features (2B, 1, H)
    B2, L, H = emb.shape
    nm = nodes_mask.astype(jnp.float32)[:, :, None]    # (2B, L, 1)
    tm = token_mask.astype(jnp.float32)[:, None, :]    # (2B, 1, L)
    am = attn_mask.astype(jnp.float32)                 # (2B, L, L)

    in_specs = [
        pl.BlockSpec((1, L, 1), lambda b: (b, 0, 0)),              # nm
        pl.BlockSpec((1, 1, L), lambda b: (b, 0, 0)),              # tm
        pl.BlockSpec((1, L, L), lambda b: (b, 0, 0)),              # am
        pl.BlockSpec((1, L, H), lambda b: (b, 0, 0)),              # emb
        pl.BlockSpec((1, L, H), lambda b: (b, 0, 0)),              # pos+type
        _rep2((1, H)), _rep2((1, H)),                              # emb LN
        _rep3((NUM_LAYERS, H, 3 * H)), _rep3((NUM_LAYERS, 1, 3 * H)),   # wqkv/bqkv
        _rep3((NUM_LAYERS, H, H)), _rep3((NUM_LAYERS, 1, H)),           # wo/bo
        _rep3((NUM_LAYERS, 1, H)), _rep3((NUM_LAYERS, 1, H)),           # ln1
        _rep3((NUM_LAYERS, H, INTERMEDIATE)), _rep3((NUM_LAYERS, 1, INTERMEDIATE)),
        _rep3((NUM_LAYERS, INTERMEDIATE, H)), _rep3((NUM_LAYERS, 1, H)),
        _rep3((NUM_LAYERS, 1, H)), _rep3((NUM_LAYERS, 1, H)),           # ln2
    ]

    cls = pl.pallas_call(
        _encoder_kernel,
        grid=(B2,),
        in_specs=in_specs,
        out_specs=pl.BlockSpec((1, 1, H), lambda b: (b, 0, 0)),
        out_shape=jax.ShapeDtypeStruct((B2, 1, H), jnp.float32),
        compiler_params=pltpu.CompilerParams(dimension_semantics=("parallel",)),
    )(
        nm, tm, am, emb, pos_type,
        p["emb_ln_g"], p["emb_ln_b"],
        p["wqkv"], p["bqkv"], p["wo"], p["bo"],
        p["ln1_g"], p["ln1_b"], p["wi"], p["bi"], p["wf"], p["bf"],
        p["ln2_g"], p["ln2_b"],
    )
    return cls                                                       # (2B, 1, H)


# ---------------- classification head kernel ----------------
def _cls_head_kernel(x_ref, w1_ref, b1_ref, w2_ref, b2_ref, logits_ref, prob_ref):
    # dropout is eval-mode identity
    h = jnp.tanh(
        jnp.dot(x_ref[...], w1_ref[...], preferred_element_type=jnp.float32)
        + b1_ref[...])
    logits = jnp.dot(h, w2_ref[...], preferred_element_type=jnp.float32) + b2_ref[...]
    logits_ref[...] = logits
    lmax = jnp.max(logits, axis=-1, keepdims=True)
    e = jnp.exp(logits - lmax)
    prob_ref[...] = e / jnp.sum(e, axis=-1, keepdims=True)


def classification_head(x, w1, b1, w2, b2):
    B = x.shape[0]
    logits, prob = pl.pallas_call(
        _cls_head_kernel,
        out_shape=(jax.ShapeDtypeStruct((B, 2), jnp.float32),
                   jax.ShapeDtypeStruct((B, 2), jnp.float32)),
    )(x, w1, b1, w2, b2)
    return logits, prob


# ---------------- parameters ----------------
def _dense_params(key, fan_in, fan_out):
    w = jax.random.normal(key, (fan_in, fan_out), jnp.float32) * 0.02
    b = jnp.zeros((1, fan_out), jnp.float32)
    return w, b


def init_params(key):
    keys = iter(jax.random.split(key, 8 + NUM_LAYERS * 8))
    p = {}
    p["word_emb"] = jax.random.normal(next(keys), (VOCAB, HIDDEN), jnp.float32) * 0.02
    p["pos_emb"] = jax.random.normal(next(keys), (MAX_POS, HIDDEN), jnp.float32) * 0.02
    p["type_emb"] = (
        jax.random.normal(next(keys), (TYPE_VOCAB, HIDDEN), jnp.float32) * 0.02
    )
    p["emb_ln_g"] = jnp.ones((1, HIDDEN), jnp.float32)
    p["emb_ln_b"] = jnp.zeros((1, HIDDEN), jnp.float32)
    layers = []
    for _ in range(NUM_LAYERS):
        lp = {}
        lp["wq"], lp["bq"] = _dense_params(next(keys), HIDDEN, HIDDEN)
        lp["wk"], lp["bk"] = _dense_params(next(keys), HIDDEN, HIDDEN)
        lp["wv"], lp["bv"] = _dense_params(next(keys), HIDDEN, HIDDEN)
        lp["wo"], lp["bo"] = _dense_params(next(keys), HIDDEN, HIDDEN)
        lp["ln1_g"] = jnp.ones((1, HIDDEN), jnp.float32)
        lp["ln1_b"] = jnp.zeros((1, HIDDEN), jnp.float32)
        lp["wi"], lp["bi"] = _dense_params(next(keys), HIDDEN, INTERMEDIATE)
        lp["wf"], lp["bf"] = _dense_params(next(keys), INTERMEDIATE, HIDDEN)
        lp["ln2_g"] = jnp.ones((1, HIDDEN), jnp.float32)
        lp["ln2_b"] = jnp.zeros((1, HIDDEN), jnp.float32)
        layers.append(lp)
    p["layers"] = layers
    p["cls_w1"], p["cls_b1"] = _dense_params(next(keys), 2 * HIDDEN, HIDDEN)
    p["cls_w2"], p["cls_b2"] = _dense_params(next(keys), HIDDEN, 2)
    return p


def pack_params(p):
    """Stack per-layer weights and fuse Q|K|V (Q pre-scaled by 1/sqrt(dh))."""
    scale = 1.0 / float(HEAD_DIM) ** 0.5

    def stack(key):
        return jnp.stack([lp[key] for lp in p["layers"]])

    return {
        "word_emb": p["word_emb"],
        "pos_emb": p["pos_emb"],
        "type_emb": p["type_emb"],
        "emb_ln_g": p["emb_ln_g"], "emb_ln_b": p["emb_ln_b"],
        "wqkv": jnp.stack([
            jnp.concatenate([lp["wq"] * scale, lp["wk"], lp["wv"]], axis=1)
            for lp in p["layers"]]),
        "bqkv": jnp.stack([
            jnp.concatenate([lp["bq"] * scale, lp["bk"], lp["bv"]], axis=1)
            for lp in p["layers"]]),
        "wo": stack("wo"), "bo": stack("bo"),
        "ln1_g": stack("ln1_g"), "ln1_b": stack("ln1_b"),
        "wi": stack("wi"), "bi": stack("bi"),
        "wf": stack("wf"), "bf": stack("bf"),
        "ln2_g": stack("ln2_g"), "ln2_b": stack("ln2_b"),
        "cls_w1": p["cls_w1"], "cls_b1": p["cls_b1"],
        "cls_w2": p["cls_w2"], "cls_b2": p["cls_b2"],
    }


# ---------------- Model.forward ----------------
def model_forward(packed, input_ids, position_idx, attn_mask, labels=None):
    assert input_ids.shape[-1] % 2 == 0
    assert position_idx.shape[-1] % 2 == 0
    assert attn_mask.shape[-1] % 2 == 0
    L = input_ids.shape[-1] // 2
    input_ids = input_ids.reshape(-1, L)                              # (2B, L)
    position_idx = position_idx.reshape(-1, L)                        # (2B, L)
    attn_mask = attn_mask.reshape(
        -1, attn_mask.shape[1] // 2, attn_mask.shape[2], attn_mask.shape[3])
    attn_mask = jnp.squeeze(attn_mask, axis=1)                        # (2B, L, L)

    nodes_mask = position_idx == 0
    token_mask = position_idx >= 2

    # embedding gathers stay as XLA glue (data-dependent row lookup)
    inputs_embeds = jnp.take(packed["word_emb"], input_ids, axis=0)   # (2B, L, H)
    pos_type = (jnp.take(packed["pos_emb"], position_idx, axis=0)
                + packed["type_emb"][0][None, None, :])               # (2B, L, H)

    cls = fused_encoder(nodes_mask, token_mask, attn_mask,
                        inputs_embeds, pos_type, packed)              # (2B, 1, H)
    feats = cls.reshape(-1, 2 * HIDDEN)                               # (B, 2H)

    logits, prob = classification_head(
        feats, packed["cls_w1"], packed["cls_b1"],
        packed["cls_w2"], packed["cls_b2"])
    if labels is not None:
        # CrossEntropyLoss on logits (numerically stable log-softmax)
        logp = jax.nn.log_softmax(logits, axis=-1)
        loss = -jnp.mean(jnp.take_along_axis(logp, labels[:, None], axis=1))
        return loss, prob
    return prob


if __name__ == "__main__":
    key = jax.random.PRNGKey(0)
    kp, ki = jax.random.split(key, 2)
    params = pack_params(init_params(kp))

    B = 2   # original batch; after pair-splitting the encoder sees 2B = 4 sequences
    L = 8   # per-snippet sequence length (input_ids last dim is 2L = 16)

    input_ids = jax.random.randint(ki, (B, 2 * L), 0, VOCAB, dtype=jnp.int32)
    # position layout per half-sequence: code tokens (>=2), DFG nodes (0), padding (1)
    pos_half = jnp.array([2, 3, 4, 5, 0, 0, 1, 1], dtype=jnp.int32)
    position_idx = jnp.tile(pos_half, (B, 2))                         # (B, 2L)
    nonpad = (pos_half != 1).astype(jnp.float32)
    base_mask = nonpad[:, None] * nonpad[None, :]                     # (L, L)
    attn_mask = jnp.broadcast_to(base_mask, (B, 2, L, L)).astype(jnp.float32)

    forward_infer = jax.jit(
        lambda p, a, b, c: model_forward(p, a, b, c))
    forward_train = jax.jit(
        lambda p, a, b, c, lab: model_forward(p, a, b, c, lab))

    prob = forward_infer(params, input_ids, position_idx, attn_mask)
    prob = jax.block_until_ready(prob)
    assert prob.shape == (B, 2)
    assert bool(jnp.all(jnp.isfinite(prob)))

    labels = jnp.array([0, 1], dtype=jnp.int32)
    loss, prob2 = forward_train(params, input_ids, position_idx, attn_mask, labels)
    jax.block_until_ready((loss, prob2))
    assert bool(jnp.isfinite(loss))

    print("KERNEL_OK")
</pallas_src>

<mosaic_0001>
module attributes {stable_mosaic.version = 11 : i64} {
  func.func @_cls_head_kernel(%arg0: memref<2x64xf32, #tpu.memory_space<vmem>>, %arg1: memref<64x32xf32, #tpu.memory_space<vmem>>, %arg2: memref<1x32xf32, #tpu.memory_space<vmem>>, %arg3: memref<32x2xf32, #tpu.memory_space<vmem>>, %arg4: memref<1x2xf32, #tpu.memory_space<vmem>>, %arg5: memref<2x2xf32, #tpu.memory_space<vmem>>, %arg6: memref<2x2xf32, #tpu.memory_space<vmem>>) attributes {dimension_semantics = [], scalar_prefetch = 0 : i64, scratch_operands = 0 : i64, tpu.core_type = #tpu.core_type<tc>} {
    %c0 = arith.constant 0 : index
    %c0_0 = arith.constant 0 : index
    %0 = vector.load %arg0[%c0, %c0_0] : memref<2x64xf32, #tpu.memory_space<vmem>>, vector<2x64xf32>
    %c0_1 = arith.constant 0 : index
    %c0_2 = arith.constant 0 : index
    %1 = vector.load %arg1[%c0_1, %c0_2] : memref<64x32xf32, #tpu.memory_space<vmem>>, vector<64x32xf32>
    %cst = arith.constant dense<0.000000e+00> : vector<2x32xf32>
    %2 = tpu.matmul %0, %1, %cst {dimension_numbers = #tpu.dot_dimension_numbers<[1], [0], [0], [1], [0, 0, 1, 1], [], []>} : vector<2x64xf32>, vector<64x32xf32>, vector<2x32xf32> -> vector<2x32xf32>
    %c0_3 = arith.constant 0 : index
    %c0_4 = arith.constant 0 : index
    %3 = vector.load %arg2[%c0_3, %c0_4] : memref<1x32xf32, #tpu.memory_space<vmem>>, vector<1x32xf32>
    %4 = vector.broadcast %3 : vector<1x32xf32> to vector<2x32xf32>
    %5 = arith.addf %2, %4 : vector<2x32xf32>
    %6 = math.tanh %5 : vector<2x32xf32>
    %c0_5 = arith.constant 0 : index
    %c0_6 = arith.constant 0 : index
    %7 = vector.load %arg3[%c0_5, %c0_6] : memref<32x2xf32, #tpu.memory_space<vmem>>, vector<32x2xf32>
    %cst_7 = arith.constant dense<0.000000e+00> : vector<2x2xf32>
    %8 = tpu.matmul %6, %7, %cst_7 {dimension_numbers = #tpu.dot_dimension_numbers<[1], [0], [0], [1], [0, 0, 1, 1], [], []>} : vector<2x32xf32>, vector<32x2xf32>, vector<2x2xf32> -> vector<2x2xf32>
    %c0_8 = arith.constant 0 : index
    %c0_9 = arith.constant 0 : index
    %9 = vector.load %arg4[%c0_8, %c0_9] : memref<1x2xf32, #tpu.memory_space<vmem>>, vector<1x2xf32>
    %10 = vector.broadcast %9 : vector<1x2xf32> to vector<2x2xf32>
    %11 = arith.addf %8, %10 : vector<2x2xf32>
    %c0_10 = arith.constant 0 : index
    %c0_11 = arith.constant 0 : index
    %12 = vector.load %arg5[%c0_10, %c0_11] : memref<2x2xf32, #tpu.memory_space<vmem>>, vector<2x2xf32>
    tpu.vector_store %arg5[%c0_10, %c0_11], %11 {strides = array<i32>} : memref<2x2xf32, #tpu.memory_space<vmem>>, vector<2x2xf32>,
    %cst_12 = arith.constant dense<0xFF800000> : vector<2xf32>
    %13 = vector.multi_reduction <maximumf>, %11, %cst_12 [1] : vector<2x2xf32> to vector<2xf32>
    %14 = vector.shape_cast %13 : vector<2xf32> to vector<2x1xf32>
    %15 = vector.broadcast %14 : vector<2x1xf32> to vector<2x2xf32>
    %16 = arith.subf %11, %15 : vector<2x2xf32>
    %17 = math.exp %16 : vector<2x2xf32>
    %cst_13 = arith.constant dense<0.000000e+00> : vector<2xf32>
    %18 = vector.multi_reduction <add>, %17, %cst_13 [1] : vector<2x2xf32> to vector<2xf32>
    %19 = vector.shape_cast %18 : vector<2xf32> to vector<2x1xf32>
    %20 = vector.broadcast %19 : vector<2x1xf32> to vector<2x2xf32>
    %21 = arith.divf %17, %20 : vector<2x2xf32>
    %c0_14 = arith.constant 0 : index
    %c0_15 = arith.constant 0 : index
    %22 = vector.load %arg6[%c0_14, %c0_15] : memref<2x2xf32, #tpu.memory_space<vmem>>, vector<2x2xf32>
    tpu.vector_store %arg6[%c0_14, %c0_15], %21 {strides = array<i32>} : memref<2x2xf32, #tpu.memory_space<vmem>>, vector<2x2xf32>,
    return
  }
}

module attributes {stable_mosaic.version = 11 : i64} {
  func.func @_encoder_kernel(%arg0: i32, %arg1: memref<1x8x1xf32, #tpu.memory_space<vmem>>, %arg2: memref<1x1x8xf32, #tpu.memory_space<vmem>>, %arg3: memref<1x8x8xf32, #tpu.memory_space<vmem>>, %arg4: memref<1x8x32xf32, #tpu.memory_space<vmem>>, %arg5: memref<1x8x32xf32, #tpu.memory_space<vmem>>, %arg6: memref<1x32xf32, #tpu.memory_space<vmem>>, %arg7: memref<1x32xf32, #tpu.memory_space<vmem>>, %arg8: memref<2x32x96xf32, #tpu.memory_space<vmem>>, %arg9: memref<2x1x96xf32, #tpu.memory_space<vmem>>, %arg10: memref<2x32x32xf32, #tpu.memory_space<vmem>>, %arg11: memref<2x1x32xf32, #tpu.memory_space<vmem>>, %arg12: memref<2x1x32xf32, #tpu.memory_space<vmem>>, %arg13: memref<2x1x32xf32, #tpu.memory_space<vmem>>, %arg14: memref<2x32x64xf32, #tpu.memory_space<vmem>>, %arg15: memref<2x1x64xf32, #tpu.memory_space<vmem>>, %arg16: memref<2x64x32xf32, #tpu.memory_space<vmem>>, %arg17: memref<2x1x32xf32, #tpu.memory_space<vmem>>, %arg18: memref<2x1x32xf32, #tpu.memory_space<vmem>>, %arg19: memref<2x1x32xf32, #tpu.memory_space<vmem>>, %arg20: memref<1x1x32xf32, #tpu.memory_space<vmem>>) attributes {dimension_semantics = [#tpu.dimension_semantics<parallel>], iteration_bounds = array<i64: 4>, scalar_prefetch = 0 : i64, scratch_operands = 0 : i64, tpu.core_type = #tpu.core_type<tc>, window_params = [{transform_indices = @transform_0, window_bounds = array<i64: 1, 8, 1>}, {transform_indices = @transform_1, window_bounds = array<i64: 1, 1, 8>}, {transform_indices = @transform_2, window_bounds = array<i64: 1, 8, 8>}, {transform_indices = @transform_3, window_bounds = array<i64: 1, 8, 32>}, {transform_indices = @transform_4, window_bounds = array<i64: 1, 8, 32>}, {pipeline_mode = #tpu.pipeline_mode<synchronous>, transform_indices = @transform_5, window_bounds = array<i64: 1, 32>}, {pipeline_mode = #tpu.pipeline_mode<synchronous>, transform_indices = @transform_6, window_bounds = array<i64: 1, 32>}, {pipeline_mode = #tpu.pipeline_mode<synchronous>, transform_indices = @transform_7, window_bounds = array<i64: 2, 32, 96>}, {pipeline_mode = #tpu.pipeline_mode<synchronous>, transform_indices = @transform_8, window_bounds = array<i64: 2, 1, 96>}, {pipeline_mode = #tpu.pipeline_mode<synchronous>, transform_indices = @transform_9, window_bounds = array<i64: 2, 32, 32>}, {pipeline_mode = #tpu.pipeline_mode<synchronous>, transform_indices = @transform_10, window_bounds = array<i64: 2, 1, 32>}, {pipeline_mode = #tpu.pipeline_mode<synchronous>, transform_indices = @transform_11, window_bounds = array<i64: 2, 1, 32>}, {pipeline_mode = #tpu.pipeline_mode<synchronous>, transform_indices = @transform_12, window_bounds = array<i64: 2, 1, 32>}, {pipeline_mode = #tpu.pipeline_mode<synchronous>, transform_indices = @transform_13, window_bounds = array<i64: 2, 32, 64>}, {pipeline_mode = #tpu.pipeline_mode<synchronous>, transform_indices = @transform_14, window_bounds = array<i64: 2, 1, 64>}, {pipeline_mode = #tpu.pipeline_mode<synchronous>, transform_indices = @transform_15, window_bounds = array<i64: 2, 64, 32>}, {pipeline_mode = #tpu.pipeline_mode<synchronous>, transform_indices = @transform_16, window_bounds = array<i64: 2, 1, 32>}, {pipeline_mode = #tpu.pipeline_mode<synchronous>, transform_indices = @transform_17, window_bounds = array<i64: 2, 1, 32>}, {pipeline_mode = #tpu.pipeline_mode<synchronous>, transform_indices = @transform_18, window_bounds = array<i64: 2, 1, 32>}, {transform_indices = @transform_19, window_bounds = array<i64: 1, 1, 32>}]} {
    %c0 = arith.constant 0 : index
    %c0_0 = arith.constant 0 : index
    %c0_1 = arith.constant 0 : index
    %0 = vector.load %arg1[%c0, %c0_0, %c0_1] : memref<1x8x1xf32, #tpu.memory_space<vmem>>, vector<1x8x1xf32>
    %1 = vector.shape_cast %0 : vector<1x8x1xf32> to vector<8x1xf32>
    %c0_2 = arith.constant 0 : index
    %c0_3 = arith.constant 0 : index
    %c0_4 = arith.constant 0 : index
    %2 = vector.load %arg2[%c0_2, %c0_3, %c0_4] : memref<1x1x8xf32, #tpu.memory_space<vmem>>, vector<1x1x8xf32>
    %3 = vector.shape_cast %2 : vector<1x1x8xf32> to vector<1x8xf32>
    %c0_5 = arith.constant 0 : index
    %c0_6 = arith.constant 0 : index
    %c0_7 = arith.constant 0 : index
    %4 = vector.load %arg3[%c0_5, %c0_6, %c0_7] : memref<1x8x8xf32, #tpu.memory_space<vmem>>, vector<1x8x8xf32>
    %5 = vector.shape_cast %4 : vector<1x8x8xf32> to vector<8x8xf32>
    %c0_8 = arith.constant 0 : index
    %c0_9 = arith.constant 0 : index
    %c0_10 = arith.constant 0 : index
    %6 = vector.load %arg4[%c0_8, %c0_9, %c0_10] : memref<1x8x32xf32, #tpu.memory_space<vmem>>, vector<1x8x32xf32>
    %7 = vector.shape_cast %6 : vector<1x8x32xf32> to vector<8x32xf32>
    %c0_11 = arith.constant 0 : index
    %c0_12 = arith.constant 0 : index
    %c0_13 = arith.constant 0 : index
    %8 = vector.load %arg5[%c0_11, %c0_12, %c0_13] : memref<1x8x32xf32, #tpu.memory_space<vmem>>, vector<1x8x32xf32>
    %9 = vector.shape_cast %8 : vector<1x8x32xf32> to vector<8x32xf32>
    %10 = vector.broadcast %1 : vector<8x1xf32> to vector<8x8xf32>
    %11 = vector.broadcast %3 : vector<1x8xf32> to vector<8x8xf32>
    %12 = arith.mulf %10, %11 : vector<8x8xf32>
    %13 = arith.mulf %12, %5 : vector<8x8xf32>
    %cst = arith.constant dense<0.000000e+00> : vector<8xf32>
    %14 = vector.multi_reduction <add>, %13, %cst [1] : vector<8x8xf32> to vector<8xf32>
    %15 = vector.shape_cast %14 : vector<8xf32> to vector<8x1xf32>
    %cst_14 = arith.constant 1.000000e-10 : f32
    %16 = vector.broadcast %cst_14 : f32 to vector<8x1xf32>
    %17 = arith.addf %15, %16 : vector<8x1xf32>
    %18 = vector.broadcast %17 : vector<8x1xf32> to vector<8x8xf32>
    %19 = arith.divf %13, %18 : vector<8x8xf32>
    %cst_15 = arith.constant dense<0.000000e+00> : vector<8x32xf32>
    %20 = tpu.matmul %19, %7, %cst_15 {dimension_numbers = #tpu.dot_dimension_numbers<[1], [0], [0], [1], [0, 0, 1, 1], [], []>} : vector<8x8xf32>, vector<8x32xf32>, vector<8x32xf32> -> vector<8x32xf32>
    %cst_16 = arith.constant 1.000000e+00 : f32
    %21 = vector.broadcast %cst_16 : f32 to vector<8x1xf32>
    %22 = arith.subf %21, %1 : vector<8x1xf32>
    %23 = vector.broadcast %22 : vector<8x1xf32> to vector<8x32xf32>
    %24 = arith.mulf %7, %23 : vector<8x32xf32>
    %25 = vector.broadcast %1 : vector<8x1xf32> to vector<8x32xf32>
    %26 = arith.mulf %20, %25 : vector<8x32xf32>
    %27 = arith.addf %24, %26 : vector<8x32xf32>
    %28 = arith.addf %27, %9 : vector<8x32xf32>
    %c0_17 = arith.constant 0 : index
    %c0_18 = arith.constant 0 : index
    %29 = vector.load %arg6[%c0_17, %c0_18] : memref<1x32xf32, #tpu.memory_space<vmem>>, vector<1x32xf32>
    %c0_19 = arith.constant 0 : index
    %c0_20 = arith.constant 0 : index
    %30 = vector.load %arg7[%c0_19, %c0_20] : memref<1x32xf32, #tpu.memory_space<vmem>>, vector<1x32xf32>
    %cst_21 = arith.constant dense<0.000000e+00> : vector<8xf32>
    %31 = vector.multi_reduction <add>, %28, %cst_21 [1] : vector<8x32xf32> to vector<8xf32>
    %32 = vector.shape_cast %31 : vector<8xf32> to vector<8x1xf32>
    %cst_22 = arith.constant 3.200000e+01 : f32
    %33 = vector.broadcast %cst_22 : f32 to vector<8x1xf32>
    %34 = arith.divf %32, %33 : vector<8x1xf32>
    %35 = vector.broadcast %34 : vector<8x1xf32> to vector<8x32xf32>
    %36 = arith.subf %28, %35 : vector<8x32xf32>
    %37 = arith.mulf %36, %36 : vector<8x32xf32>
    %cst_23 = arith.constant dense<0.000000e+00> : vector<8xf32>
    %38 = vector.multi_reduction <add>, %37, %cst_23 [1] : vector<8x32xf32> to vector<8xf32>
    %39 = vector.shape_cast %38 : vector<8xf32> to vector<8x1xf32>
    %cst_24 = arith.constant 3.200000e+01 : f32
    %40 = vector.broadcast %cst_24 : f32 to vector<8x1xf32>
    %41 = arith.divf %39, %40 : vector<8x1xf32>
    %42 = vector.broadcast %34 : vector<8x1xf32> to vector<8x32xf32>
    %43 = arith.subf %28, %42 : vector<8x32xf32>
    %cst_25 = arith.constant 9.99999974E-6 : f32
    %44 = vector.broadcast %cst_25 : f32 to vector<8x1xf32>
    %45 = arith.addf %41, %44 : vector<8x1xf32>
    %46 = math.rsqrt %45 : vector<8x1xf32>
    %47 = vector.broadcast %46 : vector<8x1xf32> to vector<8x32xf32>
    %48 = arith.mulf %43, %47 : vector<8x32xf32>
    %49 = vector.broadcast %29 : vector<1x32xf32> to vector<8x32xf32>
    %50 = arith.mulf %48, %49 : vector<8x32xf32>
    %51 = vector.broadcast %30 : vector<1x32xf32> to vector<8x32xf32>
    %52 = arith.addf %50, %51 : vector<8x32xf32>
    %cst_26 = arith.constant 1.000000e+00 : f32
    %53 = vector.broadcast %cst_26 : f32 to vector<8x8xf32>
    %54 = arith.subf %53, %5 : vector<8x8xf32>
    %cst_27 = arith.constant -1.000000e+04 : f32
    %55 = vector.broadcast %cst_27 : f32 to vector<8x8xf32>
    %56 = arith.mulf %54, %55 : vector<8x8xf32>
    %c0_28 = arith.constant 0 : index
    %c0_29 = arith.constant 0 : index
    %c0_30 = arith.constant 0 : index
    %57 = vector.load %arg8[%c0_28, %c0_29, %c0_30] : memref<2x32x96xf32, #tpu.memory_space<vmem>>, vector<1x32x96xf32>
    %58 = vector.shape_cast %57 : vector<1x32x96xf32> to vector<32x96xf32>
    %cst_31 = arith.constant dense<0.000000e+00> : vector<8x96xf32>
    %59 = tpu.matmul %52, %58, %cst_31 {dimension_numbers = #tpu.dot_dimension_numbers<[1], [0], [0], [1], [0, 0, 1, 1], [], []>} : vector<8x32xf32>, vector<32x96xf32>, vector<8x96xf32> -> vector<8x96xf32>
    %c0_32 = arith.constant 0 : index
    %c0_33 = arith.constant 0 : index
    %c0_34 = arith.constant 0 : index
    %60 = vector.load %arg9[%c0_32, %c0_33, %c0_34] : memref<2x1x96xf32, #tpu.memory_space<vmem>>, vector<1x1x96xf32>
    %61 = vector.shape_cast %60 : vector<1x1x96xf32> to vector<1x96xf32>
    %62 = vector.broadcast %61 : vector<1x96xf32> to vector<8x96xf32>
    %63 = arith.addf %59, %62 : vector<8x96xf32>
    %c0_35 = arith.constant 0 : index
    %c0_36 = arith.constant 0 : index
    %c0_37 = arith.constant 0 : index
    %64 = vector.load %arg10[%c0_35, %c0_36, %c0_37] : memref<2x32x32xf32, #tpu.memory_space<vmem>>, vector<1x32x32xf32>
    %65 = vector.shape_cast %64 : vector<1x32x32xf32> to vector<32x32xf32>
    %cst_38 = arith.constant 0.000000e+00 : f32
    %66 = vector.broadcast %cst_38 : f32 to vector<8x32xf32>
    %67 = vector.extract_strided_slice %63 {offsets = [0, 0], sizes = [8, 8], strides = [1, 1]} : vector<8x96xf32> to vector<8x8xf32>
    %68 = vector.extract_strided_slice %63 {offsets = [0, 32], sizes = [8, 8], strides = [1, 1]} : vector<8x96xf32> to vector<8x8xf32>
    %69 = vector.extract_strided_slice %63 {offsets = [0, 64], sizes = [8, 8], strides = [1, 1]} : vector<8x96xf32> to vector<8x8xf32>
    %70 = tpu.transpose %68, [1, 0] : vector<8x8xf32> -> vector<8x8xf32>
    %cst_39 = arith.constant dense<0.000000e+00> : vector<8x8xf32>
    %71 = tpu.matmul %67, %70, %cst_39 {dimension_numbers = #tpu.dot_dimension_numbers<[1], [0], [0], [1], [0, 0, 1, 1], [], []>} : vector<8x8xf32>, vector<8x8xf32>, vector<8x8xf32> -> vector<8x8xf32>
    %72 = arith.addf %71, %56 : vector<8x8xf32>
    %cst_40 = arith.constant dense<0xFF800000> : vector<8xf32>
    %73 = vector.multi_reduction <maximumf>, %72, %cst_40 [1] : vector<8x8xf32> to vector<8xf32>
    %74 = vector.shape_cast %73 : vector<8xf32> to vector<8x1xf32>
    %75 = vector.broadcast %74 : vector<8x1xf32> to vector<8x8xf32>
    %76 = arith.subf %72, %75 : vector<8x8xf32>
    %77 = math.exp %76 : vector<8x8xf32>
    %cst_41 = arith.constant dense<0.000000e+00> : vector<8xf32>
    %78 = vector.multi_reduction <add>, %77, %cst_41 [1] : vector<8x8xf32> to vector<8xf32>
    %79 = vector.shape_cast %78 : vector<8xf32> to vector<8x1xf32>
    %80 = tpu.reciprocal %79 {approx = true} : vector<8x1xf32> -> vector<8x1xf32>
    %81 = vector.broadcast %80 : vector<8x1xf32> to vector<8x8xf32>
    %82 = arith.mulf %77, %81 : vector<8x8xf32>
    %cst_42 = arith.constant dense<0.000000e+00> : vector<8x8xf32>
    %83 = tpu.matmul %82, %69, %cst_42 {dimension_numbers = #tpu.dot_dimension_numbers<[1], [0], [0], [1], [0, 0, 1, 1], [], []>} : vector<8x8xf32>, vector<8x8xf32>, vector<8x8xf32> -> vector<8x8xf32>
    %84 = vector.extract_strided_slice %65 {offsets = [0, 0], sizes = [8, 32], strides = [1, 1]} : vector<32x32xf32> to vector<8x32xf32>
    %cst_43 = arith.constant dense<0.000000e+00> : vector<8x32xf32>
    %85 = tpu.matmul %83, %84, %cst_43 {dimension_numbers = #tpu.dot_dimension_numbers<[1], [0], [0], [1], [0, 0, 1, 1], [], []>} : vector<8x8xf32>, vector<8x32xf32>, vector<8x32xf32> -> vector<8x32xf32>
    %86 = arith.addf %66, %85 : vector<8x32xf32>
    %87 = vector.extract_strided_slice %63 {offsets = [0, 8], sizes = [8, 8], strides = [1, 1]} : vector<8x96xf32> to vector<8x8xf32>
    %88 = vector.extract_strided_slice %63 {offsets = [0, 40], sizes = [8, 8], strides = [1, 1]} : vector<8x96xf32> to vector<8x8xf32>
    %89 = vector.extract_strided_slice %63 {offsets = [0, 72], sizes = [8, 8], strides = [1, 1]} : vector<8x96xf32> to vector<8x8xf32>
    %90 = tpu.transpose %88, [1, 0] : vector<8x8xf32> -> vector<8x8xf32>
    %cst_44 = arith.constant dense<0.000000e+00> : vector<8x8xf32>
    %91 = tpu.matmul %87, %90, %cst_44 {dimension_numbers = #tpu.dot_dimension_numbers<[1], [0], [0], [1], [0, 0, 1, 1], [], []>} : vector<8x8xf32>, vector<8x8xf32>, vector<8x8xf32> -> vector<8x8xf32>
    %92 = arith.addf %91, %56 : vector<8x8xf32>
    %cst_45 = arith.constant dense<0xFF800000> : vector<8xf32>
    %93 = vector.multi_reduction <maximumf>, %92, %cst_45 [1] : vector<8x8xf32> to vector<8xf32>
    %94 = vector.shape_cast %93 : vector<8xf32> to vector<8x1xf32>
    %95 = vector.broadcast %94 : vector<8x1xf32> to vector<8x8xf32>
    %96 = arith.subf %92, %95 : vector<8x8xf32>
    %97 = math.exp %96 : vector<8x8xf32>
    %cst_46 = arith.constant dense<0.000000e+00> : vector<8xf32>
    %98 = vector.multi_reduction <add>, %97, %cst_46 [1] : vector<8x8xf32> to vector<8xf32>
    %99 = vector.shape_cast %98 : vector<8xf32> to vector<8x1xf32>
    %100 = tpu.reciprocal %99 {approx = true} : vector<8x1xf32> -> vector<8x1xf32>
    %101 = vector.broadcast %100 : vector<8x1xf32> to vector<8x8xf32>
    %102 = arith.mulf %97, %101 : vector<8x8xf32>
    %cst_47 = arith.constant dense<0.000000e+00> : vector<8x8xf32>
    %103 = tpu.matmul %102, %89, %cst_47 {dimension_numbers = #tpu.dot_dimension_numbers<[1], [0], [0], [1], [0, 0, 1, 1], [], []>} : vector<8x8xf32>, vector<8x8xf32>, vector<8x8xf32> -> vector<8x8xf32>
    %104 = vector.extract_strided_slice %65 {offsets = [8, 0], sizes = [8, 32], strides = [1, 1]} : vector<32x32xf32> to vector<8x32xf32>
    %cst_48 = arith.constant dense<0.000000e+00> : vector<8x32xf32>
    %105 = tpu.matmul %103, %104, %cst_48 {dimension_numbers = #tpu.dot_dimension_numbers<[1], [0], [0], [1], [0, 0, 1, 1], [], []>} : vector<8x8xf32>, vector<8x32xf32>, vector<8x32xf32> -> vector<8x32xf32>
    %106 = arith.addf %86, %105 : vector<8x32xf32>
    %107 = vector.extract_strided_slice %63 {offsets = [0, 16], sizes = [8, 8], strides = [1, 1]} : vector<8x96xf32> to vector<8x8xf32>
    %108 = vector.extract_strided_slice %63 {offsets = [0, 48], sizes = [8, 8], strides = [1, 1]} : vector<8x96xf32> to vector<8x8xf32>
    %109 = vector.extract_strided_slice %63 {offsets = [0, 80], sizes = [8, 8], strides = [1, 1]} : vector<8x96xf32> to vector<8x8xf32>
    %110 = tpu.transpose %108, [1, 0] : vector<8x8xf32> -> vector<8x8xf32>
    %cst_49 = arith.constant dense<0.000000e+00> : vector<8x8xf32>
    %111 = tpu.matmul %107, %110, %cst_49 {dimension_numbers = #tpu.dot_dimension_numbers<[1], [0], [0], [1], [0, 0, 1, 1], [], []>} : vector<8x8xf32>, vector<8x8xf32>, vector<8x8xf32> -> vector<8x8xf32>
    %112 = arith.addf %111, %56 : vector<8x8xf32>
    %cst_50 = arith.constant dense<0xFF800000> : vector<8xf32>
    %113 = vector.multi_reduction <maximumf>, %112, %cst_50 [1] : vector<8x8xf32> to vector<8xf32>
    %114 = vector.shape_cast %113 : vector<8xf32> to vector<8x1xf32>
    %115 = vector.broadcast %114 : vector<8x1xf32> to vector<8x8xf32>
    %116 = arith.subf %112, %115 : vector<8x8xf32>
    %117 = math.exp %116 : vector<8x8xf32>
    %cst_51 = arith.constant dense<0.000000e+00> : vector<8xf32>
    %118 = vector.multi_reduction <add>, %117, %cst_51 [1] : vector<8x8xf32> to vector<8xf32>
    %119 = vector.shape_cast %118 : vector<8xf32> to vector<8x1xf32>
    %120 = tpu.reciprocal %119 {approx = true} : vector<8x1xf32> -> vector<8x1xf32>
    %121 = vector.broadcast %120 : vector<8x1xf32> to vector<8x8xf32>
    %122 = arith.mulf %117, %121 : vector<8x8xf32>
    %cst_52 = arith.constant dense<0.000000e+00> : vector<8x8xf32>
    %123 = tpu.matmul %122, %109, %cst_52 {dimension_numbers = #tpu.dot_dimension_numbers<[1], [0], [0], [1], [0, 0, 1, 1], [], []>} : vector<8x8xf32>, vector<8x8xf32>, vector<8x8xf32> -> vector<8x8xf32>
    %124 = vector.extract_strided_slice %65 {offsets = [16, 0], sizes = [8, 32], strides = [1, 1]} : vector<32x32xf32> to vector<8x32xf32>
    %cst_53 = arith.constant dense<0.000000e+00> : vector<8x32xf32>
    %125 = tpu.matmul %123, %124, %cst_53 {dimension_numbers = #tpu.dot_dimension_numbers<[1], [0], [0], [1], [0, 0, 1, 1], [], []>} : vector<8x8xf32>, vector<8x32xf32>, vector<8x32xf32> -> vector<8x32xf32>
    %126 = arith.addf %106, %125 : vector<8x32xf32>
    %127 = vector.extract_strided_slice %63 {offsets = [0, 24], sizes = [8, 8], strides = [1, 1]} : vector<8x96xf32> to vector<8x8xf32>
    %128 = vector.extract_strided_slice %63 {offsets = [0, 56], sizes = [8, 8], strides = [1, 1]} : vector<8x96xf32> to vector<8x8xf32>
    %129 = vector.extract_strided_slice %63 {offsets = [0, 88], sizes = [8, 8], strides = [1, 1]} : vector<8x96xf32> to vector<8x8xf32>
    %130 = tpu.transpose %128, [1, 0] : vector<8x8xf32> -> vector<8x8xf32>
    %cst_54 = arith.constant dense<0.000000e+00> : vector<8x8xf32>
    %131 = tpu.matmul %127, %130, %cst_54 {dimension_numbers = #tpu.dot_dimension_numbers<[1], [0], [0], [1], [0, 0, 1, 1], [], []>} : vector<8x8xf32>, vector<8x8xf32>, vector<8x8xf32> -> vector<8x8xf32>
    %132 = arith.addf %131, %56 : vector<8x8xf32>
    %cst_55 = arith.constant dense<0xFF800000> : vector<8xf32>
    %133 = vector.multi_reduction <maximumf>, %132, %cst_55 [1] : vector<8x8xf32> to vector<8xf32>
    %134 = vector.shape_cast %133 : vector<8xf32> to vector<8x1xf32>
    %135 = vector.broadcast %134 : vector<8x1xf32> to vector<8x8xf32>
    %136 = arith.subf %132, %135 : vector<8x8xf32>
    %137 = math.exp %136 : vector<8x8xf32>
    %cst_56 = arith.constant dense<0.000000e+00> : vector<8xf32>
    %138 = vector.multi_reduction <add>, %137, %cst_56 [1] : vector<8x8xf32> to vector<8xf32>
    %139 = vector.shape_cast %138 : vector<8xf32> to vector<8x1xf32>
    %140 = tpu.reciprocal %139 {approx = true} : vector<8x1xf32> -> vector<8x1xf32>
    %141 = vector.broadcast %140 : vector<8x1xf32> to vector<8x8xf32>
    %142 = arith.mulf %137, %141 : vector<8x8xf32>
    %cst_57 = arith.constant dense<0.000000e+00> : vector<8x8xf32>
    %143 = tpu.matmul %142, %129, %cst_57 {dimension_numbers = #tpu.dot_dimension_numbers<[1], [0], [0], [1], [0, 0, 1, 1], [], []>} : vector<8x8xf32>, vector<8x8xf32>, vector<8x8xf32> -> vector<8x8xf32>
    %144 = vector.extract_strided_slice %65 {offsets = [24, 0], sizes = [8, 32], strides = [1, 1]} : vector<32x32xf32> to vector<8x32xf32>
    %cst_58 = arith.constant dense<0.000000e+00> : vector<8x32xf32>
    %145 = tpu.matmul %143, %144, %cst_58 {dimension_numbers = #tpu.dot_dimension_numbers<[1], [0], [0], [1], [0, 0, 1, 1], [], []>} : vector<8x8xf32>, vector<8x32xf32>, vector<8x32xf32> -> vector<8x32xf32>
    %146 = arith.addf %126, %145 : vector<8x32xf32>
    %c0_59 = arith.constant 0 : index
    %c0_60 = arith.constant 0 : index
    %c0_61 = arith.constant 0 : index
    %147 = vector.load %arg11[%c0_59, %c0_60, %c0_61] : memref<2x1x32xf32, #tpu.memory_space<vmem>>, vector<1x1x32xf32>
    %148 = vector.shape_cast %147 : vector<1x1x32xf32> to vector<1x32xf32>
    %149 = vector.broadcast %148 : vector<1x32xf32> to vector<8x32xf32>
    %150 = arith.addf %146, %149 : vector<8x32xf32>
    %151 = arith.addf %150, %52 : vector<8x32xf32>
    %c0_62 = arith.constant 0 : index
    %c0_63 = arith.constant 0 : index
    %c0_64 = arith.constant 0 : index
    %152 = vector.load %arg12[%c0_62, %c0_63, %c0_64] : memref<2x1x32xf32, #tpu.memory_space<vmem>>, vector<1x1x32xf32>
    %153 = vector.shape_cast %152 : vector<1x1x32xf32> to vector<1x32xf32>
    %c0_65 = arith.constant 0 : index
    %c0_66 = arith.constant 0 : index
    %c0_67 = arith.constant 0 : index
    %154 = vector.load %arg13[%c0_65, %c0_66, %c0_67] : memref<2x1x32xf32, #tpu.memory_space<vmem>>, vector<1x1x32xf32>
    %155 = vector.shape_cast %154 : vector<1x1x32xf32> to vector<1x32xf32>
    %cst_68 = arith.constant dense<0.000000e+00> : vector<8xf32>
    %156 = vector.multi_reduction <add>, %151, %cst_68 [1] : vector<8x32xf32> to vector<8xf32>
    %157 = vector.shape_cast %156 : vector<8xf32> to vector<8x1xf32>
    %cst_69 = arith.constant 3.200000e+01 : f32
    %158 = vector.broadcast %cst_69 : f32 to vector<8x1xf32>
    %159 = arith.divf %157, %158 : vector<8x1xf32>
    %160 = vector.broadcast %159 : vector<8x1xf32> to vector<8x32xf32>
    %161 = arith.subf %151, %160 : vector<8x32xf32>
    %162 = arith.mulf %161, %161 : vector<8x32xf32>
    %cst_70 = arith.constant dense<0.000000e+00> : vector<8xf32>
    %163 = vector.multi_reduction <add>, %162, %cst_70 [1] : vector<8x32xf32> to vector<8xf32>
    %164 = vector.shape_cast %163 : vector<8xf32> to vector<8x1xf32>
    %cst_71 = arith.constant 3.200000e+01 : f32
    %165 = vector.broadcast %cst_71 : f32 to vector<8x1xf32>
    %166 = arith.divf %164, %165 : vector<8x1xf32>
    %167 = vector.broadcast %159 : vector<8x1xf32> to vector<8x32xf32>
    %168 = arith.subf %151, %167 : vector<8x32xf32>
    %cst_72 = arith.constant 9.99999974E-6 : f32
    %169 = vector.broadcast %cst_72 : f32 to vector<8x1xf32>
    %170 = arith.addf %166, %169 : vector<8x1xf32>
    %171 = math.rsqrt %170 : vector<8x1xf32>
    %172 = vector.broadcast %171 : vector<8x1xf32> to vector<8x32xf32>
    %173 = arith.mulf %168, %172 : vector<8x32xf32>
    %174 = vector.broadcast %153 : vector<1x32xf32> to vector<8x32xf32>
    %175 = arith.mulf %173, %174 : vector<8x32xf32>
    %176 = vector.broadcast %155 : vector<1x32xf32> to vector<8x32xf32>
    %177 = arith.addf %175, %176 : vector<8x32xf32>
    %c0_73 = arith.constant 0 : index
    %c0_74 = arith.constant 0 : index
    %c0_75 = arith.constant 0 : index
    %178 = vector.load %arg14[%c0_73, %c0_74, %c0_75] : memref<2x32x64xf32, #tpu.memory_space<vmem>>, vector<1x32x64xf32>
    %179 = vector.shape_cast %178 : vector<1x32x64xf32> to vector<32x64xf32>
    %cst_76 = arith.constant dense<0.000000e+00> : vector<8x64xf32>
    %180 = tpu.matmul %177, %179, %cst_76 {dimension_numbers = #tpu.dot_dimension_numbers<[1], [0], [0], [1], [0, 0, 1, 1], [], []>} : vector<8x32xf32>, vector<32x64xf32>, vector<8x64xf32> -> vector<8x64xf32>
    %c0_77 = arith.constant 0 : index
    %c0_78 = arith.constant 0 : index
    %c0_79 = arith.constant 0 : index
    %181 = vector.load %arg15[%c0_77, %c0_78, %c0_79] : memref<2x1x64xf32, #tpu.memory_space<vmem>>, vector<1x1x64xf32>
    %182 = vector.shape_cast %181 : vector<1x1x64xf32> to vector<1x64xf32>
    %183 = vector.broadcast %182 : vector<1x64xf32> to vector<8x64xf32>
    %184 = arith.addf %180, %183 : vector<8x64xf32>
    %185 = arith.mulf %184, %184 : vector<8x64xf32>
    %186 = arith.mulf %184, %185 : vector<8x64xf32>
    %cst_80 = arith.constant 4.471500e-02 : f32
    %187 = vector.broadcast %cst_80 : f32 to vector<8x64xf32>
    %188 = arith.mulf %187, %186 : vector<8x64xf32>
    %189 = arith.addf %184, %188 : vector<8x64xf32>
    %cst_81 = arith.constant 0.797884583 : f32
    %190 = vector.broadcast %cst_81 : f32 to vector<8x64xf32>
    %191 = arith.mulf %190, %189 : vector<8x64xf32>
    %192 = math.tanh %191 : vector<8x64xf32>
    %cst_82 = arith.constant 1.000000e+00 : f32
    %193 = vector.broadcast %cst_82 : f32 to vector<8x64xf32>
    %194 = arith.addf %193, %192 : vector<8x64xf32>
    %cst_83 = arith.constant 5.000000e-01 : f32
    %195 = vector.broadcast %cst_83 : f32 to vector<8x64xf32>
    %196 = arith.mulf %195, %194 : vector<8x64xf32>
    %197 = arith.mulf %184, %196 : vector<8x64xf32>
    %c0_84 = arith.constant 0 : index
    %c0_85 = arith.constant 0 : index
    %c0_86 = arith.constant 0 : index
    %198 = vector.load %arg16[%c0_84, %c0_85, %c0_86] : memref<2x64x32xf32, #tpu.memory_space<vmem>>, vector<1x64x32xf32>
    %199 = vector.shape_cast %198 : vector<1x64x32xf32> to vector<64x32xf32>
    %cst_87 = arith.constant dense<0.000000e+00> : vector<8x32xf32>
    %200 = tpu.matmul %197, %199, %cst_87 {dimension_numbers = #tpu.dot_dimension_numbers<[1], [0], [0], [1], [0, 0, 1, 1], [], []>} : vector<8x64xf32>, vector<64x32xf32>, vector<8x32xf32> -> vector<8x32xf32>
    %c0_88 = arith.constant 0 : index
    %c0_89 = arith.constant 0 : index
    %c0_90 = arith.constant 0 : index
    %201 = vector.load %arg17[%c0_88, %c0_89, %c0_90] : memref<2x1x32xf32, #tpu.memory_space<vmem>>, vector<1x1x32xf32>
    %202 = vector.shape_cast %201 : vector<1x1x32xf32> to vector<1x32xf32>
    %203 = vector.broadcast %202 : vector<1x32xf32> to vector<8x32xf32>
    %204 = arith.addf %200, %203 : vector<8x32xf32>
    %205 = arith.addf %204, %177 : vector<8x32xf32>
    %c0_91 = arith.constant 0 : index
    %c0_92 = arith.constant 0 : index
    %c0_93 = arith.constant 0 : index
    %206 = vector.load %arg18[%c0_91, %c0_92, %c0_93] : memref<2x1x32xf32, #tpu.memory_space<vmem>>, vector<1x1x32xf32>
    %207 = vector.shape_cast %206 : vector<1x1x32xf32> to vector<1x32xf32>
    %c0_94 = arith.constant 0 : index
    %c0_95 = arith.constant 0 : index
    %c0_96 = arith.constant 0 : index
    %208 = vector.load %arg19[%c0_94, %c0_95, %c0_96] : memref<2x1x32xf32, #tpu.memory_space<vmem>>, vector<1x1x32xf32>
    %209 = vector.shape_cast %208 : vector<1x1x32xf32> to vector<1x32xf32>
    %cst_97 = arith.constant dense<0.000000e+00> : vector<8xf32>
    %210 = vector.multi_reduction <add>, %205, %cst_97 [1] : vector<8x32xf32> to vector<8xf32>
    %211 = vector.shape_cast %210 : vector<8xf32> to vector<8x1xf32>
    %cst_98 = arith.constant 3.200000e+01 : f32
    %212 = vector.broadcast %cst_98 : f32 to vector<8x1xf32>
    %213 = arith.divf %211, %212 : vector<8x1xf32>
    %214 = vector.broadcast %213 : vector<8x1xf32> to vector<8x32xf32>
    %215 = arith.subf %205, %214 : vector<8x32xf32>
    %216 = arith.mulf %215, %215 : vector<8x32xf32>
    %cst_99 = arith.constant dense<0.000000e+00> : vector<8xf32>
    %217 = vector.multi_reduction <add>, %216, %cst_99 [1] : vector<8x32xf32> to vector<8xf32>
    %218 = vector.shape_cast %217 : vector<8xf32> to vector<8x1xf32>
    %cst_100 = arith.constant 3.200000e+01 : f32
    %219 = vector.broadcast %cst_100 : f32 to vector<8x1xf32>
    %220 = arith.divf %218, %219 : vector<8x1xf32>
    %221 = vector.broadcast %213 : vector<8x1xf32> to vector<8x32xf32>
    %222 = arith.subf %205, %221 : vector<8x32xf32>
    %cst_101 = arith.constant 9.99999974E-6 : f32
    %223 = vector.broadcast %cst_101 : f32 to vector<8x1xf32>
    %224 = arith.addf %220, %223 : vector<8x1xf32>
    %225 = math.rsqrt %224 : vector<8x1xf32>
    %226 = vector.broadcast %225 : vector<8x1xf32> to vector<8x32xf32>
    %227 = arith.mulf %222, %226 : vector<8x32xf32>
    %228 = vector.broadcast %207 : vector<1x32xf32> to vector<8x32xf32>
    %229 = arith.mulf %227, %228 : vector<8x32xf32>
    %230 = vector.broadcast %209 : vector<1x32xf32> to vector<8x32xf32>
    %231 = arith.addf %229, %230 : vector<8x32xf32>
    %c1 = arith.constant 1 : index
    %c0_102 = arith.constant 0 : index
    %c0_103 = arith.constant 0 : index
    %232 = vector.load %arg8[%c1, %c0_102, %c0_103] : memref<2x32x96xf32, #tpu.memory_space<vmem>>, vector<1x32x96xf32>
    %233 = vector.shape_cast %232 : vector<1x32x96xf32> to vector<32x96xf32>
    %cst_104 = arith.constant dense<0.000000e+00> : vector<8x96xf32>
    %234 = tpu.matmul %231, %233, %cst_104 {dimension_numbers = #tpu.dot_dimension_numbers<[1], [0], [0], [1], [0, 0, 1, 1], [], []>} : vector<8x32xf32>, vector<32x96xf32>, vector<8x96xf32> -> vector<8x96xf32>
    %c1_105 = arith.constant 1 : index
    %c0_106 = arith.constant 0 : index
    %c0_107 = arith.constant 0 : index
    %235 = vector.load %arg9[%c1_105, %c0_106, %c0_107] : memref<2x1x96xf32, #tpu.memory_space<vmem>>, vector<1x1x96xf32>
    %236 = vector.shape_cast %235 : vector<1x1x96xf32> to vector<1x96xf32>
    %237 = vector.broadcast %236 : vector<1x96xf32> to vector<8x96xf32>
    %238 = arith.addf %234, %237 : vector<8x96xf32>
    %c1_108 = arith.constant 1 : index
    %c0_109 = arith.constant 0 : index
    %c0_110 = arith.constant 0 : index
    %239 = vector.load %arg10[%c1_108, %c0_109, %c0_110] : memref<2x32x32xf32, #tpu.memory_space<vmem>>, vector<1x32x32xf32>
    %240 = vector.shape_cast %239 : vector<1x32x32xf32> to vector<32x32xf32>
    %cst_111 = arith.constant 0.000000e+00 : f32
    %241 = vector.broadcast %cst_111 : f32 to vector<8x32xf32>
    %242 = vector.extract_strided_slice %238 {offsets = [0, 0], sizes = [8, 8], strides = [1, 1]} : vector<8x96xf32> to vector<8x8xf32>
    %243 = vector.extract_strided_slice %238 {offsets = [0, 32], sizes = [8, 8], strides = [1, 1]} : vector<8x96xf32> to vector<8x8xf32>
    %244 = vector.extract_strided_slice %238 {offsets = [0, 64], sizes = [8, 8], strides = [1, 1]} : vector<8x96xf32> to vector<8x8xf32>
    %245 = tpu.transpose %243, [1, 0] : vector<8x8xf32> -> vector<8x8xf32>
    %cst_112 = arith.constant dense<0.000000e+00> : vector<8x8xf32>
    %246 = tpu.matmul %242, %245, %cst_112 {dimension_numbers = #tpu.dot_dimension_numbers<[1], [0], [0], [1], [0, 0, 1, 1], [], []>} : vector<8x8xf32>, vector<8x8xf32>, vector<8x8xf32> -> vector<8x8xf32>
    %247 = arith.addf %246, %56 : vector<8x8xf32>
    %cst_113 = arith.constant dense<0xFF800000> : vector<8xf32>
    %248 = vector.multi_reduction <maximumf>, %247, %cst_113 [1] : vector<8x8xf32> to vector<8xf32>
    %249 = vector.shape_cast %248 : vector<8xf32> to vector<8x1xf32>
    %250 = vector.broadcast %249 : vector<8x1xf32> to vector<8x8xf32>
    %251 = arith.subf %247, %250 : vector<8x8xf32>
    %252 = math.exp %251 : vector<8x8xf32>
    %cst_114 = arith.constant dense<0.000000e+00> : vector<8xf32>
    %253 = vector.multi_reduction <add>, %252, %cst_114 [1] : vector<8x8xf32> to vector<8xf32>
    %254 = vector.shape_cast %253 : vector<8xf32> to vector<8x1xf32>
    %255 = tpu.reciprocal %254 {approx = true} : vector<8x1xf32> -> vector<8x1xf32>
    %256 = vector.broadcast %255 : vector<8x1xf32> to vector<8x8xf32>
    %257 = arith.mulf %252, %256 : vector<8x8xf32>
    %cst_115 = arith.constant dense<0.000000e+00> : vector<8x8xf32>
    %258 = tpu.matmul %257, %244, %cst_115 {dimension_numbers = #tpu.dot_dimension_numbers<[1], [0], [0], [1], [0, 0, 1, 1], [], []>} : vector<8x8xf32>, vector<8x8xf32>, vector<8x8xf32> -> vector<8x8xf32>
    %259 = vector.extract_strided_slice %240 {offsets = [0, 0], sizes = [8, 32], strides = [1, 1]} : vector<32x32xf32> to vector<8x32xf32>
    %cst_116 = arith.constant dense<0.000000e+00> : vector<8x32xf32>
    %260 = tpu.matmul %258, %259, %cst_116 {dimension_numbers = #tpu.dot_dimension_numbers<[1], [0], [0], [1], [0, 0, 1, 1], [], []>} : vector<8x8xf32>, vector<8x32xf32>, vector<8x32xf32> -> vector<8x32xf32>
    %261 = arith.addf %241, %260 : vector<8x32xf32>
    %262 = vector.extract_strided_slice %238 {offsets = [0, 8], sizes = [8, 8], strides = [1, 1]} : vector<8x96xf32> to vector<8x8xf32>
    %263 = vector.extract_strided_slice %238 {offsets = [0, 40], sizes = [8, 8], strides = [1, 1]} : vector<8x96xf32> to vector<8x8xf32>
    %264 = vector.extract_strided_slice %238 {offsets = [0, 72], sizes = [8, 8], strides = [1, 1]} : vector<8x96xf32> to vector<8x8xf32>
    %265 = tpu.transpose %263, [1, 0] : vector<8x8xf32> -> vector<8x8xf32>
    %cst_117 = arith.constant dense<0.000000e+00> : vector<8x8xf32>
    %266 = tpu.matmul %262, %265, %cst_117 {dimension_numbers = #tpu.dot_dimension_numbers<[1], [0], [0], [1], [0, 0, 1, 1], [], []>} : vector<8x8xf32>, vector<8x8xf32>, vector<8x8xf32> -> vector<8x8xf32>
    %267 = arith.addf %266, %56 : vector<8x8xf32>
    %cst_118 = arith.constant dense<0xFF800000> : vector<8xf32>
    %268 = vector.multi_reduction <maximumf>, %267, %cst_118 [1] : vector<8x8xf32> to vector<8xf32>
    %269 = vector.shape_cast %268 : vector<8xf32> to vector<8x1xf32>
    %270 = vector.broadcast %269 : vector<8x1xf32> to vector<8x8xf32>
    %271 = arith.subf %267, %270 : vector<8x8xf32>
    %272 = math.exp %271 : vector<8x8xf32>
    %cst_119 = arith.constant dense<0.000000e+00> : vector<8xf32>
    %273 = vector.multi_reduction <add>, %272, %cst_119 [1] : vector<8x8xf32> to vector<8xf32>
    %274 = vector.shape_cast %273 : vector<8xf32> to vector<8x1xf32>
    %275 = tpu.reciprocal %274 {approx = true} : vector<8x1xf32> -> vector<8x1xf32>
    %276 = vector.broadcast %275 : vector<8x1xf32> to vector<8x8xf32>
    %277 = arith.mulf %272, %276 : vector<8x8xf32>
    %cst_120 = arith.constant dense<0.000000e+00> : vector<8x8xf32>
    %278 = tpu.matmul %277, %264, %cst_120 {dimension_numbers = #tpu.dot_dimension_numbers<[1], [0], [0], [1], [0, 0, 1, 1], [], []>} : vector<8x8xf32>, vector<8x8xf32>, vector<8x8xf32> -> vector<8x8xf32>
    %279 = vector.extract_strided_slice %240 {offsets = [8, 0], sizes = [8, 32], strides = [1, 1]} : vector<32x32xf32> to vector<8x32xf32>
    %cst_121 = arith.constant dense<0.000000e+00> : vector<8x32xf32>
    %280 = tpu.matmul %278, %279, %cst_121 {dimension_numbers = #tpu.dot_dimension_numbers<[1], [0], [0], [1], [0, 0, 1, 1], [], []>} : vector<8x8xf32>, vector<8x32xf32>, vector<8x32xf32> -> vector<8x32xf32>
    %281 = arith.addf %261, %280 : vector<8x32xf32>
    %282 = vector.extract_strided_slice %238 {offsets = [0, 16], sizes = [8, 8], strides = [1, 1]} : vector<8x96xf32> to vector<8x8xf32>
    %283 = vector.extract_strided_slice %238 {offsets = [0, 48], sizes = [8, 8], strides = [1, 1]} : vector<8x96xf32> to vector<8x8xf32>
    %284 = vector.extract_strided_slice %238 {offsets = [0, 80], sizes = [8, 8], strides = [1, 1]} : vector<8x96xf32> to vector<8x8xf32>
    %285 = tpu.transpose %283, [1, 0] : vector<8x8xf32> -> vector<8x8xf32>
    %cst_122 = arith.constant dense<0.000000e+00> : vector<8x8xf32>
    %286 = tpu.matmul %282, %285, %cst_122 {dimension_numbers = #tpu.dot_dimension_numbers<[1], [0], [0], [1], [0, 0, 1, 1], [], []>} : vector<8x8xf32>, vector<8x8xf32>, vector<8x8xf32> -> vector<8x8xf32>
    %287 = arith.addf %286, %56 : vector<8x8xf32>
    %cst_123 = arith.constant dense<0xFF800000> : vector<8xf32>
    %288 = vector.multi_reduction <maximumf>, %287, %cst_123 [1] : vector<8x8xf32> to vector<8xf32>
    %289 = vector.shape_cast %288 : vector<8xf32> to vector<8x1xf32>
    %290 = vector.broadcast %289 : vector<8x1xf32> to vector<8x8xf32>
    %291 = arith.subf %287, %290 : vector<8x8xf32>
    %292 = math.exp %291 : vector<8x8xf32>
    %cst_124 = arith.constant dense<0.000000e+00> : vector<8xf32>
    %293 = vector.multi_reduction <add>, %292, %cst_124 [1] : vector<8x8xf32> to vector<8xf32>
    %294 = vector.shape_cast %293 : vector<8xf32> to vector<8x1xf32>
    %295 = tpu.reciprocal %294 {approx = true} : vector<8x1xf32> -> vector<8x1xf32>
    %296 = vector.broadcast %295 : vector<8x1xf32> to vector<8x8xf32>
    %297 = arith.mulf %292, %296 : vector<8x8xf32>
    %cst_125 = arith.constant dense<0.000000e+00> : vector<8x8xf32>
    %298 = tpu.matmul %297, %284, %cst_125 {dimension_numbers = #tpu.dot_dimension_numbers<[1], [0], [0], [1], [0, 0, 1, 1], [], []>} : vector<8x8xf32>, vector<8x8xf32>, vector<8x8xf32> -> vector<8x8xf32>
    %299 = vector.extract_strided_slice %240 {offsets = [16, 0], sizes = [8, 32], strides = [1, 1]} : vector<32x32xf32> to vector<8x32xf32>
    %cst_126 = arith.constant dense<0.000000e+00> : vector<8x32xf32>
    %300 = tpu.matmul %298, %299, %cst_126 {dimension_numbers = #tpu.dot_dimension_numbers<[1], [0], [0], [1], [0, 0, 1, 1], [], []>} : vector<8x8xf32>, vector<8x32xf32>, vector<8x32xf32> -> vector<8x32xf32>
    %301 = arith.addf %281, %300 : vector<8x32xf32>
    %302 = vector.extract_strided_slice %238 {offsets = [0, 24], sizes = [8, 8], strides = [1, 1]} : vector<8x96xf32> to vector<8x8xf32>
    %303 = vector.extract_strided_slice %238 {offsets = [0, 56], sizes = [8, 8], strides = [1, 1]} : vector<8x96xf32> to vector<8x8xf32>
    %304 = vector.extract_strided_slice %238 {offsets = [0, 88], sizes = [8, 8], strides = [1, 1]} : vector<8x96xf32> to vector<8x8xf32>
    %305 = tpu.transpose %303, [1, 0] : vector<8x8xf32> -> vector<8x8xf32>
    %cst_127 = arith.constant dense<0.000000e+00> : vector<8x8xf32>
    %306 = tpu.matmul %302, %305, %cst_127 {dimension_numbers = #tpu.dot_dimension_numbers<[1], [0], [0], [1], [0, 0, 1, 1], [], []>} : vector<8x8xf32>, vector<8x8xf32>, vector<8x8xf32> -> vector<8x8xf32>
    %307 = arith.addf %306, %56 : vector<8x8xf32>
    %cst_128 = arith.constant dense<0xFF800000> : vector<8xf32>
    %308 = vector.multi_reduction <maximumf>, %307, %cst_128 [1] : vector<8x8xf32> to vector<8xf32>
    %309 = vector.shape_cast %308 : vector<8xf32> to vector<8x1xf32>
    %310 = vector.broadcast %309 : vector<8x1xf32> to vector<8x8xf32>
    %311 = arith.subf %307, %310 : vector<8x8xf32>
    %312 = math.exp %311 : vector<8x8xf32>
    %cst_129 = arith.constant dense<0.000000e+00> : vector<8xf32>
    %313 = vector.multi_reduction <add>, %312, %cst_129 [1] : vector<8x8xf32> to vector<8xf32>
    %314 = vector.shape_cast %313 : vector<8xf32> to vector<8x1xf32>
    %315 = tpu.reciprocal %314 {approx = true} : vector<8x1xf32> -> vector<8x1xf32>
    %316 = vector.broadcast %315 : vector<8x1xf32> to vector<8x8xf32>
    %317 = arith.mulf %312, %316 : vector<8x8xf32>
    %cst_130 = arith.constant dense<0.000000e+00> : vector<8x8xf32>
    %318 = tpu.matmul %317, %304, %cst_130 {dimension_numbers = #tpu.dot_dimension_numbers<[1], [0], [0], [1], [0, 0, 1, 1], [], []>} : vector<8x8xf32>, vector<8x8xf32>, vector<8x8xf32> -> vector<8x8xf32>
    %319 = vector.extract_strided_slice %240 {offsets = [24, 0], sizes = [8, 32], strides = [1, 1]} : vector<32x32xf32> to vector<8x32xf32>
    %cst_131 = arith.constant dense<0.000000e+00> : vector<8x32xf32>
    %320 = tpu.matmul %318, %319, %cst_131 {dimension_numbers = #tpu.dot_dimension_numbers<[1], [0], [0], [1], [0, 0, 1, 1], [], []>} : vector<8x8xf32>, vector<8x32xf32>, vector<8x32xf32> -> vector<8x32xf32>
    %321 = arith.addf %301, %320 : vector<8x32xf32>
    %c1_132 = arith.constant 1 : index
    %c0_133 = arith.constant 0 : index
    %c0_134 = arith.constant 0 : index
    %322 = vector.load %arg11[%c1_132, %c0_133, %c0_134] : memref<2x1x32xf32, #tpu.memory_space<vmem>>, vector<1x1x32xf32>
    %323 = vector.shape_cast %322 : vector<1x1x32xf32> to vector<1x32xf32>
    %324 = vector.broadcast %323 : vector<1x32xf32> to vector<8x32xf32>
    %325 = arith.addf %321, %324 : vector<8x32xf32>
    %326 = arith.addf %325, %231 : vector<8x32xf32>
    %c1_135 = arith.constant 1 : index
    %c0_136 = arith.constant 0 : index
    %c0_137 = arith.constant 0 : index
    %327 = vector.load %arg12[%c1_135, %c0_136, %c0_137] : memref<2x1x32xf32, #tpu.memory_space<vmem>>, vector<1x1x32xf32>
    %328 = vector.shape_cast %327 : vector<1x1x32xf32> to vector<1x32xf32>
    %c1_138 = arith.constant 1 : index
    %c0_139 = arith.constant 0 : index
    %c0_140 = arith.constant 0 : index
    %329 = vector.load %arg13[%c1_138, %c0_139, %c0_140] : memref<2x1x32xf32, #tpu.memory_space<vmem>>, vector<1x1x32xf32>
    %330 = vector.shape_cast %329 : vector<1x1x32xf32> to vector<1x32xf32>
    %cst_141 = arith.constant dense<0.000000e+00> : vector<8xf32>
    %331 = vector.multi_reduction <add>, %326, %cst_141 [1] : vector<8x32xf32> to vector<8xf32>
    %332 = vector.shape_cast %331 : vector<8xf32> to vector<8x1xf32>
    %cst_142 = arith.constant 3.200000e+01 : f32
    %333 = vector.broadcast %cst_142 : f32 to vector<8x1xf32>
    %334 = arith.divf %332, %333 : vector<8x1xf32>
    %335 = vector.broadcast %334 : vector<8x1xf32> to vector<8x32xf32>
    %336 = arith.subf %326, %335 : vector<8x32xf32>
    %337 = arith.mulf %336, %336 : vector<8x32xf32>
    %cst_143 = arith.constant dense<0.000000e+00> : vector<8xf32>
    %338 = vector.multi_reduction <add>, %337, %cst_143 [1] : vector<8x32xf32> to vector<8xf32>
    %339 = vector.shape_cast %338 : vector<8xf32> to vector<8x1xf32>
    %cst_144 = arith.constant 3.200000e+01 : f32
    %340 = vector.broadcast %cst_144 : f32 to vector<8x1xf32>
    %341 = arith.divf %339, %340 : vector<8x1xf32>
    %342 = vector.broadcast %334 : vector<8x1xf32> to vector<8x32xf32>
    %343 = arith.subf %326, %342 : vector<8x32xf32>
    %cst_145 = arith.constant 9.99999974E-6 : f32
    %344 = vector.broadcast %cst_145 : f32 to vector<8x1xf32>
    %345 = arith.addf %341, %344 : vector<8x1xf32>
    %346 = math.rsqrt %345 : vector<8x1xf32>
    %347 = vector.broadcast %346 : vector<8x1xf32> to vector<8x32xf32>
    %348 = arith.mulf %343, %347 : vector<8x32xf32>
    %349 = vector.broadcast %328 : vector<1x32xf32> to vector<8x32xf32>
    %350 = arith.mulf %348, %349 : vector<8x32xf32>
    %351 = vector.broadcast %330 : vector<1x32xf32> to vector<8x32xf32>
    %352 = arith.addf %350, %351 : vector<8x32xf32>
    %c1_146 = arith.constant 1 : index
    %c0_147 = arith.constant 0 : index
    %c0_148 = arith.constant 0 : index
    %353 = vector.load %arg14[%c1_146, %c0_147, %c0_148] : memref<2x32x64xf32, #tpu.memory_space<vmem>>, vector<1x32x64xf32>
    %354 = vector.shape_cast %353 : vector<1x32x64xf32> to vector<32x64xf32>
    %cst_149 = arith.constant dense<0.000000e+00> : vector<8x64xf32>
    %355 = tpu.matmul %352, %354, %cst_149 {dimension_numbers = #tpu.dot_dimension_numbers<[1], [0], [0], [1], [0, 0, 1, 1], [], []>} : vector<8x32xf32>, vector<32x64xf32>, vector<8x64xf32> -> vector<8x64xf32>
    %c1_150 = arith.constant 1 : index
    %c0_151 = arith.constant 0 : index
    %c0_152 = arith.constant 0 : index
    %356 = vector.load %arg15[%c1_150, %c0_151, %c0_152] : memref<2x1x64xf32, #tpu.memory_space<vmem>>, vector<1x1x64xf32>
    %357 = vector.shape_cast %356 : vector<1x1x64xf32> to vector<1x64xf32>
    %358 = vector.broadcast %357 : vector<1x64xf32> to vector<8x64xf32>
    %359 = arith.addf %355, %358 : vector<8x64xf32>
    %360 = arith.mulf %359, %359 : vector<8x64xf32>
    %361 = arith.mulf %359, %360 : vector<8x64xf32>
    %cst_153 = arith.constant 4.471500e-02 : f32
    %362 = vector.broadcast %cst_153 : f32 to vector<8x64xf32>
    %363 = arith.mulf %362, %361 : vector<8x64xf32>
    %364 = arith.addf %359, %363 : vector<8x64xf32>
    %cst_154 = arith.constant 0.797884583 : f32
    %365 = vector.broadcast %cst_154 : f32 to vector<8x64xf32>
    %366 = arith.mulf %365, %364 : vector<8x64xf32>
    %367 = math.tanh %366 : vector<8x64xf32>
    %cst_155 = arith.constant 1.000000e+00 : f32
    %368 = vector.broadcast %cst_155 : f32 to vector<8x64xf32>
    %369 = arith.addf %368, %367 : vector<8x64xf32>
    %cst_156 = arith.constant 5.000000e-01 : f32
    %370 = vector.broadcast %cst_156 : f32 to vector<8x64xf32>
    %371 = arith.mulf %370, %369 : vector<8x64xf32>
    %372 = arith.mulf %359, %371 : vector<8x64xf32>
    %c1_157 = arith.constant 1 : index
    %c0_158 = arith.constant 0 : index
    %c0_159 = arith.constant 0 : index
    %373 = vector.load %arg16[%c1_157, %c0_158, %c0_159] : memref<2x64x32xf32, #tpu.memory_space<vmem>>, vector<1x64x32xf32>
    %374 = vector.shape_cast %373 : vector<1x64x32xf32> to vector<64x32xf32>
    %cst_160 = arith.constant dense<0.000000e+00> : vector<8x32xf32>
    %375 = tpu.matmul %372, %374, %cst_160 {dimension_numbers = #tpu.dot_dimension_numbers<[1], [0], [0], [1], [0, 0, 1, 1], [], []>} : vector<8x64xf32>, vector<64x32xf32>, vector<8x32xf32> -> vector<8x32xf32>
    %c1_161 = arith.constant 1 : index
    %c0_162 = arith.constant 0 : index
    %c0_163 = arith.constant 0 : index
    %376 = vector.load %arg17[%c1_161, %c0_162, %c0_163] : memref<2x1x32xf32, #tpu.memory_space<vmem>>, vector<1x1x32xf32>
    %377 = vector.shape_cast %376 : vector<1x1x32xf32> to vector<1x32xf32>
    %378 = vector.broadcast %377 : vector<1x32xf32> to vector<8x32xf32>
    %379 = arith.addf %375, %378 : vector<8x32xf32>
    %380 = arith.addf %379, %352 : vector<8x32xf32>
    %c1_164 = arith.constant 1 : index
    %c0_165 = arith.constant 0 : index
    %c0_166 = arith.constant 0 : index
    %381 = vector.load %arg18[%c1_164, %c0_165, %c0_166] : memref<2x1x32xf32, #tpu.memory_space<vmem>>, vector<1x1x32xf32>
    %382 = vector.shape_cast %381 : vector<1x1x32xf32> to vector<1x32xf32>
    %c1_167 = arith.constant 1 : index
    %c0_168 = arith.constant 0 : index
    %c0_169 = arith.constant 0 : index
    %383 = vector.load %arg19[%c1_167, %c0_168, %c0_169] : memref<2x1x32xf32, #tpu.memory_space<vmem>>, vector<1x1x32xf32>
    %384 = vector.shape_cast %383 : vector<1x1x32xf32> to vector<1x32xf32>
    %cst_170 = arith.constant dense<0.000000e+00> : vector<8xf32>
    %385 = vector.multi_reduction <add>, %380, %cst_170 [1] : vector<8x32xf32> to vector<8xf32>
    %386 = vector.shape_cast %385 : vector<8xf32> to vector<8x1xf32>
    %cst_171 = arith.constant 3.200000e+01 : f32
    %387 = vector.broadcast %cst_171 : f32 to vector<8x1xf32>
    %388 = arith.divf %386, %387 : vector<8x1xf32>
    %389 = vector.broadcast %388 : vector<8x1xf32> to vector<8x32xf32>
    %390 = arith.subf %380, %389 : vector<8x32xf32>
    %391 = arith.mulf %390, %390 : vector<8x32xf32>
    %cst_172 = arith.constant dense<0.000000e+00> : vector<8xf32>
    %392 = vector.multi_reduction <add>, %391, %cst_172 [1] : vector<8x32xf32> to vector<8xf32>
    %393 = vector.shape_cast %392 : vector<8xf32> to vector<8x1xf32>
    %cst_173 = arith.constant 3.200000e+01 : f32
    %394 = vector.broadcast %cst_173 : f32 to vector<8x1xf32>
    %395 = arith.divf %393, %394 : vector<8x1xf32>
    %396 = vector.broadcast %388 : vector<8x1xf32> to vector<8x32xf32>
    %397 = arith.subf %380, %396 : vector<8x32xf32>
    %cst_174 = arith.constant 9.99999974E-6 : f32
    %398 = vector.broadcast %cst_174 : f32 to vector<8x1xf32>
    %399 = arith.addf %395, %398 : vector<8x1xf32>
    %400 = math.rsqrt %399 : vector<8x1xf32>
    %401 = vector.broadcast %400 : vector<8x1xf32> to vector<8x32xf32>
    %402 = arith.mulf %397, %401 : vector<8x32xf32>
    %403 = vector.broadcast %382 : vector<1x32xf32> to vector<8x32xf32>
    %404 = arith.mulf %402, %403 : vector<8x32xf32>
    %405 = vector.broadcast %384 : vector<1x32xf32> to vector<8x32xf32>
    %406 = arith.addf %404, %405 : vector<8x32xf32>
    %407 = vector.extract_strided_slice %406 {offsets = [0, 0], sizes = [1, 32], strides = [1, 1]} : vector<8x32xf32> to vector<1x32xf32>
    %c0_175 = arith.constant 0 : index
    %c0_176 = arith.constant 0 : index
    %c0_177 = arith.constant 0 : index
    %408 = vector.load %arg20[%c0_175, %c0_176, %c0_177] : memref<1x1x32xf32, #tpu.memory_space<vmem>>, vector<1x1x32xf32>
    %409 = vector.shape_cast %408 : vector<1x1x32xf32> to vector<1x32xf32>
    %410 = vector.shape_cast %407 : vector<1x32xf32> to vector<1x1x32xf32>
    tpu.vector_store %arg20[%c0_175, %c0_176, %c0_177], %410 {strides = array<i32>} : memref<1x1x32xf32, #tpu.memory_space<vmem>>, vector<1x1x32xf32>,
    return
  }
  func.func @transform_0(%arg0: i32) -> (i32, i32, i32) {
    %c0_i32 = arith.constant 0 : i32
    %c0_i32_0 = arith.constant 0 : i32
    %c0_i32_1 = arith.constant 0 : i32
    return %arg0, %c0_i32, %c0_i32_0 : i32, i32, i32
  }
  func.func @transform_1(%arg0: i32) -> (i32, i32, i32) {
    %c0_i32 = arith.constant 0 : i32
    %c0_i32_0 = arith.constant 0 : i32
    %c0_i32_1 = arith.constant 0 : i32
    return %arg0, %c0_i32, %c0_i32_0 : i32, i32, i32
  }
  func.func @transform_2(%arg0: i32) -> (i32, i32, i32) {
    %c0_i32 = arith.constant 0 : i32
    %c0_i32_0 = arith.constant 0 : i32
    %c0_i32_1 = arith.constant 0 : i32
    return %arg0, %c0_i32, %c0_i32_0 : i32, i32, i32
  }
  func.func @transform_3(%arg0: i32) -> (i32, i32, i32) {
    %c0_i32 = arith.constant 0 : i32
    %c0_i32_0 = arith.constant 0 : i32
    %c0_i32_1 = arith.constant 0 : i32
    return %arg0, %c0_i32, %c0_i32_0 : i32, i32, i32
  }
  func.func @transform_4(%arg0: i32) -> (i32, i32, i32) {
    %c0_i32 = arith.constant 0 : i32
    %c0_i32_0 = arith.constant 0 : i32
    %c0_i32_1 = arith.constant 0 : i32
    return %arg0, %c0_i32, %c0_i32_0 : i32, i32, i32
  }
  func.func @transform_5(%arg0: i32) -> (i32, i32) {
    %c0_i32 = arith.constant 0 : i32
    %c0_i32_0 = arith.constant 0 : i32
    %c0_i32_1 = arith.constant 0 : i32
    return %c0_i32, %c0_i32_0 : i32, i32
  }
  func.func @transform_6(%arg0: i32) -> (i32, i32) {
    %c0_i32 = arith.constant 0 : i32
    %c0_i32_0 = arith.constant 0 : i32
    %c0_i32_1 = arith.constant 0 : i32
    return %c0_i32, %c0_i32_0 : i32, i32
  }
  func.func @transform_7(%arg0: i32) -> (i32, i32, i32) {
    %c0_i32 = arith.constant 0 : i32
    %c0_i32_0 = arith.constant 0 : i32
    %c0_i32_1 = arith.constant 0 : i32
    %c0_i32_2 = arith.constant 0 : i32
    return %c0_i32, %c0_i32_0, %c0_i32_1 : i32, i32, i32
  }
  func.func @transform_8(%arg0: i32) -> (i32, i32, i32) {
    %c0_i32 = arith.constant 0 : i32
    %c0_i32_0 = arith.constant 0 : i32
    %c0_i32_1 = arith.constant 0 : i32
    %c0_i32_2 = arith.constant 0 : i32
    return %c0_i32, %c0_i32_0, %c0_i32_1 : i32, i32, i32
  }
  func.func @transform_9(%arg0: i32) -> (i32, i32, i32) {
    %c0_i32 = arith.constant 0 : i32
    %c0_i32_0 = arith.constant 0 : i32
    %c0_i32_1 = arith.constant 0 : i32
    %c0_i32_2 = arith.constant 0 : i32
    return %c0_i32, %c0_i32_0, %c0_i32_1 : i32, i32, i32
  }
  func.func @transform_10(%arg0: i32) -> (i32, i32, i32) {
    %c0_i32 = arith.constant 0 : i32
    %c0_i32_0 = arith.constant 0 : i32
    %c0_i32_1 = arith.constant 0 : i32
    %c0_i32_2 = arith.constant 0 : i32
    return %c0_i32, %c0_i32_0, %c0_i32_1 : i32, i32, i32
  }
  func.func @transform_11(%arg0: i32) -> (i32, i32, i32) {
    %c0_i32 = arith.constant 0 : i32
    %c0_i32_0 = arith.constant 0 : i32
    %c0_i32_1 = arith.constant 0 : i32
    %c0_i32_2 = arith.constant 0 : i32
    return %c0_i32, %c0_i32_0, %c0_i32_1 : i32, i32, i32
  }
  func.func @transform_12(%arg0: i32) -> (i32, i32, i32) {
    %c0_i32 = arith.constant 0 : i32
    %c0_i32_0 = arith.constant 0 : i32
    %c0_i32_1 = arith.constant 0 : i32
    %c0_i32_2 = arith.constant 0 : i32
    return %c0_i32, %c0_i32_0, %c0_i32_1 : i32, i32, i32
  }
  func.func @transform_13(%arg0: i32) -> (i32, i32, i32) {
    %c0_i32 = arith.constant 0 : i32
    %c0_i32_0 = arith.constant 0 : i32
    %c0_i32_1 = arith.constant 0 : i32
    %c0_i32_2 = arith.constant 0 : i32
    return %c0_i32, %c0_i32_0, %c0_i32_1 : i32, i32, i32
  }
  func.func @transform_14(%arg0: i32) -> (i32, i32, i32) {
    %c0_i32 = arith.constant 0 : i32
    %c0_i32_0 = arith.constant 0 : i32
    %c0_i32_1 = arith.constant 0 : i32
    %c0_i32_2 = arith.constant 0 : i32
    return %c0_i32, %c0_i32_0, %c0_i32_1 : i32, i32, i32
  }
  func.func @transform_15(%arg0: i32) -> (i32, i32, i32) {
    %c0_i32 = arith.constant 0 : i32
    %c0_i32_0 = arith.constant 0 : i32
    %c0_i32_1 = arith.constant 0 : i32
    %c0_i32_2 = arith.constant 0 : i32
    return %c0_i32, %c0_i32_0, %c0_i32_1 : i32, i32, i32
  }
  func.func @transform_16(%arg0: i32) -> (i32, i32, i32) {
    %c0_i32 = arith.constant 0 : i32
    %c0_i32_0 = arith.constant 0 : i32
    %c0_i32_1 = arith.constant 0 : i32
    %c0_i32_2 = arith.constant 0 : i32
    return %c0_i32, %c0_i32_0, %c0_i32_1 : i32, i32, i32
  }
  func.func @transform_17(%arg0: i32) -> (i32, i32, i32) {
    %c0_i32 = arith.constant 0 : i32
    %c0_i32_0 = arith.constant 0 : i32
    %c0_i32_1 = arith.constant 0 : i32
    %c0_i32_2 = arith.constant 0 : i32
    return %c0_i32, %c0_i32_0, %c0_i32_1 : i32, i32, i32
  }
  func.func @transform_18(%arg0: i32) -> (i32, i32, i32) {
    %c0_i32 = arith.constant 0 : i32
    %c0_i32_0 = arith.constant 0 : i32
    %c0_i32_1 = arith.constant 0 : i32
    %c0_i32_2 = arith.constant 0 : i32
    return %c0_i32, %c0_i32_0, %c0_i32_1 : i32, i32, i32
  }
  func.func @transform_19(%arg0: i32) -> (i32, i32, i32) {
    %c0_i32 = arith.constant 0 : i32
    %c0_i32_0 = arith.constant 0 : i32
    %c0_i32_1 = arith.constant 0 : i32
    return %arg0, %c0_i32, %c0_i32_0 : i32, i32, i32
  }
}

</mosaic_0001>

<llo_original>
// kernel: _lambda_.3
$region0: #{_lambda_.3}
  #allocation0 [shape = 'u32[]', space=smem, size = 0x4, offset = 0x4, fixed_abs, tag = 'smem constant byte address 0x4 - core index']
  #allocation1 [shape = 'u32[144,128]{1,0:T(1,128)}', space=vmem, size = 0x12000, scoped, tag = 'internal scratch']
  %s0 = inlined_call_operand.vmem [shape: f32[2,64], index: 0, kind: input, shape index: {}]
  %s1 = inlined_call_operand.vmem [shape: f32[64,32], index: 1, kind: input, shape index: {}]
  %s2 = inlined_call_operand.vmem [shape: f32[1,32], index: 2, kind: input, shape index: {}]
  %s3 = inlined_call_operand.vmem [shape: f32[32,2], index: 3, kind: input, shape index: {}]
  %s4 = inlined_call_operand.vmem [shape: f32[1,2], index: 4, kind: input, shape index: {}]
  %s5 = inlined_call_operand.hbm [shape: f32[2,2], index: 5, kind: output, shape index: {0}]
  %s6 = inlined_call_operand.hbm [shape: f32[2,2], index: 6, kind: output, shape index: {1}]
  %7 = xla_tuple %s5, %s6
  %s8 = sld [smem:[#allocation0]]
  $region38: #{_lambda_.3} parent=0
    _
  %s10 = ssub.s32 1, %s8
  %s11 = scalar_select 0, %s10, %s8
  $region1: #{_lambda_.3} parent=0
    #allocation2 [shape = 'u8[1024]{0}', space=vmem, size = 0x400, scoped, tag = 'output window, operand 0, single buffered']
    #allocation3 [shape = 's32[1]{0}', space=sflag, size = 0x4, scoped, tag = 'scoped memory for _lambda_.3']
    #allocation4 [shape = 'u8[1024]{0}', space=vmem, size = 0x400, scoped, tag = 'output window, operand 1, single buffered']
    #allocation5 [shape = 's32[1]{0}', space=sflag, size = 0x4, scoped, tag = 'scoped memory for _lambda_.3']
    %12 = vsyncpa [#allocation3], 0
    %13 = vsyncpa [#allocation5], 0
    // Predicated region
    $region2: #{_lambda_.3} parent=1 // pred_check
      _
    $region3: #{_lambda_.3} parent=1 // pred_check_branch
      %15 = sbr.rel (0) target = $region5
    $region4: #{_lambda_.3} parent=1 // pred_region
      _
    $region5: #{_lambda_.3} parent=1 // pred_fallthru
      _
    // Predicated region
    $region6: #{_lambda_.3} parent=1 // pred_check
      _
    $region7: #{_lambda_.3} parent=1 // pred_check_branch
      %17 = sbr.rel (0) target = $region9
    $region8: #{_lambda_.3} parent=1 // pred_region
      _
    $region9: #{_lambda_.3} parent=1 // pred_fallthru
      _
    // Predicated region
    $region10: #{_lambda_.3} parent=1 // pred_check
      _
    $region11: #{_lambda_.3} parent=1 // pred_check_branch
      %19 = sbr.rel (0) target = $region13
    $region12: #{_lambda_.3} parent=1 // pred_region
      _
    $region13: #{_lambda_.3} parent=1 // pred_fallthru
      _
    // Predicated region
    $region14: #{_lambda_.3} parent=1 // pred_check
      _
    $region15: #{_lambda_.3} parent=1 // pred_check_branch
      %21 = sbr.rel (0) target = $region17
    $region16: #{_lambda_.3} parent=1 // pred_region
      _
    $region17: #{_lambda_.3} parent=1 // pred_fallthru
      _
    // Predicated region
    $region18: #{_lambda_.3} parent=1 // pred_check
      _
    $region19: #{_lambda_.3} parent=1 // pred_check_branch
      %23 = sbr.rel (0) target = $region21
    $region20: #{_lambda_.3} parent=1 // pred_region
      _
    $region21: #{_lambda_.3} parent=1 // pred_fallthru
      _
    %v24 = vld [vmem:[%s0] sm:$0x3]
    %v25 = vld [vmem:[%s1] sm:$0xff]
    %v26 = vld [vmem:[%s1 + $0x8] sm:$0xff]
    %v27 = vld [vmem:[%s1 + $0x10] sm:$0xff]
    %v28 = vld [vmem:[%s1 + $0x18] sm:$0xff]
    %v29 = vld [vmem:[%s1 + $0x20] sm:$0xff]
    %v30 = vld [vmem:[%s1 + $0x28] sm:$0xff]
    %v31 = vld [vmem:[%s1 + $0x30] sm:$0xff]
    %v32 = vld [vmem:[%s1 + $0x38] sm:$0xff]
    %v33 = vld [vmem:[%s2] sm:$0x1]
    %v35 = vlaneseq
    %v36 = vshrl.u32 %v35, 7
    %v37 = vsub.s32 0, %v36
    %v38 = vrot.slane %v33, %v37
    %vm40 = vcmask 523264
    %v42 = vsel %vm40, %v24, 0
    %44 = vmatprep.subr.mxu0 0.0
    %45 = vmatpush1.msra.mxu0 %v25
    %46 = vmatprep.subr.mxu0 0.0
    %47 = vmatpush1.msra.mxu0 %v26
    %48 = vmatprep.subr.mxu0 0.0
    %49 = vmatpush1.msra.mxu0 %v27
    %50 = vmatprep.subr.mxu0 0.0
    %51 = vmatpush1.msra.mxu0 %v28
    %52 = vmatprep.subr.mxu0 0.0
    %53 = vmatpush1.msra.mxu0 %v29
    %54 = vmatprep.subr.mxu0 0.0
    %55 = vmatpush1.msra.mxu0 %v30
    %56 = vmatprep.subr.mxu0 0.0
    %57 = vmatpush1.msra.mxu0 %v31
    %58 = vmatprep.subr.mxu0 0.0
    %59 = vmatpush1.msra.mxu0 %v32
    %60 = vmatprep.subr.mxu0 0.0
    %61 = vmatpush1.msra.mxu0 0.0
    %62 = vmatprep.subr.mxu0 0.0
    %63 = vmatpush1.msra.mxu0 0.0
    %64 = vmatprep.subr.mxu0 0.0
    %65 = vmatpush1.msra.mxu0 0.0
    %66 = vmatprep.subr.mxu0 0.0
    %67 = vmatpush1.msra.mxu0 0.0
    %68 = vmatprep.subr.mxu0 0.0
    %69 = vmatpush1.msra.mxu0 0.0
    %70 = vmatprep.subr.mxu0 0.0
    %71 = vmatpush1.msra.mxu0 0.0
    %72 = vmatprep.subr.mxu0 0.0
    %73 = vmatpush1.msra.mxu0 0.0
    %74 = vmatprep.subr.mxu0 0.0
    %75 = vmatpush1.msra.mxu0 0.0
    %76 = vmatprep.subr.mxu0 0.0
    %77 = vmatpush1.msra.mxu0 0.0
    %78 = vmatprep.subr.mxu0 0.0
    %79 = vmatpush1.msra.mxu0 0.0
    %80 = vmatprep.subr.mxu0 0.0
    %81 = vmatpush1.msra.mxu0 0.0
    %82 = vmatprep.subr.mxu0 0.0
    %83 = vmatpush1.msra.mxu0 0.0
    %84 = vmatprep.subr.mxu0 0.0
    %85 = vmatpush1.msra.mxu0 0.0
    %86 = vmatprep.subr.mxu0 0.0
    %87 = vmatpush1.msra.mxu0 0.0
    %88 = vmatprep.subr.mxu0 0.0
    %89 = vmatpush1.msra.mxu0 0.0
    %90 = vmatprep.subr.mxu0 0.0
    %91 = vmatpush1.msra.mxu0 0.0
    %92 = vmatprep.subr.mxu0 0.0
    %93 = vmatpush1.msra.mxu0 0.0
    %94 = vmatprep.subr.mxu0 0.0
    %95 = vmatpush1.msra.mxu0 0.0
    %96 = vmatprep.subr.mxu0 0.0
    %97 = vmatpush1.msra.mxu0 0.0
    %98 = vmatprep.subr.mxu0 0.0
    %99 = vmatpush1.msra.mxu0 0.0
    %100 = vmatprep.subr.mxu0 0.0
    %101 = vmatpush1.msra.mxu0 0.0
    %102 = vmatprep.subr.mxu0 0.0
    %103 = vmatpush1.msra.mxu0 0.0
    %104 = vmatprep.subr.mxu0 0.0
    %105 = vmatpush1.msra.mxu0 0.0
    %106 = vmatprep.subr.mxu0 0.0
    %107 = vmatpush1.msra.mxu0 0.0
    %108 = vmatprep.mubr.f32.mxu0 0.0
    %109 = vmatmul.mubr.f32.gmra.mrb[0].mxu0 %v42
    %v110 = vpop.f32.mrb[0].mxu0
    %v111 = vadd.f32 %v38, %v110
    %v112 = vpop.f32.mrb[0].mxu0
    %113 = vdwg.mxu0
    %v114 = vtanh.pop %v111
    %v115 = vld [vmem:[%s3] sm:$0xff]
    %v116 = vld [vmem:[%s3 + $0x8] sm:$0xff]
    %v117 = vld [vmem:[%s3 + $0x10] sm:$0xff]
    %v118 = vld [vmem:[%s3 + $0x18] sm:$0xff]
    %v119 = vld [vmem:[%s4] sm:$0x1]
    %v121 = vlaneseq
    %v122 = vshrl.u32 %v121, 7
    %v123 = vsub.s32 0, %v122
    %v124 = vrot.slane %v119, %v123
    %vm126 = vcmask 261120
    %v128 = vsel %vm126, %v114, 0
    %130 = vmatprep.subr.mxu0 0.0
    %131 = vmatpush1.msra.mxu0 %v115
    %132 = vmatprep.subr.mxu0 0.0
    %133 = vmatpush1.msra.mxu0 %v116
    %134 = vmatprep.subr.mxu0 0.0
    %135 = vmatpush1.msra.mxu0 %v117
    %136 = vmatprep.subr.mxu0 0.0
    %137 = vmatpush1.msra.mxu0 %v118
    %138 = vmatprep.subr.mxu0 0.0
    %139 = vmatpush1.msra.mxu0 0.0
    %140 = vmatprep.subr.mxu0 0.0
    %141 = vmatpush1.msra.mxu0 0.0
    %142 = vmatprep.subr.mxu0 0.0
    %143 = vmatpush1.msra.mxu0 0.0
    %144 = vmatprep.subr.mxu0 0.0
    %145 = vmatpush1.msra.mxu0 0.0
    %146 = vmatprep.subr.mxu0 0.0
    %147 = vmatpush1.msra.mxu0 0.0
    %148 = vmatprep.subr.mxu0 0.0
    %149 = vmatpush1.msra.mxu0 0.0
    %150 = vmatprep.subr.mxu0 0.0
    %151 = vmatpush1.msra.mxu0 0.0
    %152 = vmatprep.subr.mxu0 0.0
    %153 = vmatpush1.msra.mxu0 0.0
    %154 = vmatprep.subr.mxu0 0.0
    %155 = vmatpush1.msra.mxu0 0.0
    %156 = vmatprep.subr.mxu0 0.0
    %157 = vmatpush1.msra.mxu0 0.0
    %158 = vmatprep.subr.mxu0 0.0
    %159 = vmatpush1.msra.mxu0 0.0
    %160 = vmatprep.subr.mxu0 0.0
    %161 = vmatpush1.msra.mxu0 0.0
    %162 = vmatprep.subr.mxu0 0.0
    %163 = vmatpush1.msra.mxu0 0.0
    %164 = vmatprep.subr.mxu0 0.0
    %165 = vmatpush1.msra.mxu0 0.0
    %166 = vmatprep.subr.mxu0 0.0
    %167 = vmatpush1.msra.mxu0 0.0
    %168 = vmatprep.subr.mxu0 0.0
    %169 = vmatpush1.msra.mxu0 0.0
    %170 = vmatprep.subr.mxu0 0.0
    %171 = vmatpush1.msra.mxu0 0.0
    %172 = vmatprep.subr.mxu0 0.0
    %173 = vmatpush1.msra.mxu0 0.0
    %174 = vmatprep.subr.mxu0 0.0
    %175 = vmatpush1.msra.mxu0 0.0
    %176 = vmatprep.subr.mxu0 0.0
    %177 = vmatpush1.msra.mxu0 0.0
    %178 = vmatprep.subr.mxu0 0.0
    %179 = vmatpush1.msra.mxu0 0.0
    %180 = vmatprep.subr.mxu0 0.0
    %181 = vmatpush1.msra.mxu0 0.0
    %182 = vmatprep.subr.mxu0 0.0
    %183 = vmatpush1.msra.mxu0 0.0
    %184 = vmatprep.subr.mxu0 0.0
    %185 = vmatpush1.msra.mxu0 0.0
    %186 = vmatprep.subr.mxu0 0.0
    %187 = vmatpush1.msra.mxu0 0.0
    %188 = vmatprep.subr.mxu0 0.0
    %189 = vmatpush1.msra.mxu0 0.0
    %190 = vmatprep.subr.mxu0 0.0
    %191 = vmatpush1.msra.mxu0 0.0
    %192 = vmatprep.subr.mxu0 0.0
    %193 = vmatpush1.msra.mxu0 0.0
    %194 = vmatprep.mubr.f32.mxu0 0.0
    %195 = vmatmul.mubr.f32.gmra.mrb[0].mxu0 %v128
    %v196 = vpop.f32.mrb[0].mxu0
    %v197 = vadd.f32 %v124, %v196
    %v198 = vpop.f32.mrb[0].mxu0
    %199 = vdwg.mxu0
    %vm200 = vcmask 9216
    %201 = vst.msk [vmem:[#allocation2] sm:$0x3] %vm200, %v197
    %v202 = vsel %vm200, %v197, -inf
    %203 = vmax.xlane.f32.xlu0 %v202
    %v204 = vpop.xlane.xlu0 %203
    %v205 = vsub.f32 %v197, %v204
    %v206 = vmul.f32 %v205, 1.442695
    %v207 = vpow.pop %v206
    %v208 = vsel %vm200, %v207, 0.0
    %209 = vadd.xlane.f32.xlu0 %v208
    %v210 = vpop.xlane.xlu0 %209
    %v211 = vrcp.pop %v210
    %v212 = vmul.f32 %v207, %v211
    %213 = vst.msk [vmem:[#allocation4] sm:$0x3] %vm200, %v212
    // Predicated region
    $region22: #{_lambda_.3} parent=1 // pred_check
      _
    $region23: #{_lambda_.3} parent=1 // pred_check_branch
      %215 = sbr.rel (0) target = $region25
    $region24: #{_lambda_.3} parent=1 // pred_region
      %s217 = ssub.s32 32, 32
      %218 = vsyncadd [#allocation3], %s217
      %s220 = sshll.u32 [#allocation2], 4
      %s221 = int_to_ptr.vmem [resolvable:$true] %s220
      %223 = dma.vmem_to_hbm [thread:$0]  %s221, 32, %s5, [#allocation3]
    $region25: #{_lambda_.3} parent=1 // pred_fallthru
      _
    // Predicated region
    $region26: #{_lambda_.3} parent=1 // pred_check
      _
    $region27: #{_lambda_.3} parent=1 // pred_check_branch
      %225 = sbr.rel (0) target = $region29
    $region28: #{_lambda_.3} parent=1 // pred_region
      %s227 = ssub.s32 32, 32
      %228 = vsyncadd [#allocation5], %s227
      %s230 = sshll.u32 [#allocation4], 4
      %s231 = int_to_ptr.vmem [resolvable:$true] %s230
      %233 = dma.vmem_to_hbm [thread:$0]  %s231, 32, %s6, [#allocation5]
    $region29: #{_lambda_.3} parent=1 // pred_fallthru
      _
    // Predicated region
    $region30: #{_lambda_.3} parent=1 // pred_check
      _
    $region31: #{_lambda_.3} parent=1 // pred_check_branch
      %235 = sbr.rel (0) target = $region33
    $region32: #{_lambda_.3} parent=1 // pred_region
      %236 = dma.done [#allocation3], 32
    $region33: #{_lambda_.3} parent=1 // pred_fallthru
      _
    // Predicated region
    $region34: #{_lambda_.3} parent=1 // pred_check
      _
    $region35: #{_lambda_.3} parent=1 // pred_check_branch
      %238 = sbr.rel (0) target = $region37
    $region36: #{_lambda_.3} parent=1 // pred_region
      %239 = dma.done [#allocation5], 32
    $region37: #{_lambda_.3} parent=1 // pred_fallthru
      _
    %240 = vsyncpa [#allocation3], 1
    %241 = vsyncpa [#allocation5], 1

// kernel: _lambda_.2
$region0: #{_lambda_.2}
  #allocation0 [shape = 'u32[]', space=smem, size = 0x4, offset = 0x4, fixed_abs, tag = 'smem constant byte address 0x4 - core index']
  #allocation1 [shape = 'u32[144,128]{1,0:T(1,128)}', space=vmem, size = 0x12000, scoped, tag = 'internal scratch']
  %s0 = inlined_call_operand.vmem [shape: f32[4,8,1], index: 0, kind: input, shape index: {}]
  %s1 = inlined_call_operand.vmem [shape: f32[4,1,8], index: 1, kind: input, shape index: {}]
  %s2 = inlined_call_operand.vmem [shape: f32[4,8,8], index: 2, kind: input, shape index: {}]
  %s3 = inlined_call_operand.vmem [shape: f32[4,8,32], index: 3, kind: input, shape index: {}]
  %s4 = inlined_call_operand.vmem [shape: f32[4,8,32], index: 4, kind: input, shape index: {}]
  %s5 = inlined_call_operand.vmem [shape: f32[1,32], index: 5, kind: input, shape index: {}]
  %s6 = inlined_call_operand.vmem [shape: f32[1,32], index: 6, kind: input, shape index: {}]
  %s7 = inlined_call_operand.vmem [shape: f32[2,32,96], index: 7, kind: input, shape index: {}]
  %s8 = inlined_call_operand.vmem [shape: f32[2,1,96], index: 8, kind: input, shape index: {}]
  %s9 = inlined_call_operand.vmem [shape: f32[2,32,32], index: 9, kind: input, shape index: {}]
  %s10 = inlined_call_operand.vmem [shape: f32[2,1,32], index: 10, kind: input, shape index: {}]
  %s11 = inlined_call_operand.vmem [shape: f32[2,1,32], index: 11, kind: input, shape index: {}]
  %s12 = inlined_call_operand.vmem [shape: f32[2,1,32], index: 12, kind: input, shape index: {}]
  %s13 = inlined_call_operand.vmem [shape: f32[2,32,64], index: 13, kind: input, shape index: {}]
  %s14 = inlined_call_operand.vmem [shape: f32[2,1,64], index: 14, kind: input, shape index: {}]
  %s15 = inlined_call_operand.vmem [shape: f32[2,64,32], index: 15, kind: input, shape index: {}]
  %s16 = inlined_call_operand.vmem [shape: f32[2,1,32], index: 16, kind: input, shape index: {}]
  %s17 = inlined_call_operand.vmem [shape: f32[2,1,32], index: 17, kind: input, shape index: {}]
  %s18 = inlined_call_operand.vmem [shape: f32[2,1,32], index: 18, kind: input, shape index: {}]
  %s19 = inlined_call_operand.vmem [shape: f32[4,1,32], index: 19, kind: output, shape index: {}]
  %s20 = sld [smem:[#allocation0]]
  $region109: #{_lambda_.2} parent=0
    _
  %s22 = ssub.s32 1, %s20
  %s23 = scalar_select 0, %s22, %s20
  loop: start=0, step=1, limit=6
  $region2: #{_lambda_.2} parent=0 // loop_pre_header
    _
  $region3: #{_lambda_.2} parent=0 // loop_header
    %s25 = sphi 0, %s29
    %p26 = scmp.ge.s32.totalorder %s25, 6
    %s35 = sphi 0, %s37
    %s38 = sphi 0, %s35
    %s39 = sphi 0, %s38
    %s55 = sphi 0, %s39
    %s61 = sphi 0, %s63
    %s64 = sphi 0, %s61
    %s65 = sphi 0, %s64
    %s81 = sphi 0, %s65
    %s87 = sphi 0, %s89
    %s90 = sphi 0, %s87
    %s91 = sphi 0, %s90
    %s107 = sphi 0, %s91
    %s113 = sphi 0, %s115
    %s116 = sphi 0, %s113
    %s117 = sphi 0, %s116
    %s133 = sphi 0, %s117
    %s139 = sphi 0, %s141
    %s142 = sphi 0, %s139
    %s143 = sphi 0, %s142
    %s159 = sphi 0, %s143
    %s163 = sphi 0, %s163
    %s165 = sphi 0, %s163
    %s166 = sphi 0, %s165
    %s180 = sphi 0, %s166
    %s184 = sphi 0, %s184
    %s186 = sphi 0, %s184
    %s187 = sphi 0, %s186
    %s201 = sphi 0, %s187
    %s205 = sphi 0, %s205
    %s207 = sphi 0, %s205
    %s208 = sphi 0, %s207
    %s222 = sphi 0, %s208
    %s226 = sphi 0, %s226
    %s228 = sphi 0, %s226
    %s229 = sphi 0, %s228
    %s243 = sphi 0, %s229
    %s247 = sphi 0, %s247
    %s249 = sphi 0, %s247
    %s250 = sphi 0, %s249
    %s264 = sphi 0, %s250
    %s268 = sphi 0, %s268
    %s270 = sphi 0, %s268
    %s271 = sphi 0, %s270
    %s285 = sphi 0, %s271
    %s289 = sphi 0, %s289
    %s291 = sphi 0, %s289
    %s292 = sphi 0, %s291
    %s306 = sphi 0, %s292
    %s310 = sphi 0, %s310
    %s312 = sphi 0, %s310
    %s313 = sphi 0, %s312
    %s327 = sphi 0, %s313
    %s331 = sphi 0, %s331
    %s333 = sphi 0, %s331
    %s334 = sphi 0, %s333
    %s348 = sphi 0, %s334
    %s352 = sphi 0, %s352
    %s354 = sphi 0, %s352
    %s355 = sphi 0, %s354
    %s369 = sphi 0, %s355
    %s373 = sphi 0, %s373
    %s375 = sphi 0, %s373
    %s376 = sphi 0, %s375
    %s390 = sphi 0, %s376
    %s394 = sphi 0, %s394
    %s396 = sphi 0, %s394
    %s397 = sphi 0, %s396
    %s411 = sphi 0, %s397
    %s415 = sphi 0, %s415
    %s417 = sphi 0, %s415
    %s418 = sphi 0, %s417
    %s432 = sphi 0, %s418
    %s436 = sphi 0, %s436
    %s438 = sphi 0, %s436
    %s439 = sphi 0, %s438
    %s453 = sphi 0, %s439
    %s459 = sphi 0, %s461
    %s462 = sphi 0, %s459
    %s463 = sphi 0, %s462
    %s479 = sphi 0, %s463
  $region4: #{_lambda_.2} parent=0 // loop_header_branch
    %28 = sbr.rel (%p26) target = $region8
  $region5: #{_lambda_.2} parent=0 // loop_body
    %s30 = ssub.s32 %s25, 1
    %s31 = ssub.s32 %s25, 2
    %s32 = sadd.s32 %s25, 1
    %s33 = ssub.s32 %s25, %s32
    %p34 = scmp.eq.s32.totalorder %s33, 0
    %s36 = sadd.s32 %s35, 1
    %s37 = scalar_select %p34, %s35, %s36
    %p40 = pneg %p34
    %p41 = scmp.eq.s32.totalorder %s25, 3
    %p42 = por %p40, %p41
    %p43 = scmp.ne.s32.totalorder %s35, %s38
    %p44 = scmp.eq.s32.totalorder %s25, 0
    %p45 = por %p43, %p44
    %p46 = scmp.ne.s32.totalorder %s35, %s38
    %p47 = scmp.eq.s32.totalorder %s30, 3
    %p48 = por %p46, %p47
    %p49 = scmp.ne.s32.totalorder %s38, %s39
    %p50 = scmp.eq.s32.totalorder %s30, 0
    %p51 = por %p49, %p50
    %p52 = scmp.ne.s32.totalorder %s38, %s39
    %p53 = scmp.eq.s32.totalorder %s31, 3
    %p54 = por %p52, %p53
    %p56 = scmp.ne.s32.totalorder %s39, %s55
    %p57 = scmp.eq.s32.totalorder %s31, 0
    %p58 = por %p56, %p57
    %s59 = ssub.s32 %s25, %s32
    %p60 = scmp.eq.s32.totalorder %s59, 0
    %s62 = sadd.s32 %s61, 1
    %s63 = scalar_select %p60, %s61, %s62
    %p66 = pneg %p60
    %p67 = scmp.eq.s32.totalorder %s25, 3
    %p68 = por %p66, %p67
    %p69 = scmp.ne.s32.totalorder %s61, %s64
    %p70 = scmp.eq.s32.totalorder %s25, 0
    %p71 = por %p69, %p70
    %p72 = scmp.ne.s32.totalorder %s61, %s64
    %p73 = scmp.eq.s32.totalorder %s30, 3
    %p74 = por %p72, %p73
    %p75 = scmp.ne.s32.totalorder %s64, %s65
    %p76 = scmp.eq.s32.totalorder %s30, 0
    %p77 = por %p75, %p76
    %p78 = scmp.ne.s32.totalorder %s64, %s65
    %p79 = scmp.eq.s32.totalorder %s31, 3
    %p80 = por %p78, %p79
    %p82 = scmp.ne.s32.totalorder %s65, %s81
    %p83 = scmp.eq.s32.totalorder %s31, 0
    %p84 = por %p82, %p83
    %s85 = ssub.s32 %s25, %s32
    %p86 = scmp.eq.s32.totalorder %s85, 0
    %s88 = sadd.s32 %s87, 1
    %s89 = scalar_select %p86, %s87, %s88
    %p92 = pneg %p86
    %p93 = scmp.eq.s32.totalorder %s25, 3
    %p94 = por %p92, %p93
    %p95 = scmp.ne.s32.totalorder %s87, %s90
    %p96 = scmp.eq.s32.totalorder %s25, 0
    %p97 = por %p95, %p96
    %p98 = scmp.ne.s32.totalorder %s87, %s90
    %p99 = scmp.eq.s32.totalorder %s30, 3
    %p100 = por %p98, %p99
    %p101 = scmp.ne.s32.totalorder %s90, %s91
    %p102 = scmp.eq.s32.totalorder %s30, 0
    %p103 = por %p101, %p102
    %p104 = scmp.ne.s32.totalorder %s90, %s91
    %p105 = scmp.eq.s32.totalorder %s31, 3
    %p106 = por %p104, %p105
    %p108 = scmp.ne.s32.totalorder %s91, %s107
    %p109 = scmp.eq.s32.totalorder %s31, 0
    %p110 = por %p108, %p109
    %s111 = ssub.s32 %s25, %s32
    %p112 = scmp.eq.s32.totalorder %s111, 0
    %s114 = sadd.s32 %s113, 1
    %s115 = scalar_select %p112, %s113, %s114
    %p118 = pneg %p112
    %p119 = scmp.eq.s32.totalorder %s25, 3
    %p120 = por %p118, %p119
    %p121 = scmp.ne.s32.totalorder %s113, %s116
    %p122 = scmp.eq.s32.totalorder %s25, 0
    %p123 = por %p121, %p122
    %p124 = scmp.ne.s32.totalorder %s113, %s116
    %p125 = scmp.eq.s32.totalorder %s30, 3
    %p126 = por %p124, %p125
    %p127 = scmp.ne.s32.totalorder %s116, %s117
    %p128 = scmp.eq.s32.totalorder %s30, 0
    %p129 = por %p127, %p128
    %p130 = scmp.ne.s32.totalorder %s116, %s117
    %p131 = scmp.eq.s32.totalorder %s31, 3
    %p132 = por %p130, %p131
    %p134 = scmp.ne.s32.totalorder %s117, %s133
    %p135 = scmp.eq.s32.totalorder %s31, 0
    %p136 = por %p134, %p135
    %s137 = ssub.s32 %s25, %s32
    %p138 = scmp.eq.s32.totalorder %s137, 0
    %s140 = sadd.s32 %s139, 1
    %s141 = scalar_select %p138, %s139, %s140
    %p144 = pneg %p138
    %p145 = scmp.eq.s32.totalorder %s25, 3
    %p146 = por %p144, %p145
    %p147 = scmp.ne.s32.totalorder %s139, %s142
    %p148 = scmp.eq.s32.totalorder %s25, 0
    %p149 = por %p147, %p148
    %p150 = scmp.ne.s32.totalorder %s139, %s142
    %p151 = scmp.eq.s32.totalorder %s30, 3
    %p152 = por %p150, %p151
    %p153 = scmp.ne.s32.totalorder %s142, %s143
    %p154 = scmp.eq.s32.totalorder %s30, 0
    %p155 = por %p153, %p154
    %p156 = scmp.ne.s32.totalorder %s142, %s143
    %p157 = scmp.eq.s32.totalorder %s31, 3
    %p158 = por %p156, %p157
    %p160 = scmp.ne.s32.totalorder %s143, %s159
    %p161 = scmp.eq.s32.totalorder %s31, 0
    %p162 = por %p160, %p161
    %s164 = sadd.s32 %s163, 1
    %p167 = scmp.eq.s32.totalorder %s25, 3
    %p168 = scmp.ne.s32.totalorder %s163, %s165
    %p169 = scmp.eq.s32.totalorder %s25, 0
    %p170 = por %p168, %p169
    %p171 = scmp.ne.s32.totalorder %s163, %s165
    %p172 = scmp.eq.s32.totalorder %s30, 3
    %p173 = por %p171, %p172
    %p174 = scmp.ne.s32.totalorder %s165, %s166
    %p175 = scmp.eq.s32.totalorder %s30, 0
    %p176 = por %p174, %p175
    %p177 = scmp.ne.s32.totalorder %s165, %s166
    %p178 = scmp.eq.s32.totalorder %s31, 3
    %p179 = por %p177, %p178
    %p181 = scmp.ne.s32.totalorder %s166, %s180
    %p182 = scmp.eq.s32.totalorder %s31, 0
    %p183 = por %p181, %p182
    %s185 = sadd.s32 %s184, 1
    %p188 = scmp.eq.s32.totalorder %s25, 3
    %p189 = scmp.ne.s32.totalorder %s184, %s186
    %p190 = scmp.eq.s32.totalorder %s25, 0
    %p191 = por %p189, %p190
    %p192 = scmp.ne.s32.totalorder %s184, %s186
    %p193 = scmp.eq.s32.totalorder %s30, 3
    %p194 = por %p192, %p193
    %p195 = scmp.ne.s32.totalorder %s186, %s187
    %p196 = scmp.eq.s32.totalorder %s30, 0
    %p197 = por %p195, %p196
    %p198 = scmp.ne.s32.totalorder %s186, %s187
    %p199 = scmp.eq.s32.totalorder %s31, 3
    %p200 = por %p198, %p199
    %p202 = scmp.ne.s32.totalorder %s187, %s201
    %p203 = scmp.eq.s32.totalorder %s31, 0
    %p204 = por %p202, %p203
    %s206 = sadd.s32 %s205, 1
    %p209 = scmp.eq.s32.totalorder %s25, 3
    %p210 = scmp.ne.s32.totalorder %s205, %s207
    %p211 = scmp.eq.s32.totalorder %s25, 0
    %p212 = por %p210, %p211
    %p213 = scmp.ne.s32.totalorder %s205, %s207
    %p214 = scmp.eq.s32.totalorder %s30, 3
    %p215 = por %p213, %p214
    %p216 = scmp.ne.s32.totalorder %s207, %s208
    %p217 = scmp.eq.s32.totalorder %s30, 0
    %p218 = por %p216, %p217
    %p219 = scmp.ne.s32.totalorder %s207, %s208
    %p220 = scmp.eq.s32.totalorder %s31, 3
    %p221 = por %p219, %p220
    %p223 = scmp.ne.s32.totalorder %s208, %s222
    %p224 = scmp.eq.s32.totalorder %s31, 0
    %p225 = por %p223, %p224
    %s227 = sadd.s32 %s226, 1
    %p230 = scmp.eq.s32.totalorder %s25, 3
    %p231 = scmp.ne.s32.totalorder %s226, %s228
    %p232 = scmp.eq.s32.totalorder %s25, 0
    %p233 = por %p231, %p232
    %p234 = scmp.ne.s32.totalorder %s226, %s228
    %p235 = scmp.eq.s32.totalorder %s30, 3
    %p236 = por %p234, %p235
    %p237 = scmp.ne.s32.totalorder %s228, %s229
    %p238 = scmp.eq.s32.totalorder %s30, 0
    %p239 = por %p237, %p238
    %p240 = scmp.ne.s32.totalorder %s228, %s229
    %p241 = scmp.eq.s32.totalorder %s31, 3
    %p242 = por %p240, %p241
    %p244 = scmp.ne.s32.totalorder %s229, %s243
    %p245 = scmp.eq.s32.totalorder %s31, 0
    %p246 = por %p244, %p245
    %s248 = sadd.s32 %s247, 1
    %p251 = scmp.eq.s32.totalorder %s25, 3
    %p252 = scmp.ne.s32.totalorder %s247, %s249
    %p253 = scmp.eq.s32.totalorder %s25, 0
    %p254 = por %p252, %p253
    %p255 = scmp.ne.s32.totalorder %s247, %s249
    %p256 = scmp.eq.s32.totalorder %s30, 3
    %p257 = por %p255, %p256
    %p258 = scmp.ne.s32.totalorder %s249, %s250
    %p259 = scmp.eq.s32.totalorder %s30, 0
    %p260 = por %p258, %p259
    %p261 = scmp.ne.s32.totalorder %s249, %s250
    %p262 = scmp.eq.s32.totalorder %s31, 3
    %p263 = por %p261, %p262
    %p265 = scmp.ne.s32.totalorder %s250, %s264
    %p266 = scmp.eq.s32.totalorder %s31, 0
    %p267 = por %p265, %p266
    %s269 = sadd.s32 %s268, 1
    %p272 = scmp.eq.s32.totalorder %s25, 3
    %p273 = scmp.ne.s32.totalorder %s268, %s270
    %p274 = scmp.eq.s32.totalorder %s25, 0
    %p275 = por %p273, %p274
    %p276 = scmp.ne.s32.totalorder %s268, %s270
    %p277 = scmp.eq.s32.totalorder %s30, 3
    %p278 = por %p276, %p277
    %p279 = scmp.ne.s32.totalorder %s270, %s271
    %p280 = scmp.eq.s32.totalorder %s30, 0
    %p281 = por %p279, %p280
    %p282 = scmp.ne.s32.totalorder %s270, %s271
    %p283 = scmp.eq.s32.totalorder %s31, 3
    %p284 = por %p282, %p283
    %p286 = scmp.ne.s32.totalorder %s271, %s285
    %p287 = scmp.eq.s32.totalorder %s31, 0
    %p288 = por %p286, %p287
    %s290 = sadd.s32 %s289, 1
    %p293 = scmp.eq.s32.totalorder %s25, 3
    %p294 = scmp.ne.s32.totalorder %s289, %s291
    %p295 = scmp.eq.s32.totalorder %s25, 0
    %p296 = por %p294, %p295
    %p297 = scmp.ne.s32.totalorder %s289, %s291
    %p298 = scmp.eq.s32.totalorder %s30, 3
    %p299 = por %p297, %p298
    %p300 = scmp.ne.s32.totalorder %s291, %s292
    %p301 = scmp.eq.s32.totalorder %s30, 0
    %p302 = por %p300, %p301
    %p303 = scmp.ne.s32.totalorder %s291, %s292
    %p304 = scmp.eq.s32.totalorder %s31, 3
    %p305 = por %p303, %p304
    %p307 = scmp.ne.s32.totalorder %s292, %s306
    %p308 = scmp.eq.s32.totalorder %s31, 0
    %p309 = por %p307, %p308
    %s311 = sadd.s32 %s310, 1
    %p314 = scmp.eq.s32.totalorder %s25, 3
    %p315 = scmp.ne.s32.totalorder %s310, %s312
    %p316 = scmp.eq.s32.totalorder %s25, 0
    %p317 = por %p315, %p316
    %p318 = scmp.ne.s32.totalorder %s310, %s312
    %p319 = scmp.eq.s32.totalorder %s30, 3
    %p320 = por %p318, %p319
    %p321 = scmp.ne.s32.totalorder %s312, %s313
    %p322 = scmp.eq.s32.totalorder %s30, 0
    %p323 = por %p321, %p322
    %p324 = scmp.ne.s32.totalorder %s312, %s313
    %p325 = scmp.eq.s32.totalorder %s31, 3
    %p326 = por %p324, %p325
    %p328 = scmp.ne.s32.totalorder %s313, %s327
    %p329 = scmp.eq.s32.totalorder %s31, 0
    %p330 = por %p328, %p329
    %s332 = sadd.s32 %s331, 1
    %p335 = scmp.eq.s32.totalorder %s25, 3
    %p336 = scmp.ne.s32.totalorder %s331, %s333
    %p337 = scmp.eq.s32.totalorder %s25, 0
    %p338 = por %p336, %p337
    %p339 = scmp.ne.s32.totalorder %s331, %s333
    %p340 = scmp.eq.s32.totalorder %s30, 3
    %p341 = por %p339, %p340
    %p342 = scmp.ne.s32.totalorder %s333, %s334
    %p343 = scmp.eq.s32.totalorder %s30, 0
    %p344 = por %p342, %p343
    %p345 = scmp.ne.s32.totalorder %s333, %s334
    %p346 = scmp.eq.s32.totalorder %s31, 3
    %p347 = por %p345, %p346
    %p349 = scmp.ne.s32.totalorder %s334, %s348
    %p350 = scmp.eq.s32.totalorder %s31, 0
    %p351 = por %p349, %p350
    %s353 = sadd.s32 %s352, 1
    %p356 = scmp.eq.s32.totalorder %s25, 3
    %p357 = scmp.ne.s32.totalorder %s352, %s354
    %p358 = scmp.eq.s32.totalorder %s25, 0
    %p359 = por %p357, %p358
    %p360 = scmp.ne.s32.totalorder %s352, %s354
    %p361 = scmp.eq.s32.totalorder %s30, 3
    %p362 = por %p360, %p361
    %p363 = scmp.ne.s32.totalorder %s354, %s355
    %p364 = scmp.eq.s32.totalorder %s30, 0
    %p365 = por %p363, %p364
    %p366 = scmp.ne.s32.totalorder %s354, %s355
    %p367 = scmp.eq.s32.totalorder %s31, 3
    %p368 = por %p366, %p367
    %p370 = scmp.ne.s32.totalorder %s355, %s369
    %p371 = scmp.eq.s32.totalorder %s31, 0
    %p372 = por %p370, %p371
    %s374 = sadd.s32 %s373, 1
    %p377 = scmp.eq.s32.totalorder %s25, 3
    %p378 = scmp.ne.s32.totalorder %s373, %s375
    %p379 = scmp.eq.s32.totalorder %s25, 0
    %p380 = por %p378, %p379
    %p381 = scmp.ne.s32.totalorder %s373, %s375
    %p382 = scmp.eq.s32.totalorder %s30, 3
    %p383 = por %p381, %p382
    %p384 = scmp.ne.s32.totalorder %s375, %s376
    %p385 = scmp.eq.s32.totalorder %s30, 0
    %p386 = por %p384, %p385
    %p387 = scmp.ne.s32.totalorder %s375, %s376
    %p388 = scmp.eq.s32.totalorder %s31, 3
    %p389 = por %p387, %p388
    %p391 = scmp.ne.s32.totalorder %s376, %s390
    %p392 = scmp.eq.s32.totalorder %s31, 0
    %p393 = por %p391, %p392
    %s395 = sadd.s32 %s394, 1
    %p398 = scmp.eq.s32.totalorder %s25, 3
    %p399 = scmp.ne.s32.totalorder %s394, %s396
    %p400 = scmp.eq.s32.totalorder %s25, 0
    %p401 = por %p399, %p400
    %p402 = scmp.ne.s32.totalorder %s394, %s396
    %p403 = scmp.eq.s32.totalorder %s30, 3
    %p404 = por %p402, %p403
    %p405 = scmp.ne.s32.totalorder %s396, %s397
    %p406 = scmp.eq.s32.totalorder %s30, 0
    %p407 = por %p405, %p406
    %p408 = scmp.ne.s32.totalorder %s396, %s397
    %p409 = scmp.eq.s32.totalorder %s31, 3
    %p410 = por %p408, %p409
    %p412 = scmp.ne.s32.totalorder %s397, %s411
    %p413 = scmp.eq.s32.totalorder %s31, 0
    %p414 = por %p412, %p413
    %s416 = sadd.s32 %s415, 1
    %p419 = scmp.eq.s32.totalorder %s25, 3
    %p420 = scmp.ne.s32.totalorder %s415, %s417
    %p421 = scmp.eq.s32.totalorder %s25, 0
    %p422 = por %p420, %p421
    %p423 = scmp.ne.s32.totalorder %s415, %s417
    %p424 = scmp.eq.s32.totalorder %s30, 3
    %p425 = por %p423, %p424
    %p426 = scmp.ne.s32.totalorder %s417, %s418
    %p427 = scmp.eq.s32.totalorder %s30, 0
    %p428 = por %p426, %p427
    %p429 = scmp.ne.s32.totalorder %s417, %s418
    %p430 = scmp.eq.s32.totalorder %s31, 3
    %p431 = por %p429, %p430
    %p433 = scmp.ne.s32.totalorder %s418, %s432
    %p434 = scmp.eq.s32.totalorder %s31, 0
    %p435 = por %p433, %p434
    %s437 = sadd.s32 %s436, 1
    %p440 = scmp.eq.s32.totalorder %s25, 3
    %p441 = scmp.ne.s32.totalorder %s436, %s438
    %p442 = scmp.eq.s32.totalorder %s25, 0
    %p443 = por %p441, %p442
    %p444 = scmp.ne.s32.totalorder %s436, %s438
    %p445 = scmp.eq.s32.totalorder %s30, 3
    %p446 = por %p444, %p445
    %p447 = scmp.ne.s32.totalorder %s438, %s439
    %p448 = scmp.eq.s32.totalorder %s30, 0
    %p449 = por %p447, %p448
    %p450 = scmp.ne.s32.totalorder %s438, %s439
    %p451 = scmp.eq.s32.totalorder %s31, 3
    %p452 = por %p450, %p451
    %p454 = scmp.ne.s32.totalorder %s439, %s453
    %p455 = scmp.eq.s32.totalorder %s31, 0
    %p456 = por %p454, %p455
    %s457 = ssub.s32 %s25, %s32
    %p458 = scmp.eq.s32.totalorder %s457, 0
    %s460 = sadd.s32 %s459, 1
    %s461 = scalar_select %p458, %s459, %s460
    %p464 = pneg %p458
    %p465 = scmp.eq.s32.totalorder %s25, 3
    %p466 = por %p464, %p465
    %p467 = scmp.ne.s32.totalorder %s459, %s462
    %p468 = scmp.eq.s32.totalorder %s25, 0
    %p469 = por %p467, %p468
    %p470 = scmp.ne.s32.totalorder %s459, %s462
    %p471 = scmp.eq.s32.totalorder %s30, 3
    %p472 = por %p470, %p471
    %p473 = scmp.ne.s32.totalorder %s462, %s463
    %p474 = scmp.eq.s32.totalorder %s30, 0
    %p475 = por %p473, %p474
    %p476 = scmp.ne.s32.totalorder %s462, %s463
    %p477 = scmp.eq.s32.totalorder %s31, 3
    %p478 = por %p476, %p477
    %p480 = scmp.ne.s32.totalorder %s463, %s479
    %p481 = scmp.eq.s32.totalorder %s31, 0
    %p482 = por %p480, %p481
    %p483 = scmp.le.s32.totalorder 1, %s25
    %p484 = scmp.lt.s32.totalorder %s25, 5
    %p485 = pnand %p483, %p484
    %p486 = pneg %p485
    // Predicated region
    $region9: #{_lambda_.2} parent=5 // pred_check
      _
    $region10: #{_lambda_.2} parent=5 // pred_check_branch
      %488 = sbr.rel (%p485) target = $region12
    $region11: #{_lambda_.2} parent=5 // pred_region
      %s489 = ssub.s32 %s25, 1
      // Predicated region
      $region13: #{_lambda_.2} parent=11 // pred_check
        %p490 = pneg %p176
      $region14: #{_lambda_.2} parent=11 // pred_check_branch
        %492 = sbr.rel (%p490) target = $region16
      $region15: #{_lambda_.2} parent=11 // pred_region
        _
      $region16: #{_lambda_.2} parent=11 // pred_fallthru
        _
      // Predicated region
      $region17: #{_lambda_.2} parent=11 // pred_check
        %p493 = pneg %p197
      $region18: #{_lambda_.2} parent=11 // pred_check_branch
        %495 = sbr.rel (%p493) target = $region20
      $region19: #{_lambda_.2} parent=11 // pred_region
        _
      $region20: #{_lambda_.2} parent=11 // pred_fallthru
        _
      // Predicated region
      $region21: #{_lambda_.2} parent=11 // pred_check
        %p496 = pneg %p218
      $region22: #{_lambda_.2} parent=11 // pred_check_branch
        %498 = sbr.rel (%p496) target = $region24
      $region23: #{_lambda_.2} parent=11 // pred_region
        _
      $region24: #{_lambda_.2} parent=11 // pred_fallthru
        _
      // Predicated region
      $region25: #{_lambda_.2} parent=11 // pred_check
        %p499 = pneg %p239
      $region26: #{_lambda_.2} parent=11 // pred_check_branch
        %501 = sbr.rel (%p499) target = $region28
      $region27: #{_lambda_.2} parent=11 // pred_region
        _
      $region28: #{_lambda_.2} parent=11 // pred_fallthru
        _
      // Predicated region
      $region29: #{_lambda_.2} parent=11 // pred_check
        %p502 = pneg %p260
      $region30: #{_lambda_.2} parent=11 // pred_check_branch
        %504 = sbr.rel (%p502) target = $region32
      $region31: #{_lambda_.2} parent=11 // pred_region
        _
      $region32: #{_lambda_.2} parent=11 // pred_fallthru
        _
      // Predicated region
      $region33: #{_lambda_.2} parent=11 // pred_check
        %p505 = pneg %p281
      $region34: #{_lambda_.2} parent=11 // pred_check_branch
        %507 = sbr.rel (%p505) target = $region36
      $region35: #{_lambda_.2} parent=11 // pred_region
        _
      $region36: #{_lambda_.2} parent=11 // pred_fallthru
        _
      // Predicated region
      $region37: #{_lambda_.2} parent=11 // pred_check
        %p508 = pneg %p302
      $region38: #{_lambda_.2} parent=11 // pred_check_branch
        %510 = sbr.rel (%p508) target = $region40
      $region39: #{_lambda_.2} parent=11 // pred_region
        _
      $region40: #{_lambda_.2} parent=11 // pred_fallthru
        _
      // Predicated region
      $region41: #{_lambda_.2} parent=11 // pred_check
        %p511 = pneg %p323
      $region42: #{_lambda_.2} parent=11 // pred_check_branch
        %513 = sbr.rel (%p511) target = $region44
      $region43: #{_lambda_.2} parent=11 // pred_region
        _
      $region44: #{_lambda_.2} parent=11 // pred_fallthru
        _
      // Predicated region
      $region45: #{_lambda_.2} parent=11 // pred_check
        %p514 = pneg %p344
      $region46: #{_lambda_.2} parent=11 // pred_check_branch
        %516 = sbr.rel (%p514) target = $region48
      $region47: #{_lambda_.2} parent=11 // pred_region
        _
      $region48: #{_lambda_.2} parent=11 // pred_fallthru
        _
      // Predicated region
      $region49: #{_lambda_.2} parent=11 // pred_check
        %p517 = pneg %p365
      $region50: #{_lambda_.2} parent=11 // pred_check_branch
        %519 = sbr.rel (%p517) target = $region52
      $region51: #{_lambda_.2} parent=11 // pred_region
        _
      $region52: #{_lambda_.2} parent=11 // pred_fallthru
        _
      // Predicated region
      $region53: #{_lambda_.2} parent=11 // pred_check
        %p520 = pneg %p386
      $region54: #{_lambda_.2} parent=11 // pred_check_branch
        %522 = sbr.rel (%p520) target = $region56
      $region55: #{_lambda_.2} parent=11 // pred_region
        _
      $region56: #{_lambda_.2} parent=11 // pred_fallthru
        _
      // Predicated region
      $region57: #{_lambda_.2} parent=11 // pred_check
        %p523 = pneg %p407
      $region58: #{_lambda_.2} parent=11 // pred_check_branch
        %525 = sbr.rel (%p523) target = $region60
      $region59: #{_lambda_.2} parent=11 // pred_region
        _
      $region60: #{_lambda_.2} parent=11 // pred_fallthru
        _
      // Predicated region
      $region61: #{_lambda_.2} parent=11 // pred_check
        %p526 = pneg %p428
      $region62: #{_lambda_.2} parent=11 // pred_check_branch
        %528 = sbr.rel (%p526) target = $region64
      $region63: #{_lambda_.2} parent=11 // pred_region
        _
      $region64: #{_lambda_.2} parent=11 // pred_fallthru
        _
      // Predicated region
      $region65: #{_lambda_.2} parent=11 // pred_check
        %p529 = pneg %p449
      $region66: #{_lambda_.2} parent=11 // pred_check_branch
        %531 = sbr.rel (%p529) target = $region68
      $region67: #{_lambda_.2} parent=11 // pred_region
        _
      $region68: #{_lambda_.2} parent=11 // pred_fallthru
        _
    $region12: #{_lambda_.2} parent=5 // pred_fallthru
      _
    %p532 = scmp.lt.s32.totalorder %s25, 4
    // Predicated region
    $region69: #{_lambda_.2} parent=5 // pred_check
      %p533 = pneg %p532
    $region70: #{_lambda_.2} parent=5 // pred_check_branch
      %535 = sbr.rel (%p533) target = $region72
    $region71: #{_lambda_.2} parent=5 // pred_region
      // Predicated region
      $region73: #{_lambda_.2} parent=71 // pred_check
        %p536 = pneg %p45
      $region74: #{_lambda_.2} parent=71 // pred_check_branch
        %538 = sbr.rel (%p536) target = $region76
      $region75: #{_lambda_.2} parent=71 // pred_region
        %p539 = scmp.lt.s32.totalorder %s25, 3
        %s540 = scalar_select %p539, %s25, 3
        %s541 = smul.addr %s540, 8
        %s542 = scalar_lea.vmem %s0, %s541
      $region76: #{_lambda_.2} parent=71 // pred_fallthru
        _
      // Predicated region
      $region77: #{_lambda_.2} parent=71 // pred_check
        %p543 = pneg %p71
      $region78: #{_lambda_.2} parent=71 // pred_check_branch
        %545 = sbr.rel (%p543) target = $region80
      $region79: #{_lambda_.2} parent=71 // pred_region
        %p546 = scmp.lt.s32.totalorder %s25, 3
        %s547 = scalar_select %p546, %s25, 3
        %s548 = scalar_lea.vmem %s1, %s547
      $region80: #{_lambda_.2} parent=71 // pred_fallthru
        _
      // Predicated region
      $region81: #{_lambda_.2} parent=71 // pred_check
        %p549 = pneg %p97
      $region82: #{_lambda_.2} parent=71 // pred_check_branch
        %551 = sbr.rel (%p549) target = $region84
      $region83: #{_lambda_.2} parent=71 // pred_region
        %p552 = scmp.lt.s32.totalorder %s25, 3
        %s553 = scalar_select %p552, %s25, 3
        %s554 = smul.addr %s553, 8
        %s555 = scalar_lea.vmem %s2, %s554
      $region84: #{_lambda_.2} parent=71 // pred_fallthru
        _
      // Predicated region
      $region85: #{_lambda_.2} parent=71 // pred_check
        %p556 = pneg %p123
      $region86: #{_lambda_.2} parent=71 // pred_check_branch
        %558 = sbr.rel (%p556) target = $region88
      $region87: #{_lambda_.2} parent=71 // pred_region
        %p559 = scmp.lt.s32.totalorder %s25, 3
        %s560 = scalar_select %p559, %s25, 3
        %s561 = smul.addr %s560, 8
        %s562 = scalar_lea.vmem %s3, %s561
      $region88: #{_lambda_.2} parent=71 // pred_fallthru
        _
      // Predicated region
      $region89: #{_lambda_.2} parent=71 // pred_check
        %p563 = pneg %p149
      $region90: #{_lambda_.2} parent=71 // pred_check_branch
        %565 = sbr.rel (%p563) target = $region92
      $region91: #{_lambda_.2} parent=71 // pred_region
        %p566 = scmp.lt.s32.totalorder %s25, 3
        %s567 = scalar_select %p566, %s25, 3
        %s568 = smul.addr %s567, 8
        %s569 = scalar_lea.vmem %s4, %s568
      $region92: #{_lambda_.2} parent=71 // pred_fallthru
        _
    $region72: #{_lambda_.2} parent=5 // pred_fallthru
      _
    %p570 = scmp.le.s32.totalorder 1, %s25
    %p571 = scmp.lt.s32.totalorder %s25, 5
    %p572 = pnand %p570, %p571
    %p573 = pneg %p572
    // Predicated region
    $region93: #{_lambda_.2} parent=5 // pred_check
      _
    $region94: #{_lambda_.2} parent=5 // pred_check_branch
      %575 = sbr.rel (%p572) target = $region96
    $region95: #{_lambda_.2} parent=5 // pred_region
      %s576 = ssub.s32 %s25, 1
      %p577 = scmp.lt.s32.totalorder %s30, 3
      %s578 = scalar_select %p577, %s30, 3
      %s579 = smul.addr %s578, 8
      %s580 = scalar_lea.vmem %s0, %s579
      %p581 = pneg %p51
      %p582 = pneg %p48
      %p583 = scmp.lt.s32.totalorder %s30, 3
      %s584 = scalar_select %p583, %s30, 3
      %s585 = scalar_lea.vmem %s1, %s584
      %p586 = pneg %p77
      %p587 = pneg %p74
      %p588 = scmp.lt.s32.totalorder %s30, 3
      %s589 = scalar_select %p588, %s30, 3
      %s590 = smul.addr %s589, 8
      %s591 = scalar_lea.vmem %s2, %s590
      %p592 = pneg %p103
      %p593 = pneg %p100
      %p594 = scmp.lt.s32.totalorder %s30, 3
      %s595 = scalar_select %p594, %s30, 3
      %s596 = smul.addr %s595, 8
      %s597 = scalar_lea.vmem %s3, %s596
      %p598 = pneg %p129
      %p599 = pneg %p126
      %p600 = scmp.lt.s32.totalorder %s30, 3
      %s601 = scalar_select %p600, %s30, 3
      %s602 = smul.addr %s601, 8
      %s603 = scalar_lea.vmem %s4, %s602
      %p604 = pneg %p155
      %p605 = pneg %p152
      %p606 = pneg %p176
      %p607 = pneg %p173
      %p608 = pneg %p197
      %p609 = pneg %p194
      %p610 = pneg %p218
      %p611 = pneg %p215
      %p612 = pneg %p239
      %p613 = pneg %p236
      %p614 = pneg %p260
      %p615 = pneg %p257
      %p616 = pneg %p281
      %p617 = pneg %p278
      %p618 = pneg %p302
      %p619 = pneg %p299
      %p620 = pneg %p323
      %p621 = pneg %p320
      %p622 = pneg %p344
      %p623 = pneg %p341
      %p624 = pneg %p365
      %p625 = pneg %p362
      %p626 = pneg %p386
      %p627 = pneg %p383
      %p628 = pneg %p407
      %p629 = pneg %p404
      %p630 = pneg %p428
      %p631 = pneg %p425
      %p632 = pneg %p449
      %p633 = pneg %p446
      %p634 = pneg %p475
      %p635 = pneg %p472
      %p636 = scmp.lt.s32.totalorder %s30, 3
      %s637 = scalar_select %p636, %s30, 3
      %s638 = scalar_lea.vmem %s19, %s637
      %p639 = scmp.lt.s32.totalorder %s30, 3
      %s640 = scalar_select %p639, %s30, 3
      %s641 = smul.addr %s640, 8
      %s642 = scalar_lea.vmem %s0, %s641
      %p643 = scmp.lt.s32.totalorder %s30, 3
      %s644 = scalar_select %p643, %s30, 3
      %s645 = scalar_lea.vmem %s1, %s644
      %p646 = scmp.lt.s32.totalorder %s30, 3
      %s647 = scalar_select %p646, %s30, 3
      %s648 = smul.addr %s647, 8
      %s649 = scalar_lea.vmem %s2, %s648
      %p650 = scmp.lt.s32.totalorder %s30, 3
      %s651 = scalar_select %p650, %s30, 3
      %s652 = smul.addr %s651, 8
      %s653 = scalar_lea.vmem %s3, %s652
      %p654 = scmp.lt.s32.totalorder %s30, 3
      %s655 = scalar_select %p654, %s30, 3
      %s656 = smul.addr %s655, 8
      %s657 = scalar_lea.vmem %s4, %s656
      %p658 = scmp.lt.s32.totalorder %s30, 3
      %s659 = scalar_select %p658, %s30, 3
      %s660 = scalar_lea.vmem %s19, %s659
      %v661 = vld [vmem:[%s642] sm:$0xff]
      %v662 = vld [vmem:[%s645] sm:$0x1]
      %v663 = vld [vmem:[%s649] sm:$0xff]
      %v664 = vld [vmem:[%s653] sm:$0xff]
      %v665 = vld [vmem:[%s657] sm:$0xff]
      %667 = vset.pattern.permute.xlu0 0
      %668 = vperm.xlu0 %667, %v661
      %v669 = vpop.permute.xlu0 %668
      %v672 = vlaneseq
      %v673 = vshrl.u32 %v672, 7
      %v674 = vsub.s32 0, %v673
      %v675 = vrot.slane %v662, %v674
      %v677 = vmul.f32 %v669, %v675
      %v678 = vmul.f32 %v677, %v663
      %vm679 = vcmask 64512
      %v680 = vsel %vm679, %v678, 0.0
      %681 = vadd.xlane.f32.xlu0 %v680
      %v682 = vpop.xlane.xlu0 %681
      %v683 = vadd.f32 %v682, 1e-10
      %v684 = vrcp.pop %v683
      %v685 = vmul.f32 %v678, %v684
      %v687 = vsel %vm679, %v685, 0
      %689 = vmatprep.subr.mxu0 0.0
      %690 = vmatpush1.msra.mxu0 %v664
      %691 = vmatprep.subr.mxu0 0.0
      %692 = vmatpush1.msra.mxu0 0.0
      %693 = vmatprep.subr.mxu0 0.0
      %694 = vmatpush1.msra.mxu0 0.0
      %695 = vmatprep.subr.mxu0 0.0
      %696 = vmatpush1.msra.mxu0 0.0
      %697 = vmatprep.subr.mxu0 0.0
      %698 = vmatpush1.msra.mxu0 0.0
      %699 = vmatprep.subr.mxu0 0.0
      %700 = vmatpush1.msra.mxu0 0.0
      %701 = vmatprep.subr.mxu0 0.0
      %702 = vmatpush1.msra.mxu0 0.0
      %703 = vmatprep.subr.mxu0 0.0
      %704 = vmatpush1.msra.mxu0 0.0
      %705 = vmatprep.subr.mxu0 0.0
      %706 = vmatpush1.msra.mxu0 0.0
      %707 = vmatprep.subr.mxu0 0.0
      %708 = vmatpush1.msra.mxu0 0.0
      %709 = vmatprep.subr.mxu0 0.0
      %710 = vmatpush1.msra.mxu0 0.0
      %711 = vmatprep.subr.mxu0 0.0
      %712 = vmatpush1.msra.mxu0 0.0
      %713 = vmatprep.subr.mxu0 0.0
      %714 = vmatpush1.msra.mxu0 0.0
      %715 = vmatprep.subr.mxu0 0.0
      %716 = vmatpush1.msra.mxu0 0.0
      %717 = vmatprep.subr.mxu0 0.0
      %718 = vmatpush1.msra.mxu0 0.0
      %719 = vmatprep.subr.mxu0 0.0
      %720 = vmatpush1.msra.mxu0 0.0
      %721 = vmatprep.subr.mxu0 0.0
      %722 = vmatpush1.msra.mxu0 0.0
      %723 = vmatprep.subr.mxu0 0.0
      %724 = vmatpush1.msra.mxu0 0.0
      %725 = vmatprep.subr.mxu0 0.0
      %726 = vmatpush1.msra.mxu0 0.0
      %727 = vmatprep.subr.mxu0 0.0
      %728 = vmatpush1.msra.mxu0 0.0
      %729 = vmatprep.subr.mxu0 0.0
      %730 = vmatpush1.msra.mxu0 0.0
      %731 = vmatprep.subr.mxu0 0.0
      %732 = vmatpush1.msra.mxu0 0.0
      %733 = vmatprep.subr.mxu0 0.0
      %734 = vmatpush1.msra.mxu0 0.0
      %735 = vmatprep.subr.mxu0 0.0
      %736 = vmatpush1.msra.mxu0 0.0
      %737 = vmatprep.subr.mxu0 0.0
      %738 = vmatpush1.msra.mxu0 0.0
      %739 = vmatprep.subr.mxu0 0.0
      %740 = vmatpush1.msra.mxu0 0.0
      %741 = vmatprep.subr.mxu0 0.0
      %742 = vmatpush1.msra.mxu0 0.0
      %743 = vmatprep.subr.mxu0 0.0
      %744 = vmatpush1.msra.mxu0 0.0
      %745 = vmatprep.subr.mxu0 0.0
      %746 = vmatpush1.msra.mxu0 0.0
      %747 = vmatprep.subr.mxu0 0.0
      %748 = vmatpush1.msra.mxu0 0.0
      %749 = vmatprep.subr.mxu0 0.0
      %750 = vmatpush1.msra.mxu0 0.0
      %751 = vmatprep.subr.mxu0 0.0
      %752 = vmatpush1.msra.mxu0 0.0
      %753 = vmatprep.mubr.f32.mxu0 0.0
      %754 = vmatmul.mubr.f32.gmra.mrb[0].mxu0 %v687
      %v755 = vpop.f32.mrb[0].mxu0
      %v756 = vadd.f32 0.0, %v755
      %v757 = vpop.f32.mrb[0].mxu0
      %758 = vdwg.mxu0
      %v759 = vsub.f32 1.0, %v661
      %761 = vset.pattern.permute.xlu0 0
      %762 = vperm.xlu0 %761, %v759
      %v763 = vpop.permute.xlu0 %762
      %v765 = vmul.f32 %v664, %v763
      %v766 = vmul.f32 %v756, %v669
      %v767 = vadd.f32 %v765, %v766
      %v768 = vadd.f32 %v767, %v665
      %v769 = vld [vmem:[%s5] sm:$0x1]
      %v770 = vld [vmem:[%s6] sm:$0x1]
      %vm771 = vcmask 261120
      %v772 = vsel %vm771, %v768, 0.0
      %773 = vadd.xlane.f32.xlu0 %v772
      %v774 = vpop.xlane.xlu0 %773
      %v775 = vrcp.pop 32.0
      %v776 = vmul.f32 %v774, %v775
      %v777 = vsub.f32 %v768, %v776
      %v778 = vmul.f32 %v777, %v777
      %v779 = vsel %vm771, %v778, 0.0
      %780 = vadd.xlane.f32.xlu0 %v779
      %v781 = vpop.xlane.xlu0 %780
      %v782 = vmul.f32 %v781, %v775
      %v783 = vadd.f32 %v782, 1e-05
      %v784 = vrsqrt.pop %v783
      %v785 = vmul.f32 %v777, %v784
      %v787 = vlaneseq
      %v788 = vshrl.u32 %v787, 7
      %v789 = vsub.s32 0, %v788
      %v790 = vrot.slane %v769, %v789
      %v792 = vmul.f32 %v785, %v790
      %v794 = vlaneseq
      %v795 = vshrl.u32 %v794, 7
      %v796 = vsub.s32 0, %v795
      %v797 = vrot.slane %v770, %v796
      %v799 = vadd.f32 %v792, %v797
      %v800 = vsub.f32 1.0, %v663
      %v801 = vmul.f32 %v800, -10000.0
      %v802 = vld [vmem:[%s7] sm:$0xff]
      %v803 = vld [vmem:[%s7 + $0x8] sm:$0xff]
      %v804 = vld [vmem:[%s7 + $0x10] sm:$0xff]
      %v805 = vld [vmem:[%s7 + $0x18] sm:$0xff]
      %v806 = vld [vmem:[%s8] sm:$0x1]
      %v808 = vlaneseq
      %v809 = vshrl.u32 %v808, 7
      %v810 = vsub.s32 0, %v809
      %v811 = vrot.slane %v806, %v810
      %v814 = vsel %vm771, %v799, 0
      %816 = vmatprep.subr.mxu0 0.0
      %817 = vmatpush1.msra.mxu0 %v802
      %818 = vmatprep.subr.mxu0 0.0
      %819 = vmatpush1.msra.mxu0 %v803
      %820 = vmatprep.subr.mxu0 0.0
      %821 = vmatpush1.msra.mxu0 %v804
      %822 = vmatprep.subr.mxu0 0.0
      %823 = vmatpush1.msra.mxu0 %v805
      %824 = vmatprep.subr.mxu0 0.0
      %825 = vmatpush1.msra.mxu0 0.0
      %826 = vmatprep.subr.mxu0 0.0
      %827 = vmatpush1.msra.mxu0 0.0
      %828 = vmatprep.subr.mxu0 0.0
      %829 = vmatpush1.msra.mxu0 0.0
      %830 = vmatprep.subr.mxu0 0.0
      %831 = vmatpush1.msra.mxu0 0.0
      %832 = vmatprep.subr.mxu0 0.0
      %833 = vmatpush1.msra.mxu0 0.0
      %834 = vmatprep.subr.mxu0 0.0
      %835 = vmatpush1.msra.mxu0 0.0
      %836 = vmatprep.subr.mxu0 0.0
      %837 = vmatpush1.msra.mxu0 0.0
      %838 = vmatprep.subr.mxu0 0.0
      %839 = vmatpush1.msra.mxu0 0.0
      %840 = vmatprep.subr.mxu0 0.0
      %841 = vmatpush1.msra.mxu0 0.0
      %842 = vmatprep.subr.mxu0 0.0
      %843 = vmatpush1.msra.mxu0 0.0
      %844 = vmatprep.subr.mxu0 0.0
      %845 = vmatpush1.msra.mxu0 0.0
      %846 = vmatprep.subr.mxu0 0.0
      %847 = vmatpush1.msra.mxu0 0.0
      %848 = vmatprep.subr.mxu0 0.0
      %849 = vmatpush1.msra.mxu0 0.0
      %850 = vmatprep.subr.mxu0 0.0
      %851 = vmatpush1.msra.mxu0 0.0
      %852 = vmatprep.subr.mxu0 0.0
      %853 = vmatpush1.msra.mxu0 0.0
      %854 = vmatprep.subr.mxu0 0.0
      %855 = vmatpush1.msra.mxu0 0.0
      %856 = vmatprep.subr.mxu0 0.0
      %857 = vmatpush1.msra.mxu0 0.0
      %858 = vmatprep.subr.mxu0 0.0
      %859 = vmatpush1.msra.mxu0 0.0
      %860 = vmatprep.subr.mxu0 0.0
      %861 = vmatpush1.msra.mxu0 0.0
      %862 = vmatprep.subr.mxu0 0.0
      %863 = vmatpush1.msra.mxu0 0.0
      %864 = vmatprep.subr.mxu0 0.0
      %865 = vmatpush1.msra.mxu0 0.0
      %866 = vmatprep.subr.mxu0 0.0
      %867 = vmatpush1.msra.mxu0 0.0
      %868 = vmatprep.subr.mxu0 0.0
      %869 = vmatpush1.msra.mxu0 0.0
      %870 = vmatprep.subr.mxu0 0.0
      %871 = vmatpush1.msra.mxu0 0.0
      %872 = vmatprep.subr.mxu0 0.0
      %873 = vmatpush1.msra.mxu0 0.0
      %874 = vmatprep.subr.mxu0 0.0
      %875 = vmatpush1.msra.mxu0 0.0
      %876 = vmatprep.subr.mxu0 0.0
      %877 = vmatpush1.msra.mxu0 0.0
      %878 = vmatprep.subr.mxu0 0.0
      %879 = vmatpush1.msra.mxu0 0.0
      %880 = vmatprep.mubr.f32.mxu0 0.0
      %881 = vmatmul.mubr.f32.gmra.mrb[0].mxu0 %v814
      %v882 = vpop.f32.mrb[0].mxu0
      %v883 = vadd.f32 %v811, %v882
      %v884 = vpop.f32.mrb[0].mxu0
      %885 = vdwg.mxu0
      %v886 = vld [vmem:[%s9] sm:$0xff]
      %v887 = vld [vmem:[%s9 + $0x8] sm:$0xff]
      %v888 = vld [vmem:[%s9 + $0x10] sm:$0xff]
      %v889 = vld [vmem:[%s9 + $0x18] sm:$0xff]
      %891 = vrot.lane.b32.xlu0 %v883, 96
      %v892 = vpop.permute.xlu0 %891
      %v893 = vsel %vm679, %v883, 0
      %v895 = vsel %vm679, %v892, 0
      %897 = vmatprep.subr.mxu0 0.0
      %898 = vmatpush1.xpose.msra.mxu0 %v895
      %899 = vmatprep.subr.mxu0 0.0
      %900 = vmatpush1.xpose.msra.mxu0 0.0
      %901 = vmatprep.subr.mxu0 0.0
      %902 = vmatpush1.xpose.msra.mxu0 0.0
      %903 = vmatprep.subr.mxu0 0.0
      %904 = vmatpush1.xpose.msra.mxu0 0.0
      %905 = vmatprep.subr.mxu0 0.0
      %906 = vmatpush1.xpose.msra.mxu0 0.0
      %907 = vmatprep.subr.mxu0 0.0
      %908 = vmatpush1.xpose.msra.mxu0 0.0
      %909 = vmatprep.subr.mxu0 0.0
      %910 = vmatpush1.xpose.msra.mxu0 0.0
      %911 = vmatprep.subr.mxu0 0.0
      %912 = vmatpush1.xpose.msra.mxu0 0.0
      %913 = vmatprep.subr.mxu0 0.0
      %914 = vmatpush1.xpose.msra.mxu0 0.0
      %915 = vmatprep.subr.mxu0 0.0
      %916 = vmatpush1.xpose.msra.mxu0 0.0
      %917 = vmatprep.subr.mxu0 0.0
      %918 = vmatpush1.xpose.msra.mxu0 0.0
      %919 = vmatprep.subr.mxu0 0.0
      %920 = vmatpush1.xpose.msra.mxu0 0.0
      %921 = vmatprep.subr.mxu0 0.0
      %922 = vmatpush1.xpose.msra.mxu0 0.0
      %923 = vmatprep.subr.mxu0 0.0
      %924 = vmatpush1.xpose.msra.mxu0 0.0
      %925 = vmatprep.subr.mxu0 0.0
      %926 = vmatpush1.xpose.msra.mxu0 0.0
      %927 = vmatprep.subr.mxu0 0.0
      %928 = vmatpush1.xpose.msra.mxu0 0.0
      %929 = vmatprep.subr.mxu0 0.0
      %930 = vmatpush1.xpose.msra.mxu0 0.0
      %931 = vmatprep.subr.mxu0 0.0
      %932 = vmatpush1.xpose.msra.mxu0 0.0
      %933 = vmatprep.subr.mxu0 0.0
      %934 = vmatpush1.xpose.msra.mxu0 0.0
      %935 = vmatprep.subr.mxu0 0.0
      %936 = vmatpush1.xpose.msra.mxu0 0.0
      %937 = vmatprep.subr.mxu0 0.0
      %938 = vmatpush1.xpose.msra.mxu0 0.0
      %939 = vmatprep.subr.mxu0 0.0
      %940 = vmatpush1.xpose.msra.mxu0 0.0
      %941 = vmatprep.subr.mxu0 0.0
      %942 = vmatpush1.xpose.msra.mxu0 0.0
      %943 = vmatprep.subr.mxu0 0.0
      %944 = vmatpush1.xpose.msra.mxu0 0.0
      %945 = vmatprep.subr.mxu0 0.0
      %946 = vmatpush1.xpose.msra.mxu0 0.0
      %947 = vmatprep.subr.mxu0 0.0
      %948 = vmatpush1.xpose.msra.mxu0 0.0
      %949 = vmatprep.subr.mxu0 0.0
      %950 = vmatpush1.xpose.msra.mxu0 0.0
      %951 = vmatprep.subr.mxu0 0.0
      %952 = vmatpush1.xpose.msra.mxu0 0.0
      %953 = vmatprep.subr.mxu0 0.0
      %954 = vmatpush1.xpose.msra.mxu0 0.0
      %955 = vmatprep.subr.mxu0 0.0
      %956 = vmatpush1.xpose.msra.mxu0 0.0
      %957 = vmatprep.subr.mxu0 0.0
      %958 = vmatpush1.xpose.msra.mxu0 0.0
      %959 = vmatprep.subr.mxu0 0.0
      %960 = vmatpush1.xpose.msra.mxu0 0.0
      %961 = vmatprep.mubr.f32.mxu0 0.0
      %962 = vmatmul.mubr.f32.gmra.mrb[0].mxu0 %v893
      %v963 = vpop.f32.mrb[0].mxu0
      %v964 = vadd.f32 %v801, %v963
      %v965 = vpop.f32.mrb[0].mxu0
      %966 = vdwg.mxu0
      %v967 = vsel %vm679, %v964, -inf
      %968 = vmax.xlane.f32.xlu0 %v967
      %v969 = vpop.xlane.xlu0 %968
      %v970 = vsub.f32 %v964, %v969
      %v971 = vmul.f32 %v970, 1.442695
      %v972 = vpow.pop %v971
      %v973 = vsel %vm679, %v972, 0.0
      %974 = vadd.xlane.f32.xlu0 %v973
      %v975 = vpop.xlane.xlu0 %974
      %v976 = vrcp.pop %v975
      %v977 = vmul.f32 %v972, %v976
      %978 = vrot.lane.b32.xlu0 %v883, 64
      %v979 = vpop.permute.xlu0 %978
      %v982 = vsel %vm679, %v977, 0
      %984 = vmatprep.subr.mxu0 0.0
      %985 = vmatpush1.msra.mxu0 %v979
      %986 = vmatprep.subr.mxu0 0.0
      %987 = vmatpush1.msra.mxu0 0.0
      %988 = vmatprep.subr.mxu0 0.0
      %989 = vmatpush1.msra.mxu0 0.0
      %990 = vmatprep.subr.mxu0 0.0
      %991 = vmatpush1.msra.mxu0 0.0
      %992 = vmatprep.subr.mxu0 0.0
      %993 = vmatpush1.msra.mxu0 0.0
      %994 = vmatprep.subr.mxu0 0.0
      %995 = vmatpush1.msra.mxu0 0.0
      %996 = vmatprep.subr.mxu0 0.0
      %997 = vmatpush1.msra.mxu0 0.0
      %998 = vmatprep.subr.mxu0 0.0
      %999 = vmatpush1.msra.mxu0 0.0
      %1000 = vmatprep.subr.mxu0 0.0
      %1001 = vmatpush1.msra.mxu0 0.0
      %1002 = vmatprep.subr.mxu0 0.0
      %1003 = vmatpush1.msra.mxu0 0.0
      %1004 = vmatprep.subr.mxu0 0.0
      %1005 = vmatpush1.msra.mxu0 0.0
      %1006 = vmatprep.subr.mxu0 0.0
      %1007 = vmatpush1.msra.mxu0 0.0
      %1008 = vmatprep.subr.mxu0 0.0
      %1009 = vmatpush1.msra.mxu0 0.0
      %1010 = vmatprep.subr.mxu0 0.0
      %1011 = vmatpush1.msra.mxu0 0.0
      %1012 = vmatprep.subr.mxu0 0.0
      %1013 = vmatpush1.msra.mxu0 0.0
      %1014 = vmatprep.subr.mxu0 0.0
      %1015 = vmatpush1.msra.mxu0 0.0
      %1016 = vmatprep.subr.mxu0 0.0
      %1017 = vmatpush1.msra.mxu0 0.0
      %1018 = vmatprep.subr.mxu0 0.0
      %1019 = vmatpush1.msra.mxu0 0.0
      %1020 = vmatprep.subr.mxu0 0.0
      %1021 = vmatpush1.msra.mxu0 0.0
      %1022 = vmatprep.subr.mxu0 0.0
      %1023 = vmatpush1.msra.mxu0 0.0
      %1024 = vmatprep.subr.mxu0 0.0
      %1025 = vmatpush1.msra.mxu0 0.0
      %1026 = vmatprep.subr.mxu0 0.0
      %1027 = vmatpush1.msra.mxu0 0.0
      %1028 = vmatprep.subr.mxu0 0.0
      %1029 = vmatpush1.msra.mxu0 0.0
      %1030 = vmatprep.subr.mxu0 0.0
      %1031 = vmatpush1.msra.mxu0 0.0
      %1032 = vmatprep.subr.mxu0 0.0
      %1033 = vmatpush1.msra.mxu0 0.0
      %1034 = vmatprep.subr.mxu0 0.0
      %1035 = vmatpush1.msra.mxu0 0.0
      %1036 = vmatprep.subr.mxu0 0.0
      %1037 = vmatpush1.msra.mxu0 0.0
      %1038 = vmatprep.subr.mxu0 0.0
      %1039 = vmatpush1.msra.mxu0 0.0
      %1040 = vmatprep.subr.mxu0 0.0
      %1041 = vmatpush1.msra.mxu0 0.0
      %1042 = vmatprep.subr.mxu0 0.0
      %1043 = vmatpush1.msra.mxu0 0.0
      %1044 = vmatprep.subr.mxu0 0.0
      %1045 = vmatpush1.msra.mxu0 0.0
      %1046 = vmatprep.subr.mxu0 0.0
      %1047 = vmatpush1.msra.mxu0 0.0
      %1048 = vmatprep.mubr.f32.mxu0 0.0
      %1049 = vmatmul.mubr.f32.gmra.mrb[0].mxu0 %v982
      %v1050 = vpop.f32.mrb[0].mxu0
      %v1051 = vadd.f32 0.0, %v1050
      %v1052 = vpop.f32.mrb[0].mxu0
      %1053 = vdwg.mxu0
      %1054 = vrot.lane.b32.xlu0 %v883, 120
      %v1055 = vpop.permute.xlu0 %1054
      %1056 = vrot.lane.b32.xlu0 %v883, 88
      %v1057 = vpop.permute.xlu0 %1056
      %v1058 = vsel %vm679, %v1055, 0
      %v1060 = vsel %vm679, %v1057, 0
      %1062 = vmatprep.subr.mxu0 0.0
      %1063 = vmatpush1.xpose.msra.mxu0 %v1060
      %1064 = vmatprep.subr.mxu0 0.0
      %1065 = vmatpush1.xpose.msra.mxu0 0.0
      %1066 = vmatprep.subr.mxu0 0.0
      %1067 = vmatpush1.xpose.msra.mxu0 0.0
      %1068 = vmatprep.subr.mxu0 0.0
      %1069 = vmatpush1.xpose.msra.mxu0 0.0
      %1070 = vmatprep.subr.mxu0 0.0
      %1071 = vmatpush1.xpose.msra.mxu0 0.0
      %1072 = vmatprep.subr.mxu0 0.0
      %1073 = vmatpush1.xpose.msra.mxu0 0.0
      %1074 = vmatprep.subr.mxu0 0.0
      %1075 = vmatpush1.xpose.msra.mxu0 0.0
      %1076 = vmatprep.subr.mxu0 0.0
      %1077 = vmatpush1.xpose.msra.mxu0 0.0
      %1078 = vmatprep.subr.mxu0 0.0
      %1079 = vmatpush1.xpose.msra.mxu0 0.0
      %1080 = vmatprep.subr.mxu0 0.0
      %1081 = vmatpush1.xpose.msra.mxu0 0.0
      %1082 = vmatprep.subr.mxu0 0.0
      %1083 = vmatpush1.xpose.msra.mxu0 0.0
      %1084 = vmatprep.subr.mxu0 0.0
      %1085 = vmatpush1.xpose.msra.mxu0 0.0
      %1086 = vmatprep.subr.mxu0 0.0
      %1087 = vmatpush1.xpose.msra.mxu0 0.0
      %1088 = vmatprep.subr.mxu0 0.0
      %1089 = vmatpush1.xpose.msra.mxu0 0.0
      %1090 = vmatprep.subr.mxu0 0.0
      %1091 = vmatpush1.xpose.msra.mxu0 0.0
      %1092 = vmatprep.subr.mxu0 0.0
      %1093 = vmatpush1.xpose.msra.mxu0 0.0
      %1094 = vmatprep.subr.mxu0 0.0
      %1095 = vmatpush1.xpose.msra.mxu0 0.0
      %1096 = vmatprep.subr.mxu0 0.0
      %1097 = vmatpush1.xpose.msra.mxu0 0.0
      %1098 = vmatprep.subr.mxu0 0.0
      %1099 = vmatpush1.xpose.msra.mxu0 0.0
      %1100 = vmatprep.subr.mxu0 0.0
      %1101 = vmatpush1.xpose.msra.mxu0 0.0
      %1102 = vmatprep.subr.mxu0 0.0
      %1103 = vmatpush1.xpose.msra.mxu0 0.0
      %1104 = vmatprep.subr.mxu0 0.0
      %1105 = vmatpush1.xpose.msra.mxu0 0.0
      %1106 = vmatprep.subr.mxu0 0.0
      %1107 = vmatpush1.xpose.msra.mxu0 0.0
      %1108 = vmatprep.subr.mxu0 0.0
      %1109 = vmatpush1.xpose.msra.mxu0 0.0
      %1110 = vmatprep.subr.mxu0 0.0
      %1111 = vmatpush1.xpose.msra.mxu0 0.0
      %1112 = vmatprep.subr.mxu0 0.0
      %1113 = vmatpush1.xpose.msra.mxu0 0.0
      %1114 = vmatprep.subr.mxu0 0.0
      %1115 = vmatpush1.xpose.msra.mxu0 0.0
      %1116 = vmatprep.subr.mxu0 0.0
      %1117 = vmatpush1.xpose.msra.mxu0 0.0
      %1118 = vmatprep.subr.mxu0 0.0
      %1119 = vmatpush1.xpose.msra.mxu0 0.0
      %1120 = vmatprep.subr.mxu0 0.0
      %1121 = vmatpush1.xpose.msra.mxu0 0.0
      %1122 = vmatprep.subr.mxu0 0.0
      %1123 = vmatpush1.xpose.msra.mxu0 0.0
      %1124 = vmatprep.subr.mxu0 0.0
      %1125 = vmatpush1.xpose.msra.mxu0 0.0
      %1126 = vmatprep.mubr.f32.mxu0 0.0
      %1127 = vmatmul.mubr.f32.gmra.mrb[0].mxu0 %v1058
      %v1128 = vpop.f32.mrb[0].mxu0
      %v1129 = vadd.f32 %v801, %v1128
      %v1130 = vpop.f32.mrb[0].mxu0
      %1131 = vdwg.mxu0
      %v1132 = vsel %vm679, %v1129, -inf
      %1133 = vmax.xlane.f32.xlu0 %v1132
      %v1134 = vpop.xlane.xlu0 %1133
      %v1135 = vsub.f32 %v1129, %v1134
      %v1136 = vmul.f32 %v1135, 1.442695
      %v1137 = vpow.pop %v1136
      %v1138 = vsel %vm679, %v1137, 0.0
      %1139 = vadd.xlane.f32.xlu0 %v1138
      %v1140 = vpop.xlane.xlu0 %1139
      %v1141 = vrcp.pop %v1140
      %v1142 = vmul.f32 %v1137, %v1141
      %1143 = vrot.lane.b32.xlu0 %v883, 56
      %v1144 = vpop.permute.xlu0 %1143
      %v1147 = vsel %vm679, %v1142, 0
      %1149 = vmatprep.subr.mxu0 0.0
      %1150 = vmatpush1.msra.mxu0 %v1144
      %1151 = vmatprep.subr.mxu0 0.0
      %1152 = vmatpush1.msra.mxu0 0.0
      %1153 = vmatprep.subr.mxu0 0.0
      %1154 = vmatpush1.msra.mxu0 0.0
      %1155 = vmatprep.subr.mxu0 0.0
      %1156 = vmatpush1.msra.mxu0 0.0
      %1157 = vmatprep.subr.mxu0 0.0
      %1158 = vmatpush1.msra.mxu0 0.0
      %1159 = vmatprep.subr.mxu0 0.0
      %1160 = vmatpush1.msra.mxu0 0.0
      %1161 = vmatprep.subr.mxu0 0.0
      %1162 = vmatpush1.msra.mxu0 0.0
      %1163 = vmatprep.subr.mxu0 0.0
      %1164 = vmatpush1.msra.mxu0 0.0
      %1165 = vmatprep.subr.mxu0 0.0
      %1166 = vmatpush1.msra.mxu0 0.0
      %1167 = vmatprep.subr.mxu0 0.0
      %1168 = vmatpush1.msra.mxu0 0.0
      %1169 = vmatprep.subr.mxu0 0.0
      %1170 = vmatpush1.msra.mxu0 0.0
      %1171 = vmatprep.subr.mxu0 0.0
      %1172 = vmatpush1.msra.mxu0 0.0
      %1173 = vmatprep.subr.mxu0 0.0
      %1174 = vmatpush1.msra.mxu0 0.0
      %1175 = vmatprep.subr.mxu0 0.0
      %1176 = vmatpush1.msra.mxu0 0.0
      %1177 = vmatprep.subr.mxu0 0.0
      %1178 = vmatpush1.msra.mxu0 0.0
      %1179 = vmatprep.subr.mxu0 0.0
      %1180 = vmatpush1.msra.mxu0 0.0
      %1181 = vmatprep.subr.mxu0 0.0
      %1182 = vmatpush1.msra.mxu0 0.0
      %1183 = vmatprep.subr.mxu0 0.0
      %1184 = vmatpush1.msra.mxu0 0.0
      %1185 = vmatprep.subr.mxu0 0.0
      %1186 = vmatpush1.msra.mxu0 0.0
      %1187 = vmatprep.subr.mxu0 0.0
      %1188 = vmatpush1.msra.mxu0 0.0
      %1189 = vmatprep.subr.mxu0 0.0
      %1190 = vmatpush1.msra.mxu0 0.0
      %1191 = vmatprep.subr.mxu0 0.0
      %1192 = vmatpush1.msra.mxu0 0.0
      %1193 = vmatprep.subr.mxu0 0.0
      %1194 = vmatpush1.msra.mxu0 0.0
      %1195 = vmatprep.subr.mxu0 0.0
      %1196 = vmatpush1.msra.mxu0 0.0
      %1197 = vmatprep.subr.mxu0 0.0
      %1198 = vmatpush1.msra.mxu0 0.0
      %1199 = vmatprep.subr.mxu0 0.0
      %1200 = vmatpush1.msra.mxu0 0.0
      %1201 = vmatprep.subr.mxu0 0.0
      %1202 = vmatpush1.msra.mxu0 0.0
      %1203 = vmatprep.subr.mxu0 0.0
      %1204 = vmatpush1.msra.mxu0 0.0
      %1205 = vmatprep.subr.mxu0 0.0
      %1206 = vmatpush1.msra.mxu0 0.0
      %1207 = vmatprep.subr.mxu0 0.0
      %1208 = vmatpush1.msra.mxu0 0.0
      %1209 = vmatprep.subr.mxu0 0.0
      %1210 = vmatpush1.msra.mxu0 0.0
      %1211 = vmatprep.subr.mxu0 0.0
      %1212 = vmatpush1.msra.mxu0 0.0
      %1213 = vmatprep.mubr.f32.mxu0 0.0
      %1214 = vmatmul.mubr.f32.gmra.mrb[0].mxu0 %v1147
      %v1215 = vpop.f32.mrb[0].mxu0
      %v1216 = vadd.f32 0.0, %v1215
      %v1217 = vpop.f32.mrb[0].mxu0
      %1218 = vdwg.mxu0
      %v1220 = vsel %vm679, %v1216, 0
      %1222 = vmatprep.subr.mxu0 0.0
      %1223 = vmatpush1.msra.mxu0 %v887
      %1224 = vmatprep.subr.mxu0 0.0
      %1225 = vmatpush1.msra.mxu0 0.0
      %1226 = vmatprep.subr.mxu0 0.0
      %1227 = vmatpush1.msra.mxu0 0.0
      %1228 = vmatprep.subr.mxu0 0.0
      %1229 = vmatpush1.msra.mxu0 0.0
      %1230 = vmatprep.subr.mxu0 0.0
      %1231 = vmatpush1.msra.mxu0 0.0
      %1232 = vmatprep.subr.mxu0 0.0
      %1233 = vmatpush1.msra.mxu0 0.0
      %1234 = vmatprep.subr.mxu0 0.0
      %1235 = vmatpush1.msra.mxu0 0.0
      %1236 = vmatprep.subr.mxu0 0.0
      %1237 = vmatpush1.msra.mxu0 0.0
      %1238 = vmatprep.subr.mxu0 0.0
      %1239 = vmatpush1.msra.mxu0 0.0
      %1240 = vmatprep.subr.mxu0 0.0
      %1241 = vmatpush1.msra.mxu0 0.0
      %1242 = vmatprep.subr.mxu0 0.0
      %1243 = vmatpush1.msra.mxu0 0.0
      %1244 = vmatprep.subr.mxu0 0.0
      %1245 = vmatpush1.msra.mxu0 0.0
      %1246 = vmatprep.subr.mxu0 0.0
      %1247 = vmatpush1.msra.mxu0 0.0
      %1248 = vmatprep.subr.mxu0 0.0
      %1249 = vmatpush1.msra.mxu0 0.0
      %1250 = vmatprep.subr.mxu0 0.0
      %1251 = vmatpush1.msra.mxu0 0.0
      %1252 = vmatprep.subr.mxu0 0.0
      %1253 = vmatpush1.msra.mxu0 0.0
      %1254 = vmatprep.subr.mxu0 0.0
      %1255 = vmatpush1.msra.mxu0 0.0
      %1256 = vmatprep.subr.mxu0 0.0
      %1257 = vmatpush1.msra.mxu0 0.0
      %1258 = vmatprep.subr.mxu0 0.0
      %1259 = vmatpush1.msra.mxu0 0.0
      %1260 = vmatprep.subr.mxu0 0.0
      %1261 = vmatpush1.msra.mxu0 0.0
      %1262 = vmatprep.subr.mxu0 0.0
      %1263 = vmatpush1.msra.mxu0 0.0
      %1264 = vmatprep.subr.mxu0 0.0
      %1265 = vmatpush1.msra.mxu0 0.0
      %1266 = vmatprep.subr.mxu0 0.0
      %1267 = vmatpush1.msra.mxu0 0.0
      %1268 = vmatprep.subr.mxu0 0.0
      %1269 = vmatpush1.msra.mxu0 0.0
      %1270 = vmatprep.subr.mxu0 0.0
      %1271 = vmatpush1.msra.mxu0 0.0
      %1272 = vmatprep.subr.mxu0 0.0
      %1273 = vmatpush1.msra.mxu0 0.0
      %1274 = vmatprep.subr.mxu0 0.0
      %1275 = vmatpush1.msra.mxu0 0.0
      %1276 = vmatprep.subr.mxu0 0.0
      %1277 = vmatpush1.msra.mxu0 0.0
      %1278 = vmatprep.subr.mxu0 0.0
      %1279 = vmatpush1.msra.mxu0 0.0
      %1280 = vmatprep.subr.mxu0 0.0
      %1281 = vmatpush1.msra.mxu0 0.0
      %1282 = vmatprep.subr.mxu0 0.0
      %1283 = vmatpush1.msra.mxu0 0.0
      %1284 = vmatprep.subr.mxu0 0.0
      %1285 = vmatpush1.msra.mxu0 0.0
      %1286 = vmatprep.mubr.f32.mxu0 0.0
      %1287 = vmatmul.mubr.f32.gmra.mrb[0].mxu0 %v1220
      %v1288 = vpop.f32.mrb[0].mxu0
      %v1289 = vadd.f32 0.0, %v1288
      %v1290 = vpop.f32.mrb[0].mxu0
      %1291 = vdwg.mxu0
      %v1293 = vsel %vm679, %v1051, 0
      %1295 = vmatprep.subr.mxu0 0.0
      %1296 = vmatpush1.msra.mxu0 %v886
      %1297 = vmatprep.subr.mxu0 0.0
      %1298 = vmatpush1.msra.mxu0 0.0
      %1299 = vmatprep.subr.mxu0 0.0
      %1300 = vmatpush1.msra.mxu0 0.0
      %1301 = vmatprep.subr.mxu0 0.0
      %1302 = vmatpush1.msra.mxu0 0.0
      %1303 = vmatprep.subr.mxu0 0.0
      %1304 = vmatpush1.msra.mxu0 0.0
      %1305 = vmatprep.subr.mxu0 0.0
      %1306 = vmatpush1.msra.mxu0 0.0
      %1307 = vmatprep.subr.mxu0 0.0
      %1308 = vmatpush1.msra.mxu0 0.0
      %1309 = vmatprep.subr.mxu0 0.0
      %1310 = vmatpush1.msra.mxu0 0.0
      %1311 = vmatprep.subr.mxu0 0.0
      %1312 = vmatpush1.msra.mxu0 0.0
      %1313 = vmatprep.subr.mxu0 0.0
      %1314 = vmatpush1.msra.mxu0 0.0
      %1315 = vmatprep.subr.mxu0 0.0
      %1316 = vmatpush1.msra.mxu0 0.0
      %1317 = vmatprep.subr.mxu0 0.0
      %1318 = vmatpush1.msra.mxu0 0.0
      %1319 = vmatprep.subr.mxu0 0.0
      %1320 = vmatpush1.msra.mxu0 0.0
      %1321 = vmatprep.subr.mxu0 0.0
      %1322 = vmatpush1.msra.mxu0 0.0
      %1323 = vmatprep.subr.mxu0 0.0
      %1324 = vmatpush1.msra.mxu0 0.0
      %1325 = vmatprep.subr.mxu0 0.0
      %1326 = vmatpush1.msra.mxu0 0.0
      %1327 = vmatprep.subr.mxu0 0.0
      %1328 = vmatpush1.msra.mxu0 0.0
      %1329 = vmatprep.subr.mxu0 0.0
      %1330 = vmatpush1.msra.mxu0 0.0
      %1331 = vmatprep.subr.mxu0 0.0
      %1332 = vmatpush1.msra.mxu0 0.0
      %1333 = vmatprep.subr.mxu0 0.0
      %1334 = vmatpush1.msra.mxu0 0.0
      %1335 = vmatprep.subr.mxu0 0.0
      %1336 = vmatpush1.msra.mxu0 0.0
      %1337 = vmatprep.subr.mxu0 0.0
      %1338 = vmatpush1.msra.mxu0 0.0
      %1339 = vmatprep.subr.mxu0 0.0
      %1340 = vmatpush1.msra.mxu0 0.0
      %1341 = vmatprep.subr.mxu0 0.0
      %1342 = vmatpush1.msra.mxu0 0.0
      %1343 = vmatprep.subr.mxu0 0.0
      %1344 = vmatpush1.msra.mxu0 0.0
      %1345 = vmatprep.subr.mxu0 0.0
      %1346 = vmatpush1.msra.mxu0 0.0
      %1347 = vmatprep.subr.mxu0 0.0
      %1348 = vmatpush1.msra.mxu0 0.0
      %1349 = vmatprep.subr.mxu0 0.0
      %1350 = vmatpush1.msra.mxu0 0.0
      %1351 = vmatprep.subr.mxu0 0.0
      %1352 = vmatpush1.msra.mxu0 0.0
      %1353 = vmatprep.subr.mxu0 0.0
      %1354 = vmatpush1.msra.mxu0 0.0
      %1355 = vmatprep.subr.mxu0 0.0
      %1356 = vmatpush1.msra.mxu0 0.0
      %1357 = vmatprep.subr.mxu0 0.0
      %1358 = vmatpush1.msra.mxu0 0.0
      %1359 = vmatprep.mubr.f32.mxu0 0.0
      %1360 = vmatmul.mubr.f32.gmra.mrb[0].mxu0 %v1293
      %v1361 = vpop.f32.mrb[0].mxu0
      %v1362 = vadd.f32 %v1289, %v1361
      %v1363 = vpop.f32.mrb[0].mxu0
      %1364 = vdwg.mxu0
      %1365 = vrot.lane.b32.xlu0 %v883, 112
      %v1366 = vpop.permute.xlu0 %1365
      %1367 = vrot.lane.b32.xlu0 %v883, 80
      %v1368 = vpop.permute.xlu0 %1367
      %v1369 = vsel %vm679, %v1366, 0
      %v1371 = vsel %vm679, %v1368, 0
      %1373 = vmatprep.subr.mxu0 0.0
      %1374 = vmatpush1.xpose.msra.mxu0 %v1371
      %1375 = vmatprep.subr.mxu0 0.0
      %1376 = vmatpush1.xpose.msra.mxu0 0.0
      %1377 = vmatprep.subr.mxu0 0.0
      %1378 = vmatpush1.xpose.msra.mxu0 0.0
      %1379 = vmatprep.subr.mxu0 0.0
      %1380 = vmatpush1.xpose.msra.mxu0 0.0
      %1381 = vmatprep.subr.mxu0 0.0
      %1382 = vmatpush1.xpose.msra.mxu0 0.0
      %1383 = vmatprep.subr.mxu0 0.0
      %1384 = vmatpush1.xpose.msra.mxu0 0.0
      %1385 = vmatprep.subr.mxu0 0.0
      %1386 = vmatpush1.xpose.msra.mxu0 0.0
      %1387 = vmatprep.subr.mxu0 0.0
      %1388 = vmatpush1.xpose.msra.mxu0 0.0
      %1389 = vmatprep.subr.mxu0 0.0
      %1390 = vmatpush1.xpose.msra.mxu0 0.0
      %1391 = vmatprep.subr.mxu0 0.0
      %1392 = vmatpush1.xpose.msra.mxu0 0.0
      %1393 = vmatprep.subr.mxu0 0.0
      %1394 = vmatpush1.xpose.msra.mxu0 0.0
      %1395 = vmatprep.subr.mxu0 0.0
      %1396 = vmatpush1.xpose.msra.mxu0 0.0
      %1397 = vmatprep.subr.mxu0 0.0
      %1398 = vmatpush1.xpose.msra.mxu0 0.0
      %1399 = vmatprep.subr.mxu0 0.0
      %1400 = vmatpush1.xpose.msra.mxu0 0.0
      %1401 = vmatprep.subr.mxu0 0.0
      %1402 = vmatpush1.xpose.msra.mxu0 0.0
      %1403 = vmatprep.subr.mxu0 0.0
      %1404 = vmatpush1.xpose.msra.mxu0 0.0
      %1405 = vmatprep.subr.mxu0 0.0
      %1406 = vmatpush1.xpose.msra.mxu0 0.0
      %1407 = vmatprep.subr.mxu0 0.0
      %1408 = vmatpush1.xpose.msra.mxu0 0.0
      %1409 = vmatprep.subr.mxu0 0.0
      %1410 = vmatpush1.xpose.msra.mxu0 0.0
      %1411 = vmatprep.subr.mxu0 0.0
      %1412 = vmatpush1.xpose.msra.mxu0 0.0
      %1413 = vmatprep.subr.mxu0 0.0
      %1414 = vmatpush1.xpose.msra.mxu0 0.0
      %1415 = vmatprep.subr.mxu0 0.0
      %1416 = vmatpush1.xpose.msra.mxu0 0.0
      %1417 = vmatprep.subr.mxu0 0.0
      %1418 = vmatpush1.xpose.msra.mxu0 0.0
      %1419 = vmatprep.subr.mxu0 0.0
      %1420 = vmatpush1.xpose.msra.mxu0 0.0
      %1421 = vmatprep.subr.mxu0 0.0
      %1422 = vmatpush1.xpose.msra.mxu0 0.0
      %1423 = vmatprep.subr.mxu0 0.0
      %1424 = vmatpush1.xpose.msra.mxu0 0.0
      %1425 = vmatprep.subr.mxu0 0.0
      %1426 = vmatpush1.xpose.msra.mxu0 0.0
      %1427 = vmatprep.subr.mxu0 0.0
      %1428 = vmatpush1.xpose.msra.mxu0 0.0
      %1429 = vmatprep.subr.mxu0 0.0
      %1430 = vmatpush1.xpose.msra.mxu0 0.0
      %1431 = vmatprep.subr.mxu0 0.0
      %1432 = vmatpush1.xpose.msra.mxu0 0.0
      %1433 = vmatprep.subr.mxu0 0.0
      %1434 = vmatpush1.xpose.msra.mxu0 0.0
      %1435 = vmatprep.subr.mxu0 0.0
      %1436 = vmatpush1.xpose.msra.mxu0 0.0
      %1437 = vmatprep.mubr.f32.mxu0 0.0
      %1438 = vmatmul.mubr.f32.gmra.mrb[0].mxu0 %v1369
      %v1439 = vpop.f32.mrb[0].mxu0
      %v1440 = vadd.f32 %v801, %v1439
      %v1441 = vpop.f32.mrb[0].mxu0
      %1442 = vdwg.mxu0
      %v1443 = vsel %vm679, %v1440, -inf
      %1444 = vmax.xlane.f32.xlu0 %v1443
      %v1445 = vpop.xlane.xlu0 %1444
      %v1446 = vsub.f32 %v1440, %v1445
      %v1447 = vmul.f32 %v1446, 1.442695
      %v1448 = vpow.pop %v1447
      %v1449 = vsel %vm679, %v1448, 0.0
      %1450 = vadd.xlane.f32.xlu0 %v1449
      %v1451 = vpop.xlane.xlu0 %1450
      %v1452 = vrcp.pop %v1451
      %v1453 = vmul.f32 %v1448, %v1452
      %1454 = vrot.lane.b32.xlu0 %v883, 48
      %v1455 = vpop.permute.xlu0 %1454
      %v1458 = vsel %vm679, %v1453, 0
      %1460 = vmatprep.subr.mxu0 0.0
      %1461 = vmatpush1.msra.mxu0 %v1455
      %1462 = vmatprep.subr.mxu0 0.0
      %1463 = vmatpush1.msra.mxu0 0.0
      %1464 = vmatprep.subr.mxu0 0.0
      %1465 = vmatpush1.msra.mxu0 0.0
      %1466 = vmatprep.subr.mxu0 0.0
      %1467 = vmatpush1.msra.mxu0 0.0
      %1468 = vmatprep.subr.mxu0 0.0
      %1469 = vmatpush1.msra.mxu0 0.0
      %1470 = vmatprep.subr.mxu0 0.0
      %1471 = vmatpush1.msra.mxu0 0.0
      %1472 = vmatprep.subr.mxu0 0.0
      %1473 = vmatpush1.msra.mxu0 0.0
      %1474 = vmatprep.subr.mxu0 0.0
      %1475 = vmatpush1.msra.mxu0 0.0
      %1476 = vmatprep.subr.mxu0 0.0
      %1477 = vmatpush1.msra.mxu0 0.0
      %1478 = vmatprep.subr.mxu0 0.0
      %1479 = vmatpush1.msra.mxu0 0.0
      %1480 = vmatprep.subr.mxu0 0.0
      %1481 = vmatpush1.msra.mxu0 0.0
      %1482 = vmatprep.subr.mxu0 0.0
      %1483 = vmatpush1.msra.mxu0 0.0
      %1484 = vmatprep.subr.mxu0 0.0
      %1485 = vmatpush1.msra.mxu0 0.0
      %1486 = vmatprep.subr.mxu0 0.0
      %1487 = vmatpush1.msra.mxu0 0.0
      %1488 = vmatprep.subr.mxu0 0.0
      %1489 = vmatpush1.msra.mxu0 0.0
      %1490 = vmatprep.subr.mxu0 0.0
      %1491 = vmatpush1.msra.mxu0 0.0
      %1492 = vmatprep.subr.mxu0 0.0
      %1493 = vmatpush1.msra.mxu0 0.0
      %1494 = vmatprep.subr.mxu0 0.0
      %1495 = vmatpush1.msra.mxu0 0.0
      %1496 = vmatprep.subr.mxu0 0.0
      %1497 = vmatpush1.msra.mxu0 0.0
      %1498 = vmatprep.subr.mxu0 0.0
      %1499 = vmatpush1.msra.mxu0 0.0
      %1500 = vmatprep.subr.mxu0 0.0
      %1501 = vmatpush1.msra.mxu0 0.0
      %1502 = vmatprep.subr.mxu0 0.0
      %1503 = vmatpush1.msra.mxu0 0.0
      %1504 = vmatprep.subr.mxu0 0.0
      %1505 = vmatpush1.msra.mxu0 0.0
      %1506 = vmatprep.subr.mxu0 0.0
      %1507 = vmatpush1.msra.mxu0 0.0
      %1508 = vmatprep.subr.mxu0 0.0
      %1509 = vmatpush1.msra.mxu0 0.0
      %1510 = vmatprep.subr.mxu0 0.0
      %1511 = vmatpush1.msra.mxu0 0.0
      %1512 = vmatprep.subr.mxu0 0.0
      %1513 = vmatpush1.msra.mxu0 0.0
      %1514 = vmatprep.subr.mxu0 0.0
      %1515 = vmatpush1.msra.mxu0 0.0
      %1516 = vmatprep.subr.mxu0 0.0
      %1517 = vmatpush1.msra.mxu0 0.0
      %1518 = vmatprep.subr.mxu0 0.0
      %1519 = vmatpush1.msra.mxu0 0.0
      %1520 = vmatprep.subr.mxu0 0.0
      %1521 = vmatpush1.msra.mxu0 0.0
      %1522 = vmatprep.subr.mxu0 0.0
      %1523 = vmatpush1.msra.mxu0 0.0
      %1524 = vmatprep.mubr.f32.mxu0 0.0
      %1525 = vmatmul.mubr.f32.gmra.mrb[0].mxu0 %v1458
      %v1526 = vpop.f32.mrb[0].mxu0
      %v1527 = vadd.f32 0.0, %v1526
      %v1528 = vpop.f32.mrb[0].mxu0
      %1529 = vdwg.mxu0
      %v1531 = vsel %vm679, %v1527, 0
      %1533 = vmatprep.subr.mxu0 0.0
      %1534 = vmatpush1.msra.mxu0 %v888
      %1535 = vmatprep.subr.mxu0 0.0
      %1536 = vmatpush1.msra.mxu0 0.0
      %1537 = vmatprep.subr.mxu0 0.0
      %1538 = vmatpush1.msra.mxu0 0.0
      %1539 = vmatprep.subr.mxu0 0.0
      %1540 = vmatpush1.msra.mxu0 0.0
      %1541 = vmatprep.subr.mxu0 0.0
      %1542 = vmatpush1.msra.mxu0 0.0
      %1543 = vmatprep.subr.mxu0 0.0
      %1544 = vmatpush1.msra.mxu0 0.0
      %1545 = vmatprep.subr.mxu0 0.0
      %1546 = vmatpush1.msra.mxu0 0.0
      %1547 = vmatprep.subr.mxu0 0.0
      %1548 = vmatpush1.msra.mxu0 0.0
      %1549 = vmatprep.subr.mxu0 0.0
      %1550 = vmatpush1.msra.mxu0 0.0
      %1551 = vmatprep.subr.mxu0 0.0
      %1552 = vmatpush1.msra.mxu0 0.0
      %1553 = vmatprep.subr.mxu0 0.0
      %1554 = vmatpush1.msra.mxu0 0.0
      %1555 = vmatprep.subr.mxu0 0.0
      %1556 = vmatpush1.msra.mxu0 0.0
      %1557 = vmatprep.subr.mxu0 0.0
      %1558 = vmatpush1.msra.mxu0 0.0
      %1559 = vmatprep.subr.mxu0 0.0
      %1560 = vmatpush1.msra.mxu0 0.0
      %1561 = vmatprep.subr.mxu0 0.0
      %1562 = vmatpush1.msra.mxu0 0.0
      %1563 = vmatprep.subr.mxu0 0.0
      %1564 = vmatpush1.msra.mxu0 0.0
      %1565 = vmatprep.subr.mxu0 0.0
      %1566 = vmatpush1.msra.mxu0 0.0
      %1567 = vmatprep.subr.mxu0 0.0
      %1568 = vmatpush1.msra.mxu0 0.0
      %1569 = vmatprep.subr.mxu0 0.0
      %1570 = vmatpush1.msra.mxu0 0.0
      %1571 = vmatprep.subr.mxu0 0.0
      %1572 = vmatpush1.msra.mxu0 0.0
      %1573 = vmatprep.subr.mxu0 0.0
      %1574 = vmatpush1.msra.mxu0 0.0
      %1575 = vmatprep.subr.mxu0 0.0
      %1576 = vmatpush1.msra.mxu0 0.0
      %1577 = vmatprep.subr.mxu0 0.0
      %1578 = vmatpush1.msra.mxu0 0.0
      %1579 = vmatprep.subr.mxu0 0.0
      %1580 = vmatpush1.msra.mxu0 0.0
      %1581 = vmatprep.subr.mxu0 0.0
      %1582 = vmatpush1.msra.mxu0 0.0
      %1583 = vmatprep.subr.mxu0 0.0
      %1584 = vmatpush1.msra.mxu0 0.0
      %1585 = vmatprep.subr.mxu0 0.0
      %1586 = vmatpush1.msra.mxu0 0.0
      %1587 = vmatprep.subr.mxu0 0.0
      %1588 = vmatpush1.msra.mxu0 0.0
      %1589 = vmatprep.subr.mxu0 0.0
      %1590 = vmatpush1.msra.mxu0 0.0
      %1591 = vmatprep.subr.mxu0 0.0
      %1592 = vmatpush1.msra.mxu0 0.0
      %1593 = vmatprep.subr.mxu0 0.0
      %1594 = vmatpush1.msra.mxu0 0.0
      %1595 = vmatprep.subr.mxu0 0.0
      %1596 = vmatpush1.msra.mxu0 0.0
      %1597 = vmatprep.mubr.f32.mxu0 0.0
      %1598 = vmatmul.mubr.f32.gmra.mrb[0].mxu0 %v1531
      %v1599 = vpop.f32.mrb[0].mxu0
      %v1600 = vadd.f32 0.0, %v1599
      %v1601 = vpop.f32.mrb[0].mxu0
      %1602 = vdwg.mxu0
      %v1603 = vadd.f32 %v1362, %v1600
      %1604 = vrot.lane.b32.xlu0 %v883, 104
      %v1605 = vpop.permute.xlu0 %1604
      %1606 = vrot.lane.b32.xlu0 %v883, 72
      %v1607 = vpop.permute.xlu0 %1606
      %v1608 = vsel %vm679, %v1605, 0
      %v1610 = vsel %vm679, %v1607, 0
      %1612 = vmatprep.subr.mxu0 0.0
      %1613 = vmatpush1.xpose.msra.mxu0 %v1610
      %1614 = vmatprep.subr.mxu0 0.0
      %1615 = vmatpush1.xpose.msra.mxu0 0.0
      %1616 = vmatprep.subr.mxu0 0.0
      %1617 = vmatpush1.xpose.msra.mxu0 0.0
      %1618 = vmatprep.subr.mxu0 0.0
      %1619 = vmatpush1.xpose.msra.mxu0 0.0
      %1620 = vmatprep.subr.mxu0 0.0
      %1621 = vmatpush1.xpose.msra.mxu0 0.0
      %1622 = vmatprep.subr.mxu0 0.0
      %1623 = vmatpush1.xpose.msra.mxu0 0.0
      %1624 = vmatprep.subr.mxu0 0.0
      %1625 = vmatpush1.xpose.msra.mxu0 0.0
      %1626 = vmatprep.subr.mxu0 0.0
      %1627 = vmatpush1.xpose.msra.mxu0 0.0
      %1628 = vmatprep.subr.mxu0 0.0
      %1629 = vmatpush1.xpose.msra.mxu0 0.0
      %1630 = vmatprep.subr.mxu0 0.0
      %1631 = vmatpush1.xpose.msra.mxu0 0.0
      %1632 = vmatprep.subr.mxu0 0.0
      %1633 = vmatpush1.xpose.msra.mxu0 0.0
      %1634 = vmatprep.subr.mxu0 0.0
      %1635 = vmatpush1.xpose.msra.mxu0 0.0
      %1636 = vmatprep.subr.mxu0 0.0
      %1637 = vmatpush1.xpose.msra.mxu0 0.0
      %1638 = vmatprep.subr.mxu0 0.0
      %1639 = vmatpush1.xpose.msra.mxu0 0.0
      %1640 = vmatprep.subr.mxu0 0.0
      %1641 = vmatpush1.xpose.msra.mxu0 0.0
      %1642 = vmatprep.subr.mxu0 0.0
      %1643 = vmatpush1.xpose.msra.mxu0 0.0
      %1644 = vmatprep.subr.mxu0 0.0
      %1645 = vmatpush1.xpose.msra.mxu0 0.0
      %1646 = vmatprep.subr.mxu0 0.0
      %1647 = vmatpush1.xpose.msra.mxu0 0.0
      %1648 = vmatprep.subr.mxu0 0.0
      %1649 = vmatpush1.xpose.msra.mxu0 0.0
      %1650 = vmatprep.subr.mxu0 0.0
      %1651 = vmatpush1.xpose.msra.mxu0 0.0
      %1652 = vmatprep.subr.mxu0 0.0
      %1653 = vmatpush1.xpose.msra.mxu0 0.0
      %1654 = vmatprep.subr.mxu0 0.0
      %1655 = vmatpush1.xpose.msra.mxu0 0.0
      %1656 = vmatprep.subr.mxu0 0.0
      %1657 = vmatpush1.xpose.msra.mxu0 0.0
      %1658 = vmatprep.subr.mxu0 0.0
      %1659 = vmatpush1.xpose.msra.mxu0 0.0
      %1660 = vmatprep.subr.mxu0 0.0
      %1661 = vmatpush1.xpose.msra.mxu0 0.0
      %1662 = vmatprep.subr.mxu0 0.0
      %1663 = vmatpush1.xpose.msra.mxu0 0.0
      %1664 = vmatprep.subr.mxu0 0.0
      %1665 = vmatpush1.xpose.msra.mxu0 0.0
      %1666 = vmatprep.subr.mxu0 0.0
      %1667 = vmatpush1.xpose.msra.mxu0 0.0
      %1668 = vmatprep.subr.mxu0 0.0
      %1669 = vmatpush1.xpose.msra.mxu0 0.0
      %1670 = vmatprep.subr.mxu0 0.0
      %1671 = vmatpush1.xpose.msra.mxu0 0.0
      %1672 = vmatprep.subr.mxu0 0.0
      %1673 = vmatpush1.xpose.msra.mxu0 0.0
      %1674 = vmatprep.subr.mxu0 0.0
      %1675 = vmatpush1.xpose.msra.mxu0 0.0
      %1676 = vmatprep.mubr.f32.mxu0 0.0
      %1677 = vmatmul.mubr.f32.gmra.mrb[0].mxu0 %v1608
      %v1678 = vpop.f32.mrb[0].mxu0
      %v1679 = vadd.f32 %v801, %v1678
      %v1680 = vpop.f32.mrb[0].mxu0
      %1681 = vdwg.mxu0
      %v1682 = vsel %vm679, %v1679, -inf
      %1683 = vmax.xlane.f32.xlu0 %v1682
      %v1684 = vpop.xlane.xlu0 %1683
      %v1685 = vsub.f32 %v1679, %v1684
      %v1686 = vmul.f32 %v1685, 1.442695
      %v1687 = vpow.pop %v1686
      %v1688 = vsel %vm679, %v1687, 0.0
      %1689 = vadd.xlane.f32.xlu0 %v1688
      %v1690 = vpop.xlane.xlu0 %1689
      %v1691 = vrcp.pop %v1690
      %v1692 = vmul.f32 %v1687, %v1691
      %1693 = vrot.lane.b32.xlu0 %v883, 40
      %v1694 = vpop.permute.xlu0 %1693
      %v1697 = vsel %vm679, %v1692, 0
      %1699 = vmatprep.subr.mxu0 0.0
      %1700 = vmatpush1.msra.mxu0 %v1694
      %1701 = vmatprep.subr.mxu0 0.0
      %1702 = vmatpush1.msra.mxu0 0.0
      %1703 = vmatprep.subr.mxu0 0.0
      %1704 = vmatpush1.msra.mxu0 0.0
      %1705 = vmatprep.subr.mxu0 0.0
      %1706 = vmatpush1.msra.mxu0 0.0
      %1707 = vmatprep.subr.mxu0 0.0
      %1708 = vmatpush1.msra.mxu0 0.0
      %1709 = vmatprep.subr.mxu0 0.0
      %1710 = vmatpush1.msra.mxu0 0.0
      %1711 = vmatprep.subr.mxu0 0.0
      %1712 = vmatpush1.msra.mxu0 0.0
      %1713 = vmatprep.subr.mxu0 0.0
      %1714 = vmatpush1.msra.mxu0 0.0
      %1715 = vmatprep.subr.mxu0 0.0
      %1716 = vmatpush1.msra.mxu0 0.0
      %1717 = vmatprep.subr.mxu0 0.0
      %1718 = vmatpush1.msra.mxu0 0.0
      %1719 = vmatprep.subr.mxu0 0.0
      %1720 = vmatpush1.msra.mxu0 0.0
      %1721 = vmatprep.subr.mxu0 0.0
      %1722 = vmatpush1.msra.mxu0 0.0
      %1723 = vmatprep.subr.mxu0 0.0
      %1724 = vmatpush1.msra.mxu0 0.0
      %1725 = vmatprep.subr.mxu0 0.0
      %1726 = vmatpush1.msra.mxu0 0.0
      %1727 = vmatprep.subr.mxu0 0.0
      %1728 = vmatpush1.msra.mxu0 0.0
      %1729 = vmatprep.subr.mxu0 0.0
      %1730 = vmatpush1.msra.mxu0 0.0
      %1731 = vmatprep.subr.mxu0 0.0
      %1732 = vmatpush1.msra.mxu0 0.0
      %1733 = vmatprep.subr.mxu0 0.0
      %1734 = vmatpush1.msra.mxu0 0.0
      %1735 = vmatprep.subr.mxu0 0.0
      %1736 = vmatpush1.msra.mxu0 0.0
      %1737 = vmatprep.subr.mxu0 0.0
      %1738 = vmatpush1.msra.mxu0 0.0
      %1739 = vmatprep.subr.mxu0 0.0
      %1740 = vmatpush1.msra.mxu0 0.0
      %1741 = vmatprep.subr.mxu0 0.0
      %1742 = vmatpush1.msra.mxu0 0.0
      %1743 = vmatprep.subr.mxu0 0.0
      %1744 = vmatpush1.msra.mxu0 0.0
      %1745 = vmatprep.subr.mxu0 0.0
      %1746 = vmatpush1.msra.mxu0 0.0
      %1747 = vmatprep.subr.mxu0 0.0
      %1748 = vmatpush1.msra.mxu0 0.0
      %1749 = vmatprep.subr.mxu0 0.0
      %1750 = vmatpush1.msra.mxu0 0.0
      %1751 = vmatprep.subr.mxu0 0.0
      %1752 = vmatpush1.msra.mxu0 0.0
      %1753 = vmatprep.subr.mxu0 0.0
      %1754 = vmatpush1.msra.mxu0 0.0
      %1755 = vmatprep.subr.mxu0 0.0
      %1756 = vmatpush1.msra.mxu0 0.0
      %1757 = vmatprep.subr.mxu0 0.0
      %1758 = vmatpush1.msra.mxu0 0.0
      %1759 = vmatprep.subr.mxu0 0.0
      %1760 = vmatpush1.msra.mxu0 0.0
      %1761 = vmatprep.subr.mxu0 0.0
      %1762 = vmatpush1.msra.mxu0 0.0
      %1763 = vmatprep.mubr.f32.mxu0 0.0
      %1764 = vmatmul.mubr.f32.gmra.mrb[0].mxu0 %v1697
      %v1765 = vpop.f32.mrb[0].mxu0
      %v1766 = vadd.f32 0.0, %v1765
      %v1767 = vpop.f32.mrb[0].mxu0
      %1768 = vdwg.mxu0
      %v1770 = vsel %vm679, %v1766, 0
      %1772 = vmatprep.subr.mxu0 0.0
      %1773 = vmatpush1.msra.mxu0 %v889
      %1774 = vmatprep.subr.mxu0 0.0
      %1775 = vmatpush1.msra.mxu0 0.0
      %1776 = vmatprep.subr.mxu0 0.0
      %1777 = vmatpush1.msra.mxu0 0.0
      %1778 = vmatprep.subr.mxu0 0.0
      %1779 = vmatpush1.msra.mxu0 0.0
      %1780 = vmatprep.subr.mxu0 0.0
      %1781 = vmatpush1.msra.mxu0 0.0
      %1782 = vmatprep.subr.mxu0 0.0
      %1783 = vmatpush1.msra.mxu0 0.0
      %1784 = vmatprep.subr.mxu0 0.0
      %1785 = vmatpush1.msra.mxu0 0.0
      %1786 = vmatprep.subr.mxu0 0.0
      %1787 = vmatpush1.msra.mxu0 0.0
      %1788 = vmatprep.subr.mxu0 0.0
      %1789 = vmatpush1.msra.mxu0 0.0
      %1790 = vmatprep.subr.mxu0 0.0
      %1791 = vmatpush1.msra.mxu0 0.0
      %1792 = vmatprep.subr.mxu0 0.0
      %1793 = vmatpush1.msra.mxu0 0.0
      %1794 = vmatprep.subr.mxu0 0.0
      %1795 = vmatpush1.msra.mxu0 0.0
      %1796 = vmatprep.subr.mxu0 0.0
      %1797 = vmatpush1.msra.mxu0 0.0
      %1798 = vmatprep.subr.mxu0 0.0
      %1799 = vmatpush1.msra.mxu0 0.0
      %1800 = vmatprep.subr.mxu0 0.0
      %1801 = vmatpush1.msra.mxu0 0.0
      %1802 = vmatprep.subr.mxu0 0.0
      %1803 = vmatpush1.msra.mxu0 0.0
      %1804 = vmatprep.subr.mxu0 0.0
      %1805 = vmatpush1.msra.mxu0 0.0
      %1806 = vmatprep.subr.mxu0 0.0
      %1807 = vmatpush1.msra.mxu0 0.0
      %1808 = vmatprep.subr.mxu0 0.0
      %1809 = vmatpush1.msra.mxu0 0.0
      %1810 = vmatprep.subr.mxu0 0.0
      %1811 = vmatpush1.msra.mxu0 0.0
      %1812 = vmatprep.subr.mxu0 0.0
      %1813 = vmatpush1.msra.mxu0 0.0
      %1814 = vmatprep.subr.mxu0 0.0
      %1815 = vmatpush1.msra.mxu0 0.0
      %1816 = vmatprep.subr.mxu0 0.0
      %1817 = vmatpush1.msra.mxu0 0.0
      %1818 = vmatprep.subr.mxu0 0.0
      %1819 = vmatpush1.msra.mxu0 0.0
      %1820 = vmatprep.subr.mxu0 0.0
      %1821 = vmatpush1.msra.mxu0 0.0
      %1822 = vmatprep.subr.mxu0 0.0
      %1823 = vmatpush1.msra.mxu0 0.0
      %1824 = vmatprep.subr.mxu0 0.0
      %1825 = vmatpush1.msra.mxu0 0.0
      %1826 = vmatprep.subr.mxu0 0.0
      %1827 = vmatpush1.msra.mxu0 0.0
      %1828 = vmatprep.subr.mxu0 0.0
      %1829 = vmatpush1.msra.mxu0 0.0
      %1830 = vmatprep.subr.mxu0 0.0
      %1831 = vmatpush1.msra.mxu0 0.0
      %1832 = vmatprep.subr.mxu0 0.0
      %1833 = vmatpush1.msra.mxu0 0.0
      %1834 = vmatprep.subr.mxu0 0.0
      %1835 = vmatpush1.msra.mxu0 0.0
      %1836 = vmatprep.mubr.f32.mxu0 0.0
      %1837 = vmatmul.mubr.f32.gmra.mrb[0].mxu0 %v1770
      %v1838 = vpop.f32.mrb[0].mxu0
      %v1839 = vadd.f32 0.0, %v1838
      %v1840 = vpop.f32.mrb[0].mxu0
      %1841 = vdwg.mxu0
      %v1842 = vadd.f32 %v1603, %v1839
      %v1843 = vld [vmem:[%s10] sm:$0x1]
      %v1845 = vlaneseq
      %v1846 = vshrl.u32 %v1845, 7
      %v1847 = vsub.s32 0, %v1846
      %v1848 = vrot.slane %v1843, %v1847
      %v1850 = vadd.f32 %v1842, %v1848
      %v1851 = vadd.f32 %v1850, %v799
      %v1852 = vld [vmem:[%s11] sm:$0x1]
      %v1853 = vld [vmem:[%s12] sm:$0x1]
      %v1854 = vsel %vm771, %v1851, 0.0
      %1855 = vadd.xlane.f32.xlu0 %v1854
      %v1856 = vpop.xlane.xlu0 %1855
      %v1857 = vmul.f32 %v1856, %v775
      %v1858 = vsub.f32 %v1851, %v1857
      %v1859 = vmul.f32 %v1858, %v1858
      %v1860 = vsel %vm771, %v1859, 0.0
      %1861 = vadd.xlane.f32.xlu0 %v1860
      %v1862 = vpop.xlane.xlu0 %1861
      %v1863 = vmul.f32 %v1862, %v775
      %v1864 = vadd.f32 %v1863, 1e-05
      %v1865 = vrsqrt.pop %v1864
      %v1866 = vmul.f32 %v1858, %v1865
      %v1868 = vlaneseq
      %v1869 = vshrl.u32 %v1868, 7
      %v1870 = vsub.s32 0, %v1869
      %v1871 = vrot.slane %v1852, %v1870
      %v1873 = vmul.f32 %v1866, %v1871
      %v1875 = vlaneseq
      %v1876 = vshrl.u32 %v1875, 7
      %v1877 = vsub.s32 0, %v1876
      %v1878 = vrot.slane %v1853, %v1877
      %v1880 = vadd.f32 %v1873, %v1878
      %v1881 = vld [vmem:[%s13] sm:$0xff]
      %v1882 = vld [vmem:[%s13 + $0x8] sm:$0xff]
      %v1883 = vld [vmem:[%s13 + $0x10] sm:$0xff]
      %v1884 = vld [vmem:[%s13 + $0x18] sm:$0xff]
      %v1885 = vld [vmem:[%s14] sm:$0x1]
      %v1887 = vlaneseq
      %v1888 = vshrl.u32 %v1887, 7
      %v1889 = vsub.s32 0, %v1888
      %v1890 = vrot.slane %v1885, %v1889
      %v1893 = vsel %vm771, %v1880, 0
      %1895 = vmatprep.subr.mxu0 0.0
      %1896 = vmatpush1.msra.mxu0 %v1881
      %1897 = vmatprep.subr.mxu0 0.0
      %1898 = vmatpush1.msra.mxu0 %v1882
      %1899 = vmatprep.subr.mxu0 0.0
      %1900 = vmatpush1.msra.mxu0 %v1883
      %1901 = vmatprep.subr.mxu0 0.0
      %1902 = vmatpush1.msra.mxu0 %v1884
      %1903 = vmatprep.subr.mxu0 0.0
      %1904 = vmatpush1.msra.mxu0 0.0
      %1905 = vmatprep.subr.mxu0 0.0
      %1906 = vmatpush1.msra.mxu0 0.0
      %1907 = vmatprep.subr.mxu0 0.0
      %1908 = vmatpush1.msra.mxu0 0.0
      %1909 = vmatprep.subr.mxu0 0.0
      %1910 = vmatpush1.msra.mxu0 0.0
      %1911 = vmatprep.subr.mxu0 0.0
      %1912 = vmatpush1.msra.mxu0 0.0
      %1913 = vmatprep.subr.mxu0 0.0
      %1914 = vmatpush1.msra.mxu0 0.0
      %1915 = vmatprep.subr.mxu0 0.0
      %1916 = vmatpush1.msra.mxu0 0.0
      %1917 = vmatprep.subr.mxu0 0.0
      %1918 = vmatpush1.msra.mxu0 0.0
      %1919 = vmatprep.subr.mxu0 0.0
      %1920 = vmatpush1.msra.mxu0 0.0
      %1921 = vmatprep.subr.mxu0 0.0
      %1922 = vmatpush1.msra.mxu0 0.0
      %1923 = vmatprep.subr.mxu0 0.0
      %1924 = vmatpush1.msra.mxu0 0.0
      %1925 = vmatprep.subr.mxu0 0.0
      %1926 = vmatpush1.msra.mxu0 0.0
      %1927 = vmatprep.subr.mxu0 0.0
      %1928 = vmatpush1.msra.mxu0 0.0
      %1929 = vmatprep.subr.mxu0 0.0
      %1930 = vmatpush1.msra.mxu0 0.0
      %1931 = vmatprep.subr.mxu0 0.0
      %1932 = vmatpush1.msra.mxu0 0.0
      %1933 = vmatprep.subr.mxu0 0.0
      %1934 = vmatpush1.msra.mxu0 0.0
      %1935 = vmatprep.subr.mxu0 0.0
      %1936 = vmatpush1.msra.mxu0 0.0
      %1937 = vmatprep.subr.mxu0 0.0
      %1938 = vmatpush1.msra.mxu0 0.0
      %1939 = vmatprep.subr.mxu0 0.0
      %1940 = vmatpush1.msra.mxu0 0.0
      %1941 = vmatprep.subr.mxu0 0.0
      %1942 = vmatpush1.msra.mxu0 0.0
      %1943 = vmatprep.subr.mxu0 0.0
      %1944 = vmatpush1.msra.mxu0 0.0
      %1945 = vmatprep.subr.mxu0 0.0
      %1946 = vmatpush1.msra.mxu0 0.0
      %1947 = vmatprep.subr.mxu0 0.0
      %1948 = vmatpush1.msra.mxu0 0.0
      %1949 = vmatprep.subr.mxu0 0.0
      %1950 = vmatpush1.msra.mxu0 0.0
      %1951 = vmatprep.subr.mxu0 0.0
      %1952 = vmatpush1.msra.mxu0 0.0
      %1953 = vmatprep.subr.mxu0 0.0
      %1954 = vmatpush1.msra.mxu0 0.0
      %1955 = vmatprep.subr.mxu0 0.0
      %1956 = vmatpush1.msra.mxu0 0.0
      %1957 = vmatprep.subr.mxu0 0.0
      %1958 = vmatpush1.msra.mxu0 0.0
      %1959 = vmatprep.mubr.f32.mxu0 0.0
      %1960 = vmatmul.mubr.f32.gmra.mrb[0].mxu0 %v1893
      %v1961 = vpop.f32.mrb[0].mxu0
      %v1962 = vadd.f32 %v1890, %v1961
      %v1963 = vpop.f32.mrb[0].mxu0
      %1964 = vdwg.mxu0
      %v1965 = vmul.f32 %v1962, %v1962
      %v1966 = vmul.f32 %v1962, %v1965
      %v1967 = vmul.f32 %v1966, 0.044715
      %v1968 = vadd.f32 %v1962, %v1967
      %v1969 = vmul.f32 %v1968, 0.7978846
      %v1970 = vtanh.pop %v1969
      %v1971 = vadd.f32 %v1970, 1.0
      %v1972 = vmul.f32 %v1971, 0.5
      %v1973 = vmul.f32 %v1962, %v1972
      %v1974 = vld [vmem:[%s15] sm:$0xff]
      %v1975 = vld [vmem:[%s15 + $0x8] sm:$0xff]
      %v1976 = vld [vmem:[%s15 + $0x10] sm:$0xff]
      %v1977 = vld [vmem:[%s15 + $0x18] sm:$0xff]
      %v1978 = vld [vmem:[%s15 + $0x20] sm:$0xff]
      %v1979 = vld [vmem:[%s15 + $0x28] sm:$0xff]
      %v1980 = vld [vmem:[%s15 + $0x30] sm:$0xff]
      %v1981 = vld [vmem:[%s15 + $0x38] sm:$0xff]
      %v1982 = vld [vmem:[%s16] sm:$0x1]
      %v1984 = vlaneseq
      %v1985 = vshrl.u32 %v1984, 7
      %v1986 = vsub.s32 0, %v1985
      %v1987 = vrot.slane %v1982, %v1986
      %vm1989 = vcmask 523264
      %v1991 = vsel %vm1989, %v1973, 0
      %1993 = vmatprep.subr.mxu0 0.0
      %1994 = vmatpush1.msra.mxu0 %v1974
      %1995 = vmatprep.subr.mxu0 0.0
      %1996 = vmatpush1.msra.mxu0 %v1975
      %1997 = vmatprep.subr.mxu0 0.0
      %1998 = vmatpush1.msra.mxu0 %v1976
      %1999 = vmatprep.subr.mxu0 0.0
      %2000 = vmatpush1.msra.mxu0 %v1977
      %2001 = vmatprep.subr.mxu0 0.0
      %2002 = vmatpush1.msra.mxu0 %v1978
      %2003 = vmatprep.subr.mxu0 0.0
      %2004 = vmatpush1.msra.mxu0 %v1979
      %2005 = vmatprep.subr.mxu0 0.0
      %2006 = vmatpush1.msra.mxu0 %v1980
      %2007 = vmatprep.subr.mxu0 0.0
      %2008 = vmatpush1.msra.mxu0 %v1981
      %2009 = vmatprep.subr.mxu0 0.0
      %2010 = vmatpush1.msra.mxu0 0.0
      %2011 = vmatprep.subr.mxu0 0.0
      %2012 = vmatpush1.msra.mxu0 0.0
      %2013 = vmatprep.subr.mxu0 0.0
      %2014 = vmatpush1.msra.mxu0 0.0
      %2015 = vmatprep.subr.mxu0 0.0
      %2016 = vmatpush1.msra.mxu0 0.0
      %2017 = vmatprep.subr.mxu0 0.0
      %2018 = vmatpush1.msra.mxu0 0.0
      %2019 = vmatprep.subr.mxu0 0.0
      %2020 = vmatpush1.msra.mxu0 0.0
      %2021 = vmatprep.subr.mxu0 0.0
      %2022 = vmatpush1.msra.mxu0 0.0
      %2023 = vmatprep.subr.mxu0 0.0
      %2024 = vmatpush1.msra.mxu0 0.0
      %2025 = vmatprep.subr.mxu0 0.0
      %2026 = vmatpush1.msra.mxu0 0.0
      %2027 = vmatprep.subr.mxu0 0.0
      %2028 = vmatpush1.msra.mxu0 0.0
      %2029 = vmatprep.subr.mxu0 0.0
      %2030 = vmatpush1.msra.mxu0 0.0
      %2031 = vmatprep.subr.mxu0 0.0
      %2032 = vmatpush1.msra.mxu0 0.0
      %2033 = vmatprep.subr.mxu0 0.0
      %2034 = vmatpush1.msra.mxu0 0.0
      %2035 = vmatprep.subr.mxu0 0.0
      %2036 = vmatpush1.msra.mxu0 0.0
      %2037 = vmatprep.subr.mxu0 0.0
      %2038 = vmatpush1.msra.mxu0 0.0
      %2039 = vmatprep.subr.mxu0 0.0
      %2040 = vmatpush1.msra.mxu0 0.0
      %2041 = vmatprep.subr.mxu0 0.0
      %2042 = vmatpush1.msra.mxu0 0.0
      %2043 = vmatprep.subr.mxu0 0.0
      %2044 = vmatpush1.msra.mxu0 0.0
      %2045 = vmatprep.subr.mxu0 0.0
      %2046 = vmatpush1.msra.mxu0 0.0
      %2047 = vmatprep.subr.mxu0 0.0
      %2048 = vmatpush1.msra.mxu0 0.0
      %2049 = vmatprep.subr.mxu0 0.0
      %2050 = vmatpush1.msra.mxu0 0.0
      %2051 = vmatprep.subr.mxu0 0.0
      %2052 = vmatpush1.msra.mxu0 0.0
      %2053 = vmatprep.subr.mxu0 0.0
      %2054 = vmatpush1.msra.mxu0 0.0
      %2055 = vmatprep.subr.mxu0 0.0
      %2056 = vmatpush1.msra.mxu0 0.0
      %2057 = vmatprep.mubr.f32.mxu0 0.0
      %2058 = vmatmul.mubr.f32.gmra.mrb[0].mxu0 %v1991
      %v2059 = vpop.f32.mrb[0].mxu0
      %v2060 = vadd.f32 %v1987, %v2059
      %v2061 = vpop.f32.mrb[0].mxu0
      %2062 = vdwg.mxu0
      %v2063 = vadd.f32 %v2060, %v1880
      %v2064 = vld [vmem:[%s17] sm:$0x1]
      %v2065 = vld [vmem:[%s18] sm:$0x1]
      %v2066 = vsel %vm771, %v2063, 0.0
      %2067 = vadd.xlane.f32.xlu0 %v2066
      %v2068 = vpop.xlane.xlu0 %2067
      %v2069 = vmul.f32 %v2068, %v775
      %v2070 = vsub.f32 %v2063, %v2069
      %v2071 = vmul.f32 %v2070, %v2070
      %v2072 = vsel %vm771, %v2071, 0.0
      %2073 = vadd.xlane.f32.xlu0 %v2072
      %v2074 = vpop.xlane.xlu0 %2073
      %v2075 = vmul.f32 %v2074, %v775
      %v2076 = vadd.f32 %v2075, 1e-05
      %v2077 = vrsqrt.pop %v2076
      %v2078 = vmul.f32 %v2070, %v2077
      %v2080 = vlaneseq
      %v2081 = vshrl.u32 %v2080, 7
      %v2082 = vsub.s32 0, %v2081
      %v2083 = vrot.slane %v2064, %v2082
      %v2085 = vmul.f32 %v2078, %v2083
      %v2087 = vlaneseq
      %v2088 = vshrl.u32 %v2087, 7
      %v2089 = vsub.s32 0, %v2088
      %v2090 = vrot.slane %v2065, %v2089
      %v2092 = vadd.f32 %v2085, %v2090
      %s2093 = scalar_lea.vmem %s7, 32
      %v2094 = vld [vmem:[%s2093] sm:$0xff]
      %v2095 = vld [vmem:[%s2093 + $0x8] sm:$0xff]
      %v2096 = vld [vmem:[%s2093 + $0x10] sm:$0xff]
      %v2097 = vld [vmem:[%s2093 + $0x18] sm:$0xff]
      %s2098 = scalar_lea.vmem %s8, 1
      %v2099 = vld [vmem:[%s2098] sm:$0x1]
      %v2101 = vlaneseq
      %v2102 = vshrl.u32 %v2101, 7
      %v2103 = vsub.s32 0, %v2102
      %v2104 = vrot.slane %v2099, %v2103
      %v2107 = vsel %vm771, %v2092, 0
      %2109 = vmatprep.subr.mxu0 0.0
      %2110 = vmatpush1.msra.mxu0 %v2094
      %2111 = vmatprep.subr.mxu0 0.0
      %2112 = vmatpush1.msra.mxu0 %v2095
      %2113 = vmatprep.subr.mxu0 0.0
      %2114 = vmatpush1.msra.mxu0 %v2096
      %2115 = vmatprep.subr.mxu0 0.0
      %2116 = vmatpush1.msra.mxu0 %v2097
      %2117 = vmatprep.subr.mxu0 0.0
      %2118 = vmatpush1.msra.mxu0 0.0
      %2119 = vmatprep.subr.mxu0 0.0
      %2120 = vmatpush1.msra.mxu0 0.0
      %2121 = vmatprep.subr.mxu0 0.0
      %2122 = vmatpush1.msra.mxu0 0.0
      %2123 = vmatprep.subr.mxu0 0.0
      %2124 = vmatpush1.msra.mxu0 0.0
      %2125 = vmatprep.subr.mxu0 0.0
      %2126 = vmatpush1.msra.mxu0 0.0
      %2127 = vmatprep.subr.mxu0 0.0
      %2128 = vmatpush1.msra.mxu0 0.0
      %2129 = vmatprep.subr.mxu0 0.0
      %2130 = vmatpush1.msra.mxu0 0.0
      %2131 = vmatprep.subr.mxu0 0.0
      %2132 = vmatpush1.msra.mxu0 0.0
      %2133 = vmatprep.subr.mxu0 0.0
      %2134 = vmatpush1.msra.mxu0 0.0
      %2135 = vmatprep.subr.mxu0 0.0
      %2136 = vmatpush1.msra.mxu0 0.0
      %2137 = vmatprep.subr.mxu0 0.0
      %2138 = vmatpush1.msra.mxu0 0.0
      %2139 = vmatprep.subr.mxu0 0.0
      %2140 = vmatpush1.msra.mxu0 0.0
      %2141 = vmatprep.subr.mxu0 0.0
      %2142 = vmatpush1.msra.mxu0 0.0
      %2143 = vmatprep.subr.mxu0 0.0
      %2144 = vmatpush1.msra.mxu0 0.0
      %2145 = vmatprep.subr.mxu0 0.0
      %2146 = vmatpush1.msra.mxu0 0.0
      %2147 = vmatprep.subr.mxu0 0.0
      %2148 = vmatpush1.msra.mxu0 0.0
      %2149 = vmatprep.subr.mxu0 0.0
      %2150 = vmatpush1.msra.mxu0 0.0
      %2151 = vmatprep.subr.mxu0 0.0
      %2152 = vmatpush1.msra.mxu0 0.0
      %2153 = vmatprep.subr.mxu0 0.0
      %2154 = vmatpush1.msra.mxu0 0.0
      %2155 = vmatprep.subr.mxu0 0.0
      %2156 = vmatpush1.msra.mxu0 0.0
      %2157 = vmatprep.subr.mxu0 0.0
      %2158 = vmatpush1.msra.mxu0 0.0
      %2159 = vmatprep.subr.mxu0 0.0
      %2160 = vmatpush1.msra.mxu0 0.0
      %2161 = vmatprep.subr.mxu0 0.0
      %2162 = vmatpush1.msra.mxu0 0.0
      %2163 = vmatprep.subr.mxu0 0.0
      %2164 = vmatpush1.msra.mxu0 0.0
      %2165 = vmatprep.subr.mxu0 0.0
      %2166 = vmatpush1.msra.mxu0 0.0
      %2167 = vmatprep.subr.mxu0 0.0
      %2168 = vmatpush1.msra.mxu0 0.0
      %2169 = vmatprep.subr.mxu0 0.0
      %2170 = vmatpush1.msra.mxu0 0.0
      %2171 = vmatprep.subr.mxu0 0.0
      %2172 = vmatpush1.msra.mxu0 0.0
      %2173 = vmatprep.mubr.f32.mxu0 0.0
      %2174 = vmatmul.mubr.f32.gmra.mrb[0].mxu0 %v2107
      %v2175 = vpop.f32.mrb[0].mxu0
      %v2176 = vadd.f32 %v2104, %v2175
      %v2177 = vpop.f32.mrb[0].mxu0
      %2178 = vdwg.mxu0
      %s2179 = scalar_lea.vmem %s9, 32
      %v2180 = vld [vmem:[%s2179] sm:$0xff]
      %v2181 = vld [vmem:[%s2179 + $0x8] sm:$0xff]
      %v2182 = vld [vmem:[%s2179 + $0x10] sm:$0xff]
      %v2183 = vld [vmem:[%s2179 + $0x18] sm:$0xff]
      %2185 = vrot.lane.b32.xlu0 %v2176, 96
      %v2186 = vpop.permute.xlu0 %2185
      %v2187 = vsel %vm679, %v2176, 0
      %v2189 = vsel %vm679, %v2186, 0
      %2191 = vmatprep.subr.mxu0 0.0
      %2192 = vmatpush1.xpose.msra.mxu0 %v2189
      %2193 = vmatprep.subr.mxu0 0.0
      %2194 = vmatpush1.xpose.msra.mxu0 0.0
      %2195 = vmatprep.subr.mxu0 0.0
      %2196 = vmatpush1.xpose.msra.mxu0 0.0
      %2197 = vmatprep.subr.mxu0 0.0
      %2198 = vmatpush1.xpose.msra.mxu0 0.0
      %2199 = vmatprep.subr.mxu0 0.0
      %2200 = vmatpush1.xpose.msra.mxu0 0.0
      %2201 = vmatprep.subr.mxu0 0.0
      %2202 = vmatpush1.xpose.msra.mxu0 0.0
      %2203 = vmatprep.subr.mxu0 0.0
      %2204 = vmatpush1.xpose.msra.mxu0 0.0
      %2205 = vmatprep.subr.mxu0 0.0
      %2206 = vmatpush1.xpose.msra.mxu0 0.0
      %2207 = vmatprep.subr.mxu0 0.0
      %2208 = vmatpush1.xpose.msra.mxu0 0.0
      %2209 = vmatprep.subr.mxu0 0.0
      %2210 = vmatpush1.xpose.msra.mxu0 0.0
      %2211 = vmatprep.subr.mxu0 0.0
      %2212 = vmatpush1.xpose.msra.mxu0 0.0
      %2213 = vmatprep.subr.mxu0 0.0
      %2214 = vmatpush1.xpose.msra.mxu0 0.0
      %2215 = vmatprep.subr.mxu0 0.0
      %2216 = vmatpush1.xpose.msra.mxu0 0.0
      %2217 = vmatprep.subr.mxu0 0.0
      %2218 = vmatpush1.xpose.msra.mxu0 0.0
      %2219 = vmatprep.subr.mxu0 0.0
      %2220 = vmatpush1.xpose.msra.mxu0 0.0
      %2221 = vmatprep.subr.mxu0 0.0
      %2222 = vmatpush1.xpose.msra.mxu0 0.0
      %2223 = vmatprep.subr.mxu0 0.0
      %2224 = vmatpush1.xpose.msra.mxu0 0.0
      %2225 = vmatprep.subr.mxu0 0.0
      %2226 = vmatpush1.xpose.msra.mxu0 0.0
      %2227 = vmatprep.subr.mxu0 0.0
      %2228 = vmatpush1.xpose.msra.mxu0 0.0
      %2229 = vmatprep.subr.mxu0 0.0
      %2230 = vmatpush1.xpose.msra.mxu0 0.0
      %2231 = vmatprep.subr.mxu0 0.0
      %2232 = vmatpush1.xpose.msra.mxu0 0.0
      %2233 = vmatprep.subr.mxu0 0.0
      %2234 = vmatpush1.xpose.msra.mxu0 0.0
      %2235 = vmatprep.subr.mxu0 0.0
      %2236 = vmatpush1.xpose.msra.mxu0 0.0
      %2237 = vmatprep.subr.mxu0 0.0
      %2238 = vmatpush1.xpose.msra.mxu0 0.0
      %2239 = vmatprep.subr.mxu0 0.0
      %2240 = vmatpush1.xpose.msra.mxu0 0.0
      %2241 = vmatprep.subr.mxu0 0.0
      %2242 = vmatpush1.xpose.msra.mxu0 0.0
      %2243 = vmatprep.subr.mxu0 0.0
      %2244 = vmatpush1.xpose.msra.mxu0 0.0
      %2245 = vmatprep.subr.mxu0 0.0
      %2246 = vmatpush1.xpose.msra.mxu0 0.0
      %2247 = vmatprep.subr.mxu0 0.0
      %2248 = vmatpush1.xpose.msra.mxu0 0.0
      %2249 = vmatprep.subr.mxu0 0.0
      %2250 = vmatpush1.xpose.msra.mxu0 0.0
      %2251 = vmatprep.subr.mxu0 0.0
      %2252 = vmatpush1.xpose.msra.mxu0 0.0
      %2253 = vmatprep.subr.mxu0 0.0
      %2254 = vmatpush1.xpose.msra.mxu0 0.0
      %2255 = vmatprep.mubr.f32.mxu0 0.0
      %2256 = vmatmul.mubr.f32.gmra.mrb[0].mxu0 %v2187
      %v2257 = vpop.f32.mrb[0].mxu0
      %v2258 = vadd.f32 %v801, %v2257
      %v2259 = vpop.f32.mrb[0].mxu0
      %2260 = vdwg.mxu0
      %v2261 = vsel %vm679, %v2258, -inf
      %2262 = vmax.xlane.f32.xlu0 %v2261
      %v2263 = vpop.xlane.xlu0 %2262
      %v2264 = vsub.f32 %v2258, %v2263
      %v2265 = vmul.f32 %v2264, 1.442695
      %v2266 = vpow.pop %v2265
      %v2267 = vsel %vm679, %v2266, 0.0
      %2268 = vadd.xlane.f32.xlu0 %v2267
      %v2269 = vpop.xlane.xlu0 %2268
      %v2270 = vrcp.pop %v2269
      %v2271 = vmul.f32 %v2266, %v2270
      %2272 = vrot.lane.b32.xlu0 %v2176, 64
      %v2273 = vpop.permute.xlu0 %2272
      %v2276 = vsel %vm679, %v2271, 0
      %2278 = vmatprep.subr.mxu0 0.0
      %2279 = vmatpush1.msra.mxu0 %v2273
      %2280 = vmatprep.subr.mxu0 0.0
      %2281 = vmatpush1.msra.mxu0 0.0
      %2282 = vmatprep.subr.mxu0 0.0
      %2283 = vmatpush1.msra.mxu0 0.0
      %2284 = vmatprep.subr.mxu0 0.0
      %2285 = vmatpush1.msra.mxu0 0.0
      %2286 = vmatprep.subr.mxu0 0.0
      %2287 = vmatpush1.msra.mxu0 0.0
      %2288 = vmatprep.subr.mxu0 0.0
      %2289 = vmatpush1.msra.mxu0 0.0
      %2290 = vmatprep.subr.mxu0 0.0
      %2291 = vmatpush1.msra.mxu0 0.0
      %2292 = vmatprep.subr.mxu0 0.0
      %2293 = vmatpush1.msra.mxu0 0.0
      %2294 = vmatprep.subr.mxu0 0.0
      %2295 = vmatpush1.msra.mxu0 0.0
      %2296 = vmatprep.subr.mxu0 0.0
      %2297 = vmatpush1.msra.mxu0 0.0
      %2298 = vmatprep.subr.mxu0 0.0
      %2299 = vmatpush1.msra.mxu0 0.0
      %2300 = vmatprep.subr.mxu0 0.0
      %2301 = vmatpush1.msra.mxu0 0.0
      %2302 = vmatprep.subr.mxu0 0.0
      %2303 = vmatpush1.msra.mxu0 0.0
      %2304 = vmatprep.subr.mxu0 0.0
      %2305 = vmatpush1.msra.mxu0 0.0
      %2306 = vmatprep.subr.mxu0 0.0
      %2307 = vmatpush1.msra.mxu0 0.0
      %2308 = vmatprep.subr.mxu0 0.0
      %2309 = vmatpush1.msra.mxu0 0.0
      %2310 = vmatprep.subr.mxu0 0.0
      %2311 = vmatpush1.msra.mxu0 0.0
      %2312 = vmatprep.subr.mxu0 0.0
      %2313 = vmatpush1.msra.mxu0 0.0
      %2314 = vmatprep.subr.mxu0 0.0
      %2315 = vmatpush1.msra.mxu0 0.0
      %2316 = vmatprep.subr.mxu0 0.0
      %2317 = vmatpush1.msra.mxu0 0.0
      %2318 = vmatprep.subr.mxu0 0.0
      %2319 = vmatpush1.msra.mxu0 0.0
      %2320 = vmatprep.subr.mxu0 0.0
      %2321 = vmatpush1.msra.mxu0 0.0
      %2322 = vmatprep.subr.mxu0 0.0
      %2323 = vmatpush1.msra.mxu0 0.0
      %2324 = vmatprep.subr.mxu0 0.0
      %2325 = vmatpush1.msra.mxu0 0.0
      %2326 = vmatprep.subr.mxu0 0.0
      %2327 = vmatpush1.msra.mxu0 0.0
      %2328 = vmatprep.subr.mxu0 0.0
      %2329 = vmatpush1.msra.mxu0 0.0
      %2330 = vmatprep.subr.mxu0 0.0
      %2331 = vmatpush1.msra.mxu0 0.0
      %2332 = vmatprep.subr.mxu0 0.0
      %2333 = vmatpush1.msra.mxu0 0.0
      %2334 = vmatprep.subr.mxu0 0.0
      %2335 = vmatpush1.msra.mxu0 0.0
      %2336 = vmatprep.subr.mxu0 0.0
      %2337 = vmatpush1.msra.mxu0 0.0
      %2338 = vmatprep.subr.mxu0 0.0
      %2339 = vmatpush1.msra.mxu0 0.0
      %2340 = vmatprep.subr.mxu0 0.0
      %2341 = vmatpush1.msra.mxu0 0.0
      %2342 = vmatprep.mubr.f32.mxu0 0.0
      %2343 = vmatmul.mubr.f32.gmra.mrb[0].mxu0 %v2276
      %v2344 = vpop.f32.mrb[0].mxu0
      %v2345 = vadd.f32 0.0, %v2344
      %v2346 = vpop.f32.mrb[0].mxu0
      %2347 = vdwg.mxu0
      %2348 = vrot.lane.b32.xlu0 %v2176, 120
      %v2349 = vpop.permute.xlu0 %2348
      %2350 = vrot.lane.b32.xlu0 %v2176, 88
      %v2351 = vpop.permute.xlu0 %2350
      %v2352 = vsel %vm679, %v2349, 0
      %v2354 = vsel %vm679, %v2351, 0
      %2356 = vmatprep.subr.mxu0 0.0
      %2357 = vmatpush1.xpose.msra.mxu0 %v2354
      %2358 = vmatprep.subr.mxu0 0.0
      %2359 = vmatpush1.xpose.msra.mxu0 0.0
      %2360 = vmatprep.subr.mxu0 0.0
      %2361 = vmatpush1.xpose.msra.mxu0 0.0
      %2362 = vmatprep.subr.mxu0 0.0
      %2363 = vmatpush1.xpose.msra.mxu0 0.0
      %2364 = vmatprep.subr.mxu0 0.0
      %2365 = vmatpush1.xpose.msra.mxu0 0.0
      %2366 = vmatprep.subr.mxu0 0.0
      %2367 = vmatpush1.xpose.msra.mxu0 0.0
      %2368 = vmatprep.subr.mxu0 0.0
      %2369 = vmatpush1.xpose.msra.mxu0 0.0
      %2370 = vmatprep.subr.mxu0 0.0
      %2371 = vmatpush1.xpose.msra.mxu0 0.0
      %2372 = vmatprep.subr.mxu0 0.0
      %2373 = vmatpush1.xpose.msra.mxu0 0.0
      %2374 = vmatprep.subr.mxu0 0.0
      %2375 = vmatpush1.xpose.msra.mxu0 0.0
      %2376 = vmatprep.subr.mxu0 0.0
      %2377 = vmatpush1.xpose.msra.mxu0 0.0
      %2378 = vmatprep.subr.mxu0 0.0
      %2379 = vmatpush1.xpose.msra.mxu0 0.0
      %2380 = vmatprep.subr.mxu0 0.0
      %2381 = vmatpush1.xpose.msra.mxu0 0.0
      %2382 = vmatprep.subr.mxu0 0.0
      %2383 = vmatpush1.xpose.msra.mxu0 0.0
      %2384 = vmatprep.subr.mxu0 0.0
      %2385 = vmatpush1.xpose.msra.mxu0 0.0
      %2386 = vmatprep.subr.mxu0 0.0
      %2387 = vmatpush1.xpose.msra.mxu0 0.0
      %2388 = vmatprep.subr.mxu0 0.0
      %2389 = vmatpush1.xpose.msra.mxu0 0.0
      %2390 = vmatprep.subr.mxu0 0.0
      %2391 = vmatpush1.xpose.msra.mxu0 0.0
      %2392 = vmatprep.subr.mxu0 0.0
      %2393 = vmatpush1.xpose.msra.mxu0 0.0
      %2394 = vmatprep.subr.mxu0 0.0
      %2395 = vmatpush1.xpose.msra.mxu0 0.0
      %2396 = vmatprep.subr.mxu0 0.0
      %2397 = vmatpush1.xpose.msra.mxu0 0.0
      %2398 = vmatprep.subr.mxu0 0.0
      %2399 = vmatpush1.xpose.msra.mxu0 0.0
      %2400 = vmatprep.subr.mxu0 0.0
      %2401 = vmatpush1.xpose.msra.mxu0 0.0
      %2402 = vmatprep.subr.mxu0 0.0
      %2403 = vmatpush1.xpose.msra.mxu0 0.0
      %2404 = vmatprep.subr.mxu0 0.0
      %2405 = vmatpush1.xpose.msra.mxu0 0.0
      %2406 = vmatprep.subr.mxu0 0.0
      %2407 = vmatpush1.xpose.msra.mxu0 0.0
      %2408 = vmatprep.subr.mxu0 0.0
      %2409 = vmatpush1.xpose.msra.mxu0 0.0
      %2410 = vmatprep.subr.mxu0 0.0
      %2411 = vmatpush1.xpose.msra.mxu0 0.0
      %2412 = vmatprep.subr.mxu0 0.0
      %2413 = vmatpush1.xpose.msra.mxu0 0.0
      %2414 = vmatprep.subr.mxu0 0.0
      %2415 = vmatpush1.xpose.msra.mxu0 0.0
      %2416 = vmatprep.subr.mxu0 0.0
      %2417 = vmatpush1.xpose.msra.mxu0 0.0
      %2418 = vmatprep.subr.mxu0 0.0
      %2419 = vmatpush1.xpose.msra.mxu0 0.0
      %2420 = vmatprep.mubr.f32.mxu0 0.0
      %2421 = vmatmul.mubr.f32.gmra.mrb[0].mxu0 %v2352
      %v2422 = vpop.f32.mrb[0].mxu0
      %v2423 = vadd.f32 %v801, %v2422
      %v2424 = vpop.f32.mrb[0].mxu0
      %2425 = vdwg.mxu0
      %v2426 = vsel %vm679, %v2423, -inf
      %2427 = vmax.xlane.f32.xlu0 %v2426
      %v2428 = vpop.xlane.xlu0 %2427
      %v2429 = vsub.f32 %v2423, %v2428
      %v2430 = vmul.f32 %v2429, 1.442695
      %v2431 = vpow.pop %v2430
      %v2432 = vsel %vm679, %v2431, 0.0
      %2433 = vadd.xlane.f32.xlu0 %v2432
      %v2434 = vpop.xlane.xlu0 %2433
      %v2435 = vrcp.pop %v2434
      %v2436 = vmul.f32 %v2431, %v2435
      %2437 = vrot.lane.b32.xlu0 %v2176, 56
      %v2438 = vpop.permute.xlu0 %2437
      %v2441 = vsel %vm679, %v2436, 0
      %2443 = vmatprep.subr.mxu0 0.0
      %2444 = vmatpush1.msra.mxu0 %v2438
      %2445 = vmatprep.subr.mxu0 0.0
      %2446 = vmatpush1.msra.mxu0 0.0
      %2447 = vmatprep.subr.mxu0 0.0
      %2448 = vmatpush1.msra.mxu0 0.0
      %2449 = vmatprep.subr.mxu0 0.0
      %2450 = vmatpush1.msra.mxu0 0.0
      %2451 = vmatprep.subr.mxu0 0.0
      %2452 = vmatpush1.msra.mxu0 0.0
      %2453 = vmatprep.subr.mxu0 0.0
      %2454 = vmatpush1.msra.mxu0 0.0
      %2455 = vmatprep.subr.mxu0 0.0
      %2456 = vmatpush1.msra.mxu0 0.0
      %2457 = vmatprep.subr.mxu0 0.0
      %2458 = vmatpush1.msra.mxu0 0.0
      %2459 = vmatprep.subr.mxu0 0.0
      %2460 = vmatpush1.msra.mxu0 0.0
      %2461 = vmatprep.subr.mxu0 0.0
      %2462 = vmatpush1.msra.mxu0 0.0
      %2463 = vmatprep.subr.mxu0 0.0
      %2464 = vmatpush1.msra.mxu0 0.0
      %2465 = vmatprep.subr.mxu0 0.0
      %2466 = vmatpush1.msra.mxu0 0.0
      %2467 = vmatprep.subr.mxu0 0.0
      %2468 = vmatpush1.msra.mxu0 0.0
      %2469 = vmatprep.subr.mxu0 0.0
      %2470 = vmatpush1.msra.mxu0 0.0
      %2471 = vmatprep.subr.mxu0 0.0
      %2472 = vmatpush1.msra.mxu0 0.0
      %2473 = vmatprep.subr.mxu0 0.0
      %2474 = vmatpush1.msra.mxu0 0.0
      %2475 = vmatprep.subr.mxu0 0.0
      %2476 = vmatpush1.msra.mxu0 0.0
      %2477 = vmatprep.subr.mxu0 0.0
      %2478 = vmatpush1.msra.mxu0 0.0
      %2479 = vmatprep.subr.mxu0 0.0
      %2480 = vmatpush1.msra.mxu0 0.0
      %2481 = vmatprep.subr.mxu0 0.0
      %2482 = vmatpush1.msra.mxu0 0.0
      %2483 = vmatprep.subr.mxu0 0.0
      %2484 = vmatpush1.msra.mxu0 0.0
      %2485 = vmatprep.subr.mxu0 0.0
      %2486 = vmatpush1.msra.mxu0 0.0
      %2487 = vmatprep.subr.mxu0 0.0
      %2488 = vmatpush1.msra.mxu0 0.0
      %2489 = vmatprep.subr.mxu0 0.0
      %2490 = vmatpush1.msra.mxu0 0.0
      %2491 = vmatprep.subr.mxu0 0.0
      %2492 = vmatpush1.msra.mxu0 0.0
      %2493 = vmatprep.subr.mxu0 0.0
      %2494 = vmatpush1.msra.mxu0 0.0
      %2495 = vmatprep.subr.mxu0 0.0
      %2496 = vmatpush1.msra.mxu0 0.0
      %2497 = vmatprep.subr.mxu0 0.0
      %2498 = vmatpush1.msra.mxu0 0.0
      %2499 = vmatprep.subr.mxu0 0.0
      %2500 = vmatpush1.msra.mxu0 0.0
      %2501 = vmatprep.subr.mxu0 0.0
      %2502 = vmatpush1.msra.mxu0 0.0
      %2503 = vmatprep.subr.mxu0 0.0
      %2504 = vmatpush1.msra.mxu0 0.0
      %2505 = vmatprep.subr.mxu0 0.0
      %2506 = vmatpush1.msra.mxu0 0.0
      %2507 = vmatprep.mubr.f32.mxu0 0.0
      %2508 = vmatmul.mubr.f32.gmra.mrb[0].mxu0 %v2441
      %v2509 = vpop.f32.mrb[0].mxu0
      %v2510 = vadd.f32 0.0, %v2509
      %v2511 = vpop.f32.mrb[0].mxu0
      %2512 = vdwg.mxu0
      %v2514 = vsel %vm679, %v2510, 0
      %2516 = vmatprep.subr.mxu0 0.0
      %2517 = vmatpush1.msra.mxu0 %v2181
      %2518 = vmatprep.subr.mxu0 0.0
      %2519 = vmatpush1.msra.mxu0 0.0
      %2520 = vmatprep.subr.mxu0 0.0
      %2521 = vmatpush1.msra.mxu0 0.0
      %2522 = vmatprep.subr.mxu0 0.0
      %2523 = vmatpush1.msra.mxu0 0.0
      %2524 = vmatprep.subr.mxu0 0.0
      %2525 = vmatpush1.msra.mxu0 0.0
      %2526 = vmatprep.subr.mxu0 0.0
      %2527 = vmatpush1.msra.mxu0 0.0
      %2528 = vmatprep.subr.mxu0 0.0
      %2529 = vmatpush1.msra.mxu0 0.0
      %2530 = vmatprep.subr.mxu0 0.0
      %2531 = vmatpush1.msra.mxu0 0.0
      %2532 = vmatprep.subr.mxu0 0.0
      %2533 = vmatpush1.msra.mxu0 0.0
      %2534 = vmatprep.subr.mxu0 0.0
      %2535 = vmatpush1.msra.mxu0 0.0
      %2536 = vmatprep.subr.mxu0 0.0
      %2537 = vmatpush1.msra.mxu0 0.0
      %2538 = vmatprep.subr.mxu0 0.0
      %2539 = vmatpush1.msra.mxu0 0.0
      %2540 = vmatprep.subr.mxu0 0.0
      %2541 = vmatpush1.msra.mxu0 0.0
      %2542 = vmatprep.subr.mxu0 0.0
      %2543 = vmatpush1.msra.mxu0 0.0
      %2544 = vmatprep.subr.mxu0 0.0
      %2545 = vmatpush1.msra.mxu0 0.0
      %2546 = vmatprep.subr.mxu0 0.0
      %2547 = vmatpush1.msra.mxu0 0.0
      %2548 = vmatprep.subr.mxu0 0.0
      %2549 = vmatpush1.msra.mxu0 0.0
      %2550 = vmatprep.subr.mxu0 0.0
      %2551 = vmatpush1.msra.mxu0 0.0
      %2552 = vmatprep.subr.mxu0 0.0
      %2553 = vmatpush1.msra.mxu0 0.0
      %2554 = vmatprep.subr.mxu0 0.0
      %2555 = vmatpush1.msra.mxu0 0.0
      %2556 = vmatprep.subr.mxu0 0.0
      %2557 = vmatpush1.msra.mxu0 0.0
      %2558 = vmatprep.subr.mxu0 0.0
      %2559 = vmatpush1.msra.mxu0 0.0
      %2560 = vmatprep.subr.mxu0 0.0
      %2561 = vmatpush1.msra.mxu0 0.0
      %2562 = vmatprep.subr.mxu0 0.0
      %2563 = vmatpush1.msra.mxu0 0.0
      %2564 = vmatprep.subr.mxu0 0.0
      %2565 = vmatpush1.msra.mxu0 0.0
      %2566 = vmatprep.subr.mxu0 0.0
      %2567 = vmatpush1.msra.mxu0 0.0
      %2568 = vmatprep.subr.mxu0 0.0
      %2569 = vmatpush1.msra.mxu0 0.0
      %2570 = vmatprep.subr.mxu0 0.0
      %2571 = vmatpush1.msra.mxu0 0.0
      %2572 = vmatprep.subr.mxu0 0.0
      %2573 = vmatpush1.msra.mxu0 0.0
      %2574 = vmatprep.subr.mxu0 0.0
      %2575 = vmatpush1.msra.mxu0 0.0
      %2576 = vmatprep.subr.mxu0 0.0
      %2577 = vmatpush1.msra.mxu0 0.0
      %2578 = vmatprep.subr.mxu0 0.0
      %2579 = vmatpush1.msra.mxu0 0.0
      %2580 = vmatprep.mubr.f32.mxu0 0.0
      %2581 = vmatmul.mubr.f32.gmra.mrb[0].mxu0 %v2514
      %v2582 = vpop.f32.mrb[0].mxu0
      %v2583 = vadd.f32 0.0, %v2582
      %v2584 = vpop.f32.mrb[0].mxu0
      %2585 = vdwg.mxu0
      %v2587 = vsel %vm679, %v2345, 0
      %2589 = vmatprep.subr.mxu0 0.0
      %2590 = vmatpush1.msra.mxu0 %v2180
      %2591 = vmatprep.subr.mxu0 0.0
      %2592 = vmatpush1.msra.mxu0 0.0
      %2593 = vmatprep.subr.mxu0 0.0
      %2594 = vmatpush1.msra.mxu0 0.0
      %2595 = vmatprep.subr.mxu0 0.0
      %2596 = vmatpush1.msra.mxu0 0.0
      %2597 = vmatprep.subr.mxu0 0.0
      %2598 = vmatpush1.msra.mxu0 0.0
      %2599 = vmatprep.subr.mxu0 0.0
      %2600 = vmatpush1.msra.mxu0 0.0
      %2601 = vmatprep.subr.mxu0 0.0
      %2602 = vmatpush1.msra.mxu0 0.0
      %2603 = vmatprep.subr.mxu0 0.0
      %2604 = vmatpush1.msra.mxu0 0.0
      %2605 = vmatprep.subr.mxu0 0.0
      %2606 = vmatpush1.msra.mxu0 0.0
      %2607 = vmatprep.subr.mxu0 0.0
      %2608 = vmatpush1.msra.mxu0 0.0
      %2609 = vmatprep.subr.mxu0 0.0
      %2610 = vmatpush1.msra.mxu0 0.0
      %2611 = vmatprep.subr.mxu0 0.0
      %2612 = vmatpush1.msra.mxu0 0.0
      %2613 = vmatprep.subr.mxu0 0.0
      %2614 = vmatpush1.msra.mxu0 0.0
      %2615 = vmatprep.subr.mxu0 0.0
      %2616 = vmatpush1.msra.mxu0 0.0
      %2617 = vmatprep.subr.mxu0 0.0
      %2618 = vmatpush1.msra.mxu0 0.0
      %2619 = vmatprep.subr.mxu0 0.0
      %2620 = vmatpush1.msra.mxu0 0.0
      %2621 = vmatprep.subr.mxu0 0.0
      %2622 = vmatpush1.msra.mxu0 0.0
      %2623 = vmatprep.subr.mxu0 0.0
      %2624 = vmatpush1.msra.mxu0 0.0
      %2625 = vmatprep.subr.mxu0 0.0
      %2626 = vmatpush1.msra.mxu0 0.0
      %2627 = vmatprep.subr.mxu0 0.0
      %2628 = vmatpush1.msra.mxu0 0.0
      %2629 = vmatprep.subr.mxu0 0.0
      %2630 = vmatpush1.msra.mxu0 0.0
      %2631 = vmatprep.subr.mxu0 0.0
      %2632 = vmatpush1.msra.mxu0 0.0
      %2633 = vmatprep.subr.mxu0 0.0
      %2634 = vmatpush1.msra.mxu0 0.0
      %2635 = vmatprep.subr.mxu0 0.0
      %2636 = vmatpush1.msra.mxu0 0.0
      %2637 = vmatprep.subr.mxu0 0.0
      %2638 = vmatpush1.msra.mxu0 0.0
      %2639 = vmatprep.subr.mxu0 0.0
      %2640 = vmatpush1.msra.mxu0 0.0
      %2641 = vmatprep.subr.mxu0 0.0
      %2642 = vmatpush1.msra.mxu0 0.0
      %2643 = vmatprep.subr.mxu0 0.0
      %2644 = vmatpush1.msra.mxu0 0.0
      %2645 = vmatprep.subr.mxu0 0.0
      %2646 = vmatpush1.msra.mxu0 0.0
      %2647 = vmatprep.subr.mxu0 0.0
      %2648 = vmatpush1.msra.mxu0 0.0
      %2649 = vmatprep.subr.mxu0 0.0
      %2650 = vmatpush1.msra.mxu0 0.0
      %2651 = vmatprep.subr.mxu0 0.0
      %2652 = vmatpush1.msra.mxu0 0.0
      %2653 = vmatprep.mubr.f32.mxu0 0.0
      %2654 = vmatmul.mubr.f32.gmra.mrb[0].mxu0 %v2587
      %v2655 = vpop.f32.mrb[0].mxu0
      %v2656 = vadd.f32 %v2583, %v2655
      %v2657 = vpop.f32.mrb[0].mxu0
      %2658 = vdwg.mxu0
      %2659 = vrot.lane.b32.xlu0 %v2176, 112
      %v2660 = vpop.permute.xlu0 %2659
      %2661 = vrot.lane.b32.xlu0 %v2176, 80
      %v2662 = vpop.permute.xlu0 %2661
      %v2663 = vsel %vm679, %v2660, 0
      %v2665 = vsel %vm679, %v2662, 0
      %2667 = vmatprep.subr.mxu0 0.0
      %2668 = vmatpush1.xpose.msra.mxu0 %v2665
      %2669 = vmatprep.subr.mxu0 0.0
      %2670 = vmatpush1.xpose.msra.mxu0 0.0
      %2671 = vmatprep.subr.mxu0 0.0
      %2672 = vmatpush1.xpose.msra.mxu0 0.0
      %2673 = vmatprep.subr.mxu0 0.0
      %2674 = vmatpush1.xpose.msra.mxu0 0.0
      %2675 = vmatprep.subr.mxu0 0.0
      %2676 = vmatpush1.xpose.msra.mxu0 0.0
      %2677 = vmatprep.subr.mxu0 0.0
      %2678 = vmatpush1.xpose.msra.mxu0 0.0
      %2679 = vmatprep.subr.mxu0 0.0
      %2680 = vmatpush1.xpose.msra.mxu0 0.0
      %2681 = vmatprep.subr.mxu0 0.0
      %2682 = vmatpush1.xpose.msra.mxu0 0.0
      %2683 = vmatprep.subr.mxu0 0.0
      %2684 = vmatpush1.xpose.msra.mxu0 0.0
      %2685 = vmatprep.subr.mxu0 0.0
      %2686 = vmatpush1.xpose.msra.mxu0 0.0
      %2687 = vmatprep.subr.mxu0 0.0
      %2688 = vmatpush1.xpose.msra.mxu0 0.0
      %2689 = vmatprep.subr.mxu0 0.0
      %2690 = vmatpush1.xpose.msra.mxu0 0.0
      %2691 = vmatprep.subr.mxu0 0.0
      %2692 = vmatpush1.xpose.msra.mxu0 0.0
      %2693 = vmatprep.subr.mxu0 0.0
      %2694 = vmatpush1.xpose.msra.mxu0 0.0
      %2695 = vmatprep.subr.mxu0 0.0
      %2696 = vmatpush1.xpose.msra.mxu0 0.0
      %2697 = vmatprep.subr.mxu0 0.0
      %2698 = vmatpush1.xpose.msra.mxu0 0.0
      %2699 = vmatprep.subr.mxu0 0.0
      %2700 = vmatpush1.xpose.msra.mxu0 0.0
      %2701 = vmatprep.subr.mxu0 0.0
      %2702 = vmatpush1.xpose.msra.mxu0 0.0
      %2703 = vmatprep.subr.mxu0 0.0
      %2704 = vmatpush1.xpose.msra.mxu0 0.0
      %2705 = vmatprep.subr.mxu0 0.0
      %2706 = vmatpush1.xpose.msra.mxu0 0.0
      %2707 = vmatprep.subr.mxu0 0.0
      %2708 = vmatpush1.xpose.msra.mxu0 0.0
      %2709 = vmatprep.subr.mxu0 0.0
      %2710 = vmatpush1.xpose.msra.mxu0 0.0
      %2711 = vmatprep.subr.mxu0 0.0
      %2712 = vmatpush1.xpose.msra.mxu0 0.0
      %2713 = vmatprep.subr.mxu0 0.0
      %2714 = vmatpush1.xpose.msra.mxu0 0.0
      %2715 = vmatprep.subr.mxu0 0.0
      %2716 = vmatpush1.xpose.msra.mxu0 0.0
      %2717 = vmatprep.subr.mxu0 0.0
      %2718 = vmatpush1.xpose.msra.mxu0 0.0
      %2719 = vmatprep.subr.mxu0 0.0
      %2720 = vmatpush1.xpose.msra.mxu0 0.0
      %2721 = vmatprep.subr.mxu0 0.0
      %2722 = vmatpush1.xpose.msra.mxu0 0.0
      %2723 = vmatprep.subr.mxu0 0.0
      %2724 = vmatpush1.xpose.msra.mxu0 0.0
      %2725 = vmatprep.subr.mxu0 0.0
      %2726 = vmatpush1.xpose.msra.mxu0 0.0
      %2727 = vmatprep.subr.mxu0 0.0
      %2728 = vmatpush1.xpose.msra.mxu0 0.0
      %2729 = vmatprep.subr.mxu0 0.0
      %2730 = vmatpush1.xpose.msra.mxu0 0.0
      %2731 = vmatprep.mubr.f32.mxu0 0.0
      %2732 = vmatmul.mubr.f32.gmra.mrb[0].mxu0 %v2663
      %v2733 = vpop.f32.mrb[0].mxu0
      %v2734 = vadd.f32 %v801, %v2733
      %v2735 = vpop.f32.mrb[0].mxu0
      %2736 = vdwg.mxu0
      %v2737 = vsel %vm679, %v2734, -inf
      %2738 = vmax.xlane.f32.xlu0 %v2737
      %v2739 = vpop.xlane.xlu0 %2738
      %v2740 = vsub.f32 %v2734, %v2739
      %v2741 = vmul.f32 %v2740, 1.442695
      %v2742 = vpow.pop %v2741
      %v2743 = vsel %vm679, %v2742, 0.0
      %2744 = vadd.xlane.f32.xlu0 %v2743
      %v2745 = vpop.xlane.xlu0 %2744
      %v2746 = vrcp.pop %v2745
      %v2747 = vmul.f32 %v2742, %v2746
      %2748 = vrot.lane.b32.xlu0 %v2176, 48
      %v2749 = vpop.permute.xlu0 %2748
      %v2752 = vsel %vm679, %v2747, 0
      %2754 = vmatprep.subr.mxu0 0.0
      %2755 = vmatpush1.msra.mxu0 %v2749
      %2756 = vmatprep.subr.mxu0 0.0
      %2757 = vmatpush1.msra.mxu0 0.0
      %2758 = vmatprep.subr.mxu0 0.0
      %2759 = vmatpush1.msra.mxu0 0.0
      %2760 = vmatprep.subr.mxu0 0.0
      %2761 = vmatpush1.msra.mxu0 0.0
      %2762 = vmatprep.subr.mxu0 0.0
      %2763 = vmatpush1.msra.mxu0 0.0
      %2764 = vmatprep.subr.mxu0 0.0
      %2765 = vmatpush1.msra.mxu0 0.0
      %2766 = vmatprep.subr.mxu0 0.0
      %2767 = vmatpush1.msra.mxu0 0.0
      %2768 = vmatprep.subr.mxu0 0.0
      %2769 = vmatpush1.msra.mxu0 0.0
      %2770 = vmatprep.subr.mxu0 0.0
      %2771 = vmatpush1.msra.mxu0 0.0
      %2772 = vmatprep.subr.mxu0 0.0
      %2773 = vmatpush1.msra.mxu0 0.0
      %2774 = vmatprep.subr.mxu0 0.0
      %2775 = vmatpush1.msra.mxu0 0.0
      %2776 = vmatprep.subr.mxu0 0.0
      %2777 = vmatpush1.msra.mxu0 0.0
      %2778 = vmatprep.subr.mxu0 0.0
      %2779 = vmatpush1.msra.mxu0 0.0
      %2780 = vmatprep.subr.mxu0 0.0
      %2781 = vmatpush1.msra.mxu0 0.0
      %2782 = vmatprep.subr.mxu0 0.0
      %2783 = vmatpush1.msra.mxu0 0.0
      %2784 = vmatprep.subr.mxu0 0.0
      %2785 = vmatpush1.msra.mxu0 0.0
      %2786 = vmatprep.subr.mxu0 0.0
      %2787 = vmatpush1.msra.mxu0 0.0
      %2788 = vmatprep.subr.mxu0 0.0
      %2789 = vmatpush1.msra.mxu0 0.0
      %2790 = vmatprep.subr.mxu0 0.0
      %2791 = vmatpush1.msra.mxu0 0.0
      %2792 = vmatprep.subr.mxu0 0.0
      %2793 = vmatpush1.msra.mxu0 0.0
      %2794 = vmatprep.subr.mxu0 0.0
      %2795 = vmatpush1.msra.mxu0 0.0
      %2796 = vmatprep.subr.mxu0 0.0
      %2797 = vmatpush1.msra.mxu0 0.0
      %2798 = vmatprep.subr.mxu0 0.0
      %2799 = vmatpush1.msra.mxu0 0.0
      %2800 = vmatprep.subr.mxu0 0.0
      %2801 = vmatpush1.msra.mxu0 0.0
      %2802 = vmatprep.subr.mxu0 0.0
      %2803 = vmatpush1.msra.mxu0 0.0
      %2804 = vmatprep.subr.mxu0 0.0
      %2805 = vmatpush1.msra.mxu0 0.0
      %2806 = vmatprep.subr.mxu0 0.0
      %2807 = vmatpush1.msra.mxu0 0.0
      %2808 = vmatprep.subr.mxu0 0.0
      %2809 = vmatpush1.msra.mxu0 0.0
      %2810 = vmatprep.subr.mxu0 0.0
      %2811 = vmatpush1.msra.mxu0 0.0
      %2812 = vmatprep.subr.mxu0 0.0
      %2813 = vmatpush1.msra.mxu0 0.0
      %2814 = vmatprep.subr.mxu0 0.0
      %2815 = vmatpush1.msra.mxu0 0.0
      %2816 = vmatprep.subr.mxu0 0.0
      %2817 = vmatpush1.msra.mxu0 0.0
      %2818 = vmatprep.mubr.f32.mxu0 0.0
      %2819 = vmatmul.mubr.f32.gmra.mrb[0].mxu0 %v2752
      %v2820 = vpop.f32.mrb[0].mxu0
      %v2821 = vadd.f32 0.0, %v2820
      %v2822 = vpop.f32.mrb[0].mxu0
      %2823 = vdwg.mxu0
      %v2825 = vsel %vm679, %v2821, 0
      %2827 = vmatprep.subr.mxu0 0.0
      %2828 = vmatpush1.msra.mxu0 %v2182
      %2829 = vmatprep.subr.mxu0 0.0
      %2830 = vmatpush1.msra.mxu0 0.0
      %2831 = vmatprep.subr.mxu0 0.0
      %2832 = vmatpush1.msra.mxu0 0.0
      %2833 = vmatprep.subr.mxu0 0.0
      %2834 = vmatpush1.msra.mxu0 0.0
      %2835 = vmatprep.subr.mxu0 0.0
      %2836 = vmatpush1.msra.mxu0 0.0
      %2837 = vmatprep.subr.mxu0 0.0
      %2838 = vmatpush1.msra.mxu0 0.0
      %2839 = vmatprep.subr.mxu0 0.0
      %2840 = vmatpush1.msra.mxu0 0.0
      %2841 = vmatprep.subr.mxu0 0.0
      %2842 = vmatpush1.msra.mxu0 0.0
      %2843 = vmatprep.subr.mxu0 0.0
      %2844 = vmatpush1.msra.mxu0 0.0
      %2845 = vmatprep.subr.mxu0 0.0
      %2846 = vmatpush1.msra.mxu0 0.0
      %2847 = vmatprep.subr.mxu0 0.0
      %2848 = vmatpush1.msra.mxu0 0.0
      %2849 = vmatprep.subr.mxu0 0.0
      %2850 = vmatpush1.msra.mxu0 0.0
      %2851 = vmatprep.subr.mxu0 0.0
      %2852 = vmatpush1.msra.mxu0 0.0
      %2853 = vmatprep.subr.mxu0 0.0
      %2854 = vmatpush1.msra.mxu0 0.0
      %2855 = vmatprep.subr.mxu0 0.0
      %2856 = vmatpush1.msra.mxu0 0.0
      %2857 = vmatprep.subr.mxu0 0.0
      %2858 = vmatpush1.msra.mxu0 0.0
      %2859 = vmatprep.subr.mxu0 0.0
      %2860 = vmatpush1.msra.mxu0 0.0
      %2861 = vmatprep.subr.mxu0 0.0
      %2862 = vmatpush1.msra.mxu0 0.0
      %2863 = vmatprep.subr.mxu0 0.0
      %2864 = vmatpush1.msra.mxu0 0.0
      %2865 = vmatprep.subr.mxu0 0.0
      %2866 = vmatpush1.msra.mxu0 0.0
      %2867 = vmatprep.subr.mxu0 0.0
      %2868 = vmatpush1.msra.mxu0 0.0
      %2869 = vmatprep.subr.mxu0 0.0
      %2870 = vmatpush1.msra.mxu0 0.0
      %2871 = vmatprep.subr.mxu0 0.0
      %2872 = vmatpush1.msra.mxu0 0.0
      %2873 = vmatprep.subr.mxu0 0.0
      %2874 = vmatpush1.msra.mxu0 0.0
      %2875 = vmatprep.subr.mxu0 0.0
      %2876 = vmatpush1.msra.mxu0 0.0
      %2877 = vmatprep.subr.mxu0 0.0
      %2878 = vmatpush1.msra.mxu0 0.0
      %2879 = vmatprep.subr.mxu0 0.0
      %2880 = vmatpush1.msra.mxu0 0.0
      %2881 = vmatprep.subr.mxu0 0.0
      %2882 = vmatpush1.msra.mxu0 0.0
      %2883 = vmatprep.subr.mxu0 0.0
      %2884 = vmatpush1.msra.mxu0 0.0
      %2885 = vmatprep.subr.mxu0 0.0
      %2886 = vmatpush1.msra.mxu0 0.0
      %2887 = vmatprep.subr.mxu0 0.0
      %2888 = vmatpush1.msra.mxu0 0.0
      %2889 = vmatprep.subr.mxu0 0.0
      %2890 = vmatpush1.msra.mxu0 0.0
      %2891 = vmatprep.mubr.f32.mxu0 0.0
      %2892 = vmatmul.mubr.f32.gmra.mrb[0].mxu0 %v2825
      %v2893 = vpop.f32.mrb[0].mxu0
      %v2894 = vadd.f32 0.0, %v2893
      %v2895 = vpop.f32.mrb[0].mxu0
      %2896 = vdwg.mxu0
      %v2897 = vadd.f32 %v2656, %v2894
      %2898 = vrot.lane.b32.xlu0 %v2176, 104
      %v2899 = vpop.permute.xlu0 %2898
      %2900 = vrot.lane.b32.xlu0 %v2176, 72
      %v2901 = vpop.permute.xlu0 %2900
      %v2902 = vsel %vm679, %v2899, 0
      %v2904 = vsel %vm679, %v2901, 0
      %2906 = vmatprep.subr.mxu0 0.0
      %2907 = vmatpush1.xpose.msra.mxu0 %v2904
      %2908 = vmatprep.subr.mxu0 0.0
      %2909 = vmatpush1.xpose.msra.mxu0 0.0
      %2910 = vmatprep.subr.mxu0 0.0
      %2911 = vmatpush1.xpose.msra.mxu0 0.0
      %2912 = vmatprep.subr.mxu0 0.0
      %2913 = vmatpush1.xpose.msra.mxu0 0.0
      %2914 = vmatprep.subr.mxu0 0.0
      %2915 = vmatpush1.xpose.msra.mxu0 0.0
      %2916 = vmatprep.subr.mxu0 0.0
      %2917 = vmatpush1.xpose.msra.mxu0 0.0
      %2918 = vmatprep.subr.mxu0 0.0
      %2919 = vmatpush1.xpose.msra.mxu0 0.0
      %2920 = vmatprep.subr.mxu0 0.0
      %2921 = vmatpush1.xpose.msra.mxu0 0.0
      %2922 = vmatprep.subr.mxu0 0.0
      %2923 = vmatpush1.xpose.msra.mxu0 0.0
      %2924 = vmatprep.subr.mxu0 0.0
      %2925 = vmatpush1.xpose.msra.mxu0 0.0
      %2926 = vmatprep.subr.mxu0 0.0
      %2927 = vmatpush1.xpose.msra.mxu0 0.0
      %2928 = vmatprep.subr.mxu0 0.0
      %2929 = vmatpush1.xpose.msra.mxu0 0.0
      %2930 = vmatprep.subr.mxu0 0.0
      %2931 = vmatpush1.xpose.msra.mxu0 0.0
      %2932 = vmatprep.subr.mxu0 0.0
      %2933 = vmatpush1.xpose.msra.mxu0 0.0
      %2934 = vmatprep.subr.mxu0 0.0
      %2935 = vmatpush1.xpose.msra.mxu0 0.0
      %2936 = vmatprep.subr.mxu0 0.0
      %2937 = vmatpush1.xpose.msra.mxu0 0.0
      %2938 = vmatprep.subr.mxu0 0.0
      %2939 = vmatpush1.xpose.msra.mxu0 0.0
      %2940 = vmatprep.subr.mxu0 0.0
      %2941 = vmatpush1.xpose.msra.mxu0 0.0
      %2942 = vmatprep.subr.mxu0 0.0
      %2943 = vmatpush1.xpose.msra.mxu0 0.0
      %2944 = vmatprep.subr.mxu0 0.0
      %2945 = vmatpush1.xpose.msra.mxu0 0.0
      %2946 = vmatprep.subr.mxu0 0.0
      %2947 = vmatpush1.xpose.msra.mxu0 0.0
      %2948 = vmatprep.subr.mxu0 0.0
      %2949 = vmatpush1.xpose.msra.mxu0 0.0
      %2950 = vmatprep.subr.mxu0 0.0
      %2951 = vmatpush1.xpose.msra.mxu0 0.0
      %2952 = vmatprep.subr.mxu0 0.0
      %2953 = vmatpush1.xpose.msra.mxu0 0.0
      %2954 = vmatprep.subr.mxu0 0.0
      %2955 = vmatpush1.xpose.msra.mxu0 0.0
      %2956 = vmatprep.subr.mxu0 0.0
      %2957 = vmatpush1.xpose.msra.mxu0 0.0
      %2958 = vmatprep.subr.mxu0 0.0
      %2959 = vmatpush1.xpose.msra.mxu0 0.0
      %2960 = vmatprep.subr.mxu0 0.0
      %2961 = vmatpush1.xpose.msra.mxu0 0.0
      %2962 = vmatprep.subr.mxu0 0.0
      %2963 = vmatpush1.xpose.msra.mxu0 0.0
      %2964 = vmatprep.subr.mxu0 0.0
      %2965 = vmatpush1.xpose.msra.mxu0 0.0
      %2966 = vmatprep.subr.mxu0 0.0
      %2967 = vmatpush1.xpose.msra.mxu0 0.0
      %2968 = vmatprep.subr.mxu0 0.0
      %2969 = vmatpush1.xpose.msra.mxu0 0.0
      %2970 = vmatprep.mubr.f32.mxu0 0.0
      %2971 = vmatmul.mubr.f32.gmra.mrb[0].mxu0 %v2902
      %v2972 = vpop.f32.mrb[0].mxu0
      %v2973 = vadd.f32 %v801, %v2972
      %v2974 = vpop.f32.mrb[0].mxu0
      %2975 = vdwg.mxu0
      %v2976 = vsel %vm679, %v2973, -inf
      %2977 = vmax.xlane.f32.xlu0 %v2976
      %v2978 = vpop.xlane.xlu0 %2977
      %v2979 = vsub.f32 %v2973, %v2978
      %v2980 = vmul.f32 %v2979, 1.442695
      %v2981 = vpow.pop %v2980
      %v2982 = vsel %vm679, %v2981, 0.0
      %2983 = vadd.xlane.f32.xlu0 %v2982
      %v2984 = vpop.xlane.xlu0 %2983
      %v2985 = vrcp.pop %v2984
      %v2986 = vmul.f32 %v2981, %v2985
      %2987 = vrot.lane.b32.xlu0 %v2176, 40
      %v2988 = vpop.permute.xlu0 %2987
      %v2991 = vsel %vm679, %v2986, 0
      %2993 = vmatprep.subr.mxu0 0.0
      %2994 = vmatpush1.msra.mxu0 %v2988
      %2995 = vmatprep.subr.mxu0 0.0
      %2996 = vmatpush1.msra.mxu0 0.0
      %2997 = vmatprep.subr.mxu0 0.0
      %2998 = vmatpush1.msra.mxu0 0.0
      %2999 = vmatprep.subr.mxu0 0.0
      %3000 = vmatpush1.msra.mxu0 0.0
      %3001 = vmatprep.subr.mxu0 0.0
      %3002 = vmatpush1.msra.mxu0 0.0
      %3003 = vmatprep.subr.mxu0 0.0
      %3004 = vmatpush1.msra.mxu0 0.0
      %3005 = vmatprep.subr.mxu0 0.0
      %3006 = vmatpush1.msra.mxu0 0.0
      %3007 = vmatprep.subr.mxu0 0.0
      %3008 = vmatpush1.msra.mxu0 0.0
      %3009 = vmatprep.subr.mxu0 0.0
      %3010 = vmatpush1.msra.mxu0 0.0
      %3011 = vmatprep.subr.mxu0 0.0
      %3012 = vmatpush1.msra.mxu0 0.0
      %3013 = vmatprep.subr.mxu0 0.0
      %3014 = vmatpush1.msra.mxu0 0.0
      %3015 = vmatprep.subr.mxu0 0.0
      %3016 = vmatpush1.msra.mxu0 0.0
      %3017 = vmatprep.subr.mxu0 0.0
      %3018 = vmatpush1.msra.mxu0 0.0
      %3019 = vmatprep.subr.mxu0 0.0
      %3020 = vmatpush1.msra.mxu0 0.0
      %3021 = vmatprep.subr.mxu0 0.0
      %3022 = vmatpush1.msra.mxu0 0.0
      %3023 = vmatprep.subr.mxu0 0.0
      %3024 = vmatpush1.msra.mxu0 0.0
      %3025 = vmatprep.subr.mxu0 0.0
      %3026 = vmatpush1.msra.mxu0 0.0
      %3027 = vmatprep.subr.mxu0 0.0
      %3028 = vmatpush1.msra.mxu0 0.0
      %3029 = vmatprep.subr.mxu0 0.0
      %3030 = vmatpush1.msra.mxu0 0.0
      %3031 = vmatprep.subr.mxu0 0.0
      %3032 = vmatpush1.msra.mxu0 0.0
      %3033 = vmatprep.subr.mxu0 0.0
      %3034 = vmatpush1.msra.mxu0 0.0
      %3035 = vmatprep.subr.mxu0 0.0
      %3036 = vmatpush1.msra.mxu0 0.0
      %3037 = vmatprep.subr.mxu0 0.0
      %3038 = vmatpush1.msra.mxu0 0.0
      %3039 = vmatprep.subr.mxu0 0.0
      %3040 = vmatpush1.msra.mxu0 0.0
      %3041 = vmatprep.subr.mxu0 0.0
      %3042 = vmatpush1.msra.mxu0 0.0
      %3043 = vmatprep.subr.mxu0 0.0
      %3044 = vmatpush1.msra.mxu0 0.0
      %3045 = vmatprep.subr.mxu0 0.0
      %3046 = vmatpush1.msra.mxu0 0.0
      %3047 = vmatprep.subr.mxu0 0.0
      %3048 = vmatpush1.msra.mxu0 0.0
      %3049 = vmatprep.subr.mxu0 0.0
      %3050 = vmatpush1.msra.mxu0 0.0
      %3051 = vmatprep.subr.mxu0 0.0
      %3052 = vmatpush1.msra.mxu0 0.0
      %3053 = vmatprep.subr.mxu0 0.0
      %3054 = vmatpush1.msra.mxu0 0.0
      %3055 = vmatprep.subr.mxu0 0.0
      %3056 = vmatpush1.msra.mxu0 0.0
      %3057 = vmatprep.mubr.f32.mxu0 0.0
      %3058 = vmatmul.mubr.f32.gmra.mrb[0].mxu0 %v2991
      %v3059 = vpop.f32.mrb[0].mxu0
      %v3060 = vadd.f32 0.0, %v3059
      %v3061 = vpop.f32.mrb[0].mxu0
      %3062 = vdwg.mxu0
      %v3064 = vsel %vm679, %v3060, 0
      %3066 = vmatprep.subr.mxu0 0.0
      %3067 = vmatpush1.msra.mxu0 %v2183
      %3068 = vmatprep.subr.mxu0 0.0
      %3069 = vmatpush1.msra.mxu0 0.0
      %3070 = vmatprep.subr.mxu0 0.0
      %3071 = vmatpush1.msra.mxu0 0.0
      %3072 = vmatprep.subr.mxu0 0.0
      %3073 = vmatpush1.msra.mxu0 0.0
      %3074 = vmatprep.subr.mxu0 0.0
      %3075 = vmatpush1.msra.mxu0 0.0
      %3076 = vmatprep.subr.mxu0 0.0
      %3077 = vmatpush1.msra.mxu0 0.0
      %3078 = vmatprep.subr.mxu0 0.0
      %3079 = vmatpush1.msra.mxu0 0.0
      %3080 = vmatprep.subr.mxu0 0.0
      %3081 = vmatpush1.msra.mxu0 0.0
      %3082 = vmatprep.subr.mxu0 0.0
      %3083 = vmatpush1.msra.mxu0 0.0
      %3084 = vmatprep.subr.mxu0 0.0
      %3085 = vmatpush1.msra.mxu0 0.0
      %3086 = vmatprep.subr.mxu0 0.0
      %3087 = vmatpush1.msra.mxu0 0.0
      %3088 = vmatprep.subr.mxu0 0.0
      %3089 = vmatpush1.msra.mxu0 0.0
      %3090 = vmatprep.subr.mxu0 0.0
      %3091 = vmatpush1.msra.mxu0 0.0
      %3092 = vmatprep.subr.mxu0 0.0
      %3093 = vmatpush1.msra.mxu0 0.0
      %3094 = vmatprep.subr.mxu0 0.0
      %3095 = vmatpush1.msra.mxu0 0.0
      %3096 = vmatprep.subr.mxu0 0.0
      %3097 = vmatpush1.msra.mxu0 0.0
      %3098 = vmatprep.subr.mxu0 0.0
      %3099 = vmatpush1.msra.mxu0 0.0
      %3100 = vmatprep.subr.mxu0 0.0
      %3101 = vmatpush1.msra.mxu0 0.0
      %3102 = vmatprep.subr.mxu0 0.0
      %3103 = vmatpush1.msra.mxu0 0.0
      %3104 = vmatprep.subr.mxu0 0.0
      %3105 = vmatpush1.msra.mxu0 0.0
      %3106 = vmatprep.subr.mxu0 0.0
      %3107 = vmatpush1.msra.mxu0 0.0
      %3108 = vmatprep.subr.mxu0 0.0
      %3109 = vmatpush1.msra.mxu0 0.0
      %3110 = vmatprep.subr.mxu0 0.0
      %3111 = vmatpush1.msra.mxu0 0.0
      %3112 = vmatprep.subr.mxu0 0.0
      %3113 = vmatpush1.msra.mxu0 0.0
      %3114 = vmatprep.subr.mxu0 0.0
      %3115 = vmatpush1.msra.mxu0 0.0
      %3116 = vmatprep.subr.mxu0 0.0
      %3117 = vmatpush1.msra.mxu0 0.0
      %3118 = vmatprep.subr.mxu0 0.0
      %3119 = vmatpush1.msra.mxu0 0.0
      %3120 = vmatprep.subr.mxu0 0.0
      %3121 = vmatpush1.msra.mxu0 0.0
      %3122 = vmatprep.subr.mxu0 0.0
      %3123 = vmatpush1.msra.mxu0 0.0
      %3124 = vmatprep.subr.mxu0 0.0
      %3125 = vmatpush1.msra.mxu0 0.0
      %3126 = vmatprep.subr.mxu0 0.0
      %3127 = vmatpush1.msra.mxu0 0.0
      %3128 = vmatprep.subr.mxu0 0.0
      %3129 = vmatpush1.msra.mxu0 0.0
      %3130 = vmatprep.mubr.f32.mxu0 0.0
      %3131 = vmatmul.mubr.f32.gmra.mrb[0].mxu0 %v3064
      %v3132 = vpop.f32.mrb[0].mxu0
      %v3133 = vadd.f32 0.0, %v3132
      %v3134 = vpop.f32.mrb[0].mxu0
      %3135 = vdwg.mxu0
      %v3136 = vadd.f32 %v2897, %v3133
      %s3137 = scalar_lea.vmem %s10, 1
      %v3138 = vld [vmem:[%s3137] sm:$0x1]
      %v3140 = vlaneseq
      %v3141 = vshrl.u32 %v3140, 7
      %v3142 = vsub.s32 0, %v3141
      %v3143 = vrot.slane %v3138, %v3142
      %v3145 = vadd.f32 %v3136, %v3143
      %v3146 = vadd.f32 %v3145, %v2092
      %s3147 = scalar_lea.vmem %s11, 1
      %v3148 = vld [vmem:[%s3147] sm:$0x1]
      %s3149 = scalar_lea.vmem %s12, 1
      %v3150 = vld [vmem:[%s3149] sm:$0x1]
      %v3151 = vsel %vm771, %v3146, 0.0
      %3152 = vadd.xlane.f32.xlu0 %v3151
      %v3153 = vpop.xlane.xlu0 %3152
      %v3154 = vmul.f32 %v3153, %v775
      %v3155 = vsub.f32 %v3146, %v3154
      %v3156 = vmul.f32 %v3155, %v3155
      %v3157 = vsel %vm771, %v3156, 0.0
      %3158 = vadd.xlane.f32.xlu0 %v3157
      %v3159 = vpop.xlane.xlu0 %3158
      %v3160 = vmul.f32 %v3159, %v775
      %v3161 = vadd.f32 %v3160, 1e-05
      %v3162 = vrsqrt.pop %v3161
      %v3163 = vmul.f32 %v3155, %v3162
      %v3165 = vlaneseq
      %v3166 = vshrl.u32 %v3165, 7
      %v3167 = vsub.s32 0, %v3166
      %v3168 = vrot.slane %v3148, %v3167
      %v3170 = vmul.f32 %v3163, %v3168
      %v3172 = vlaneseq
      %v3173 = vshrl.u32 %v3172, 7
      %v3174 = vsub.s32 0, %v3173
      %v3175 = vrot.slane %v3150, %v3174
      %v3177 = vadd.f32 %v3170, %v3175
      %s3178 = scalar_lea.vmem %s13, 32
      %v3179 = vld [vmem:[%s3178] sm:$0xff]
      %v3180 = vld [vmem:[%s3178 + $0x8] sm:$0xff]
      %v3181 = vld [vmem:[%s3178 + $0x10] sm:$0xff]
      %v3182 = vld [vmem:[%s3178 + $0x18] sm:$0xff]
      %s3183 = scalar_lea.vmem %s14, 1
      %v3184 = vld [vmem:[%s3183] sm:$0x1]
      %v3186 = vlaneseq
      %v3187 = vshrl.u32 %v3186, 7
      %v3188 = vsub.s32 0, %v3187
      %v3189 = vrot.slane %v3184, %v3188
      %v3192 = vsel %vm771, %v3177, 0
      %3194 = vmatprep.subr.mxu0 0.0
      %3195 = vmatpush1.msra.mxu0 %v3179
      %3196 = vmatprep.subr.mxu0 0.0
      %3197 = vmatpush1.msra.mxu0 %v3180
      %3198 = vmatprep.subr.mxu0 0.0
      %3199 = vmatpush1.msra.mxu0 %v3181
      %3200 = vmatprep.subr.mxu0 0.0
      %3201 = vmatpush1.msra.mxu0 %v3182
      %3202 = vmatprep.subr.mxu0 0.0
      %3203 = vmatpush1.msra.mxu0 0.0
      %3204 = vmatprep.subr.mxu0 0.0
      %3205 = vmatpush1.msra.mxu0 0.0
      %3206 = vmatprep.subr.mxu0 0.0
      %3207 = vmatpush1.msra.mxu0 0.0
      %3208 = vmatprep.subr.mxu0 0.0
      %3209 = vmatpush1.msra.mxu0 0.0
      %3210 = vmatprep.subr.mxu0 0.0
      %3211 = vmatpush1.msra.mxu0 0.0
      %3212 = vmatprep.subr.mxu0 0.0
      %3213 = vmatpush1.msra.mxu0 0.0
      %3214 = vmatprep.subr.mxu0 0.0
      %3215 = vmatpush1.msra.mxu0 0.0
      %3216 = vmatprep.subr.mxu0 0.0
      %3217 = vmatpush1.msra.mxu0 0.0
      %3218 = vmatprep.subr.mxu0 0.0
      %3219 = vmatpush1.msra.mxu0 0.0
      %3220 = vmatprep.subr.mxu0 0.0
      %3221 = vmatpush1.msra.mxu0 0.0
      %3222 = vmatprep.subr.mxu0 0.0
      %3223 = vmatpush1.msra.mxu0 0.0
      %3224 = vmatprep.subr.mxu0 0.0
      %3225 = vmatpush1.msra.mxu0 0.0
      %3226 = vmatprep.subr.mxu0 0.0
      %3227 = vmatpush1.msra.mxu0 0.0
      %3228 = vmatprep.subr.mxu0 0.0
      %3229 = vmatpush1.msra.mxu0 0.0
      %3230 = vmatprep.subr.mxu0 0.0
      %3231 = vmatpush1.msra.mxu0 0.0
      %3232 = vmatprep.subr.mxu0 0.0
      %3233 = vmatpush1.msra.mxu0 0.0
      %3234 = vmatprep.subr.mxu0 0.0
      %3235 = vmatpush1.msra.mxu0 0.0
      %3236 = vmatprep.subr.mxu0 0.0
      %3237 = vmatpush1.msra.mxu0 0.0
      %3238 = vmatprep.subr.mxu0 0.0
      %3239 = vmatpush1.msra.mxu0 0.0
      %3240 = vmatprep.subr.mxu0 0.0
      %3241 = vmatpush1.msra.mxu0 0.0
      %3242 = vmatprep.subr.mxu0 0.0
      %3243 = vmatpush1.msra.mxu0 0.0
      %3244 = vmatprep.subr.mxu0 0.0
      %3245 = vmatpush1.msra.mxu0 0.0
      %3246 = vmatprep.subr.mxu0 0.0
      %3247 = vmatpush1.msra.mxu0 0.0
      %3248 = vmatprep.subr.mxu0 0.0
      %3249 = vmatpush1.msra.mxu0 0.0
      %3250 = vmatprep.subr.mxu0 0.0
      %3251 = vmatpush1.msra.mxu0 0.0
      %3252 = vmatprep.subr.mxu0 0.0
      %3253 = vmatpush1.msra.mxu0 0.0
      %3254 = vmatprep.subr.mxu0 0.0
      %3255 = vmatpush1.msra.mxu0 0.0
      %3256 = vmatprep.subr.mxu0 0.0
      %3257 = vmatpush1.msra.mxu0 0.0
      %3258 = vmatprep.mubr.f32.mxu0 0.0
      %3259 = vmatmul.mubr.f32.gmra.mrb[0].mxu0 %v3192
      %v3260 = vpop.f32.mrb[0].mxu0
      %v3261 = vadd.f32 %v3189, %v3260
      %v3262 = vpop.f32.mrb[0].mxu0
      %3263 = vdwg.mxu0
      %v3264 = vmul.f32 %v3261, %v3261
      %v3265 = vmul.f32 %v3261, %v3264
      %v3266 = vmul.f32 %v3265, 0.044715
      %v3267 = vadd.f32 %v3261, %v3266
      %v3268 = vmul.f32 %v3267, 0.7978846
      %v3269 = vtanh.pop %v3268
      %v3270 = vadd.f32 %v3269, 1.0
      %v3271 = vmul.f32 %v3270, 0.5
      %v3272 = vmul.f32 %v3261, %v3271
      %s3273 = scalar_lea.vmem %s15, 64
      %v3274 = vld [vmem:[%s3273] sm:$0xff]
      %v3275 = vld [vmem:[%s3273 + $0x8] sm:$0xff]
      %v3276 = vld [vmem:[%s3273 + $0x10] sm:$0xff]
      %v3277 = vld [vmem:[%s3273 + $0x18] sm:$0xff]
      %v3278 = vld [vmem:[%s3273 + $0x20] sm:$0xff]
      %v3279 = vld [vmem:[%s3273 + $0x28] sm:$0xff]
      %v3280 = vld [vmem:[%s3273 + $0x30] sm:$0xff]
      %v3281 = vld [vmem:[%s3273 + $0x38] sm:$0xff]
      %s3282 = scalar_lea.vmem %s16, 1
      %v3283 = vld [vmem:[%s3282] sm:$0x1]
      %v3285 = vlaneseq
      %v3286 = vshrl.u32 %v3285, 7
      %v3287 = vsub.s32 0, %v3286
      %v3288 = vrot.slane %v3283, %v3287
      %v3291 = vsel %vm1989, %v3272, 0
      %3293 = vmatprep.subr.mxu0 0.0
      %3294 = vmatpush1.msra.mxu0 %v3274
      %3295 = vmatprep.subr.mxu0 0.0
      %3296 = vmatpush1.msra.mxu0 %v3275
      %3297 = vmatprep.subr.mxu0 0.0
      %3298 = vmatpush1.msra.mxu0 %v3276
      %3299 = vmatprep.subr.mxu0 0.0
      %3300 = vmatpush1.msra.mxu0 %v3277
      %3301 = vmatprep.subr.mxu0 0.0
      %3302 = vmatpush1.msra.mxu0 %v3278
      %3303 = vmatprep.subr.mxu0 0.0
      %3304 = vmatpush1.msra.mxu0 %v3279
      %3305 = vmatprep.subr.mxu0 0.0
      %3306 = vmatpush1.msra.mxu0 %v3280
      %3307 = vmatprep.subr.mxu0 0.0
      %3308 = vmatpush1.msra.mxu0 %v3281
      %3309 = vmatprep.subr.mxu0 0.0
      %3310 = vmatpush1.msra.mxu0 0.0
      %3311 = vmatprep.subr.mxu0 0.0
      %3312 = vmatpush1.msra.mxu0 0.0
      %3313 = vmatprep.subr.mxu0 0.0
      %3314 = vmatpush1.msra.mxu0 0.0
      %3315 = vmatprep.subr.mxu0 0.0
      %3316 = vmatpush1.msra.mxu0 0.0
      %3317 = vmatprep.subr.mxu0 0.0
      %3318 = vmatpush1.msra.mxu0 0.0
      %3319 = vmatprep.subr.mxu0 0.0
      %3320 = vmatpush1.msra.mxu0 0.0
      %3321 = vmatprep.subr.mxu0 0.0
      %3322 = vmatpush1.msra.mxu0 0.0
      %3323 = vmatprep.subr.mxu0 0.0
      %3324 = vmatpush1.msra.mxu0 0.0
      %3325 = vmatprep.subr.mxu0 0.0
      %3326 = vmatpush1.msra.mxu0 0.0
      %3327 = vmatprep.subr.mxu0 0.0
      %3328 = vmatpush1.msra.mxu0 0.0
      %3329 = vmatprep.subr.mxu0 0.0
      %3330 = vmatpush1.msra.mxu0 0.0
      %3331 = vmatprep.subr.mxu0 0.0
      %3332 = vmatpush1.msra.mxu0 0.0
      %3333 = vmatprep.subr.mxu0 0.0
      %3334 = vmatpush1.msra.mxu0 0.0
      %3335 = vmatprep.subr.mxu0 0.0
      %3336 = vmatpush1.msra.mxu0 0.0
      %3337 = vmatprep.subr.mxu0 0.0
      %3338 = vmatpush1.msra.mxu0 0.0
      %3339 = vmatprep.subr.mxu0 0.0
      %3340 = vmatpush1.msra.mxu0 0.0
      %3341 = vmatprep.subr.mxu0 0.0
      %3342 = vmatpush1.msra.mxu0 0.0
      %3343 = vmatprep.subr.mxu0 0.0
      %3344 = vmatpush1.msra.mxu0 0.0
      %3345 = vmatprep.subr.mxu0 0.0
      %3346 = vmatpush1.msra.mxu0 0.0
      %3347 = vmatprep.subr.mxu0 0.0
      %3348 = vmatpush1.msra.mxu0 0.0
      %3349 = vmatprep.subr.mxu0 0.0
      %3350 = vmatpush1.msra.mxu0 0.0
      %3351 = vmatprep.subr.mxu0 0.0
      %3352 = vmatpush1.msra.mxu0 0.0
      %3353 = vmatprep.subr.mxu0 0.0
      %3354 = vmatpush1.msra.mxu0 0.0
      %3355 = vmatprep.subr.mxu0 0.0
      %3356 = vmatpush1.msra.mxu0 0.0
      %3357 = vmatprep.mubr.f32.mxu0 0.0
      %3358 = vmatmul.mubr.f32.gmra.mrb[0].mxu0 %v3291
      %v3359 = vpop.f32.mrb[0].mxu0
      %v3360 = vadd.f32 %v3288, %v3359
      %v3361 = vpop.f32.mrb[0].mxu0
      %3362 = vdwg.mxu0
      %v3363 = vadd.f32 %v3360, %v3177
      %s3364 = scalar_lea.vmem %s17, 1
      %v3365 = vld [vmem:[%s3364] sm:$0x1]
      %s3366 = scalar_lea.vmem %s18, 1
      %v3367 = vld [vmem:[%s3366] sm:$0x1]
      %v3368 = vsel %vm771, %v3363, 0.0
      %3369 = vadd.xlane.f32.xlu0 %v3368
      %v3370 = vpop.xlane.xlu0 %3369
      %v3371 = vmul.f32 %v3370, %v775
      %v3372 = vsub.f32 %v3363, %v3371
      %v3373 = vmul.f32 %v3372, %v3372
      %v3374 = vsel %vm771, %v3373, 0.0
      %3375 = vadd.xlane.f32.xlu0 %v3374
      %v3376 = vpop.xlane.xlu0 %3375
      %v3377 = vmul.f32 %v3376, %v775
      %v3378 = vadd.f32 %v3377, 1e-05
      %v3379 = vrsqrt.pop %v3378
      %v3380 = vmul.f32 %v3372, %v3379
      %v3382 = vlaneseq
      %v3383 = vshrl.u32 %v3382, 7
      %v3384 = vsub.s32 0, %v3383
      %v3385 = vrot.slane %v3365, %v3384
      %v3387 = vmul.f32 %v3380, %v3385
      %v3389 = vlaneseq
      %v3390 = vshrl.u32 %v3389, 7
      %v3391 = vsub.s32 0, %v3390
      %v3392 = vrot.slane %v3367, %v3391
      %v3394 = vadd.f32 %v3387, %v3392
      %vm3395 = vcmask 253952
      %3396 = vst.msk [vmem:[%s660] sm:$0x1] %vm3395, %v3394
      %p3397 = scmp.lt.s32.totalorder %s30, 3
      %s3398 = scalar_select %p3397, %s30, 3
      %s3399 = scalar_lea.vmem %s19, %s3398
      // Predicated region
      $region97: #{_lambda_.2} parent=95 // pred_check
        %p3400 = pneg %p472
      $region98: #{_lambda_.2} parent=95 // pred_check_branch
        %3402 = sbr.rel (%p3400) target = $region100
      $region99: #{_lambda_.2} parent=95 // pred_region
        _
      $region100: #{_lambda_.2} parent=95 // pred_fallthru
        _
    $region96: #{_lambda_.2} parent=5 // pred_fallthru
      _
    %p3403 = scmp.le.s32.totalorder 2, %s25
    // Predicated region
    $region101: #{_lambda_.2} parent=5 // pred_check
      %p3404 = pneg %p3403
    $region102: #{_lambda_.2} parent=5 // pred_check_branch
      %3406 = sbr.rel (%p3404) target = $region104
    $region103: #{_lambda_.2} parent=5 // pred_region
      %s3407 = ssub.s32 %s25, 2
      // Predicated region
      $region105: #{_lambda_.2} parent=103 // pred_check
        %p3408 = pneg %p478
      $region106: #{_lambda_.2} parent=103 // pred_check_branch
        %3410 = sbr.rel (%p3408) target = $region108
      $region107: #{_lambda_.2} parent=103 // pred_region
        %p3411 = scmp.lt.s32.totalorder %s31, 3
        %s3412 = scalar_select %p3411, %s31, 3
        %s3413 = scalar_lea.vmem %s19, %s3412
      $region108: #{_lambda_.2} parent=103 // pred_fallthru
        _
    $region104: #{_lambda_.2} parent=5 // pred_fallthru
      _
  $region6: #{_lambda_.2} parent=0 // loop_footer
    %s29 = sadd.s32 1, %s25
  $region7: #{_lambda_.2} parent=0 // loop_footer_branch
    %24 = sbr.rel target = $region3
  $region8: #{_lambda_.2} parent=0 // loop_exit
    _

</llo_original>
